<compile_context>
chip_gen: v7x
topology: tpu7x:2x2x1
jax: 0.10.0
libtpu: 0.0.40
codegen_flags: <defaults>
</compile_context>

<pallas_src>
import functools

import jax
import jax.numpy as jnp
from jax.experimental import pallas as pl
from jax.experimental.pallas import tpu as pltpu


def _round_up(x, m):
    return ((x + m - 1) // m) * m


# ---------------------------------------------------------------------------
# Fused kernel: all LSTM layers + FC head.  PyTorch gate order: i, f, g, o.
# ---------------------------------------------------------------------------
def _fused_lstm_fc_kernel(num_layers, hidden_pad, *refs):
    """refs = [x, h0, c0, (w_ihT, w_hhT, bias) * L, fc_wT, fc_b,   # inputs
               out, h_n, c_n,                                      # outputs
               xg_s, act_s]                                        # scratch

    Time-major activations (S, BT, ...).  Gates concatenated on the lane axis
    at 128-aligned offsets (each gate block padded to hidden_pad lanes)."""
    n_in = 3 + 3 * num_layers + 2
    x_ref, h0_ref, c0_ref = refs[0:3]
    layer_refs = refs[3:3 + 3 * num_layers]
    fcw_ref = refs[3 + 3 * num_layers]          # (Hp, Vp)  bf16
    fcb_ref = refs[3 + 3 * num_layers + 1]      # (1, Vp)   f32
    out_ref, hN_ref, cN_ref = refs[n_in:n_in + 3]
    xg_s, act_s = refs[n_in + 3:n_in + 5]

    S, BT, _ = x_ref.shape
    Hp = hidden_pad
    f32 = jnp.float32
    bf16 = jnp.bfloat16

    for l in range(num_layers):
        wih_ref = layer_refs[3 * l + 0]         # (In_l, 4*Hp) bf16
        whh_ref = layer_refs[3 * l + 1]         # (Hp,   4*Hp) bf16
        b_ref = layer_refs[3 * l + 2]           # (1,    4*Hp) f32 (b_ih+b_hh)

        # Hoisted input projection for the whole sequence: ONE fused
        # (S*BT, In) @ (In, 4Hp) bf16 matmul per layer (all 4 gates at once),
        # bias folded in.  Parked in a VMEM scratch to bound vreg pressure.
        if l == 0:
            inp = x_ref[...].reshape(S * BT, -1).astype(bf16)
        else:
            inp = act_s[...].reshape(S * BT, Hp).astype(bf16)
        proj = jnp.dot(inp, wih_ref[...], preferred_element_type=f32) + b_ref[...]
        xg_s[...] = proj.reshape(S, BT, 4 * Hp)

        whh = whh_ref[...]                      # recurrent weights, loaded once
        h = h0_ref[l]                           # (BT, Hp) f32
        c = c0_ref[l]
        # TODO(synk): at realistic S switch to lax.fori_loop(unroll=k) over
        # time; S=8 is small and static so a full unroll is fine here.
        for t in range(S):
            # ONE fused (BT, Hp) @ (Hp, 4Hp) recurrent matmul per step.
            g = xg_s[t] + jnp.dot(h.astype(bf16), whh, preferred_element_type=f32)
            i_t = jax.nn.sigmoid(g[:, 0 * Hp:1 * Hp])
            f_t = jax.nn.sigmoid(g[:, 1 * Hp:2 * Hp])
            g_t = jnp.tanh(g[:, 2 * Hp:3 * Hp])
            o_t = jax.nn.sigmoid(g[:, 3 * Hp:4 * Hp])
            c = f_t * c + i_t * g_t
            h = o_t * jnp.tanh(c)
            act_s[t] = h                        # static leading-axis store
        hN_ref[l] = h
        cN_ref[l] = c
        # TODO(synk): inter-layer LSTM dropout is training-only; eval=identity.

    # Dropout after the stack: identity in eval mode.
    # FC head on the time-major slab; Vp % 128 == 0 -> lane-dense store.
    # TODO(synk): at realistic vocab, tile fc_wT over a vocab grid axis.
    logits = jnp.dot(act_s[...].reshape(S * BT, Hp).astype(bf16), fcw_ref[...],
                     preferred_element_type=f32) + fcb_ref[...]
    out_ref[...] = logits.reshape(S, BT, -1)


# ---------------------------------------------------------------------------
# Wrapper: one-time weight layout plumbing + the fused pallas_call.
# ---------------------------------------------------------------------------
def _pack_gate_cols(w, in_pad, H, Hp):
    """(4H, in) gate-stacked PyTorch weight -> (in_pad, 4*Hp) transposed,
    each gate block at a 128-aligned lane offset, zero padded."""
    in_dim = w.shape[1]
    blocks = []
    for g in range(4):
        blk = w[g * H:(g + 1) * H, :].T                       # (in, H)
        blocks.append(jnp.pad(blk, ((0, in_pad - in_dim), (0, Hp - H))))
    return jnp.concatenate(blocks, axis=1)                    # (in_pad, 4*Hp)


def _pack_gate_bias(b, H, Hp):
    blocks = [jnp.pad(b[g * H:(g + 1) * H], (0, Hp - H)) for g in range(4)]
    return jnp.concatenate(blocks).reshape(1, 4 * Hp)


def model_forward(params, x, hc):
    h0, c0 = hc                                  # (L, B, H) each
    B, S, V = x.shape
    L = len(params["lstm"])
    H = h0.shape[-1]

    Hp = _round_up(H, 128)                       # 128-aligned gate blocks
    Vin = _round_up(V, 128)                      # padded layer-0 input width
    Vp = _round_up(V, 128)                       # lane-dense FC output width
    BT = 8                                       # sublane-aligned batch tile
    Bp = _round_up(B, BT)
    n_bt = Bp // BT

    # ---- one-time layout plumbing (do at load time at real scale) ----------
    xt = jnp.zeros((S, Bp, Vin), jnp.float32).at[:, :B, :V].set(
        jnp.transpose(x, (1, 0, 2)))             # time-major, padded
    h0p = jnp.zeros((L, Bp, Hp), jnp.float32).at[:, :B, :H].set(h0)
    c0p = jnp.zeros((L, Bp, Hp), jnp.float32).at[:, :B, :H].set(c0)

    flat_w = []
    in_specs = [
        pl.BlockSpec((S, BT, Vin), lambda b: (0, b, 0)),
        pl.BlockSpec((L, BT, Hp), lambda b: (0, b, 0)),
        pl.BlockSpec((L, BT, Hp), lambda b: (0, b, 0)),
    ]
    for l in range(L):
        w_ih, w_hh, b_ih, b_hh = params["lstm"][l]
        in_pad = Vin if l == 0 else Hp
        flat_w.append(_pack_gate_cols(w_ih, in_pad, H, Hp).astype(jnp.bfloat16))
        flat_w.append(_pack_gate_cols(w_hh, Hp, H, Hp).astype(jnp.bfloat16))
        flat_w.append(_pack_gate_bias(b_ih + b_hh, H, Hp))
        in_specs += [
            pl.BlockSpec((in_pad, 4 * Hp), lambda b: (0, 0)),
            pl.BlockSpec((Hp, 4 * Hp), lambda b: (0, 0)),
            pl.BlockSpec((1, 4 * Hp), lambda b: (0, 0)),
        ]
    fc_wT = jnp.pad(params["fc_w"].T, ((0, Hp - H), (0, Vp - V))).astype(jnp.bfloat16)
    fc_b = jnp.pad(params["fc_b"], (0, Vp - V)).reshape(1, Vp)
    in_specs += [
        pl.BlockSpec((Hp, Vp), lambda b: (0, 0)),
        pl.BlockSpec((1, Vp), lambda b: (0, 0)),
    ]
    out_specs = [
        pl.BlockSpec((S, BT, Vp), lambda b: (0, b, 0)),
        pl.BlockSpec((L, BT, Hp), lambda b: (0, b, 0)),
        pl.BlockSpec((L, BT, Hp), lambda b: (0, b, 0)),
    ]

    grid_spec = pltpu.PrefetchScalarGridSpec(
        num_scalar_prefetch=0,
        grid=(n_bt,),                 # batch tiles; "parallel" -> both v7x TCs
        in_specs=in_specs,
        out_specs=out_specs,
        scratch_shapes=[
            pltpu.VMEM((S, BT, 4 * Hp), jnp.float32),   # hoisted gate pre-acts
            pltpu.VMEM((S, BT, Hp), jnp.float32),       # layer in/out slab
        ],
    )

    kernel = functools.partial(_fused_lstm_fc_kernel, L, Hp)
    out_p, hN_p, cN_p = pl.pallas_call(
        kernel,
        out_shape=(
            jax.ShapeDtypeStruct((S, Bp, Vp), jnp.float32),
            jax.ShapeDtypeStruct((L, Bp, Hp), jnp.float32),
            jax.ShapeDtypeStruct((L, Bp, Hp), jnp.float32),
        ),
        grid_spec=grid_spec,
        # No vmem_limit override: defaults fit easily at these sizes and leave
        # headroom on v7x (64 MiB physical VMEM).
        # TODO(synk): at realistic sizes (H>=1024, 32k vocab) stream per-layer
        # weights via an "arbitrary" layer grid axis, tile the FC head over
        # vocab, and replace the one-hot layer-0 matmul with an embedding
        # gather (jnp.take / pl.Element row gather).
        compiler_params=pltpu.CompilerParams(
            dimension_semantics=("parallel",)),
    )(xt, h0p, c0p, *flat_w, fc_wT, fc_b)

    # Restore the PyTorch (b*S + s) row order and strip padding (wrapper-side).
    logits = jnp.transpose(out_p[:, :B, :V], (1, 0, 2)).reshape(B * S, V)
    return logits, (hN_p[:, :B, :H], cN_p[:, :B, :H])


# ---------------------------------------------------------------------------
# Deterministic parameter init (PyTorch-style U(-1/sqrt(H), 1/sqrt(H))).
# ---------------------------------------------------------------------------
def init_params(key, vocab, hidden, n_layers):
    bound = 1.0 / float(hidden) ** 0.5
    params = {"lstm": []}
    for l in range(n_layers):
        in_size = vocab if l == 0 else hidden
        key, k1, k2, k3, k4 = jax.random.split(key, 5)
        params["lstm"].append((
            jax.random.uniform(k1, (4 * hidden, in_size), jnp.float32, -bound, bound),
            jax.random.uniform(k2, (4 * hidden, hidden), jnp.float32, -bound, bound),
            jax.random.uniform(k3, (4 * hidden,), jnp.float32, -bound, bound),
            jax.random.uniform(k4, (4 * hidden,), jnp.float32, -bound, bound),
        ))
    key, k1, k2 = jax.random.split(key, 3)
    params["fc_w"] = jax.random.uniform(k1, (vocab, hidden), jnp.float32, -bound, bound)
    params["fc_b"] = jax.random.uniform(k2, (vocab,), jnp.float32, -bound, bound)
    return params


# ---------------------------------------------------------------------------
# Pure-JAX reference.  matmul_dtype=bf16 mirrors the kernel's MXU precision.
# ---------------------------------------------------------------------------
def reference_forward(params, x, hc, matmul_dtype=jnp.float32):
    def mm(a, b):
        return jnp.dot(a.astype(matmul_dtype), b.astype(matmul_dtype),
                       preferred_element_type=jnp.float32)
    h0, c0 = hc
    B, S, _ = x.shape
    n_layers = len(params["lstm"])
    layer_in = x
    h_fin, c_fin = [], []
    for l in range(n_layers):
        w_ih, w_hh, b_ih, b_hh = params["lstm"][l]
        H = w_hh.shape[1]
        h, c = h0[l], c0[l]
        outs = []
        for t in range(S):
            g = mm(layer_in[:, t], w_ih.T) + b_ih + mm(h, w_hh.T) + b_hh
            i = jax.nn.sigmoid(g[:, :H])
            f = jax.nn.sigmoid(g[:, H:2 * H])
            gg = jnp.tanh(g[:, 2 * H:3 * H])
            o = jax.nn.sigmoid(g[:, 3 * H:])
            c = f * c + i * gg
            h = o * jnp.tanh(c)
            outs.append(h)
        layer_in = jnp.stack(outs, axis=1)
        h_fin.append(h)
        c_fin.append(c)
    out = mm(layer_in.reshape(B * S, -1), params["fc_w"].T) + params["fc_b"]
    return out, (jnp.stack(h_fin), jnp.stack(c_fin))


if __name__ == "__main__":
    VOCAB = 16       # len(tokens)
    HIDDEN = 32      # n_hidden_units (small for the demo)
    LAYERS = 2       # n_layers (small for the demo)
    B, S = 2, 8

    key = jax.random.PRNGKey(0)
    key, kp, kx = jax.random.split(key, 3)
    params = init_params(kp, VOCAB, HIDDEN, LAYERS)

    # One-hot-style input (B, S, VOCAB), batch_first like the PyTorch module.
    idx = jax.random.randint(kx, (B, S), 0, VOCAB)
    x = jax.nn.one_hot(idx, VOCAB, dtype=jnp.float32)
    h0 = jnp.zeros((LAYERS, B, HIDDEN), jnp.float32)
    c0 = jnp.zeros((LAYERS, B, HIDDEN), jnp.float32)

    logits, (h, c) = model_forward(params, x, (h0, c0))
    jax.block_until_ready((logits, h, c))

    assert logits.shape == (B * S, VOCAB)
    assert h.shape == (LAYERS, B, HIDDEN) and c.shape == (LAYERS, B, HIDDEN)

    # Tight check vs. a reference using the same bf16-operand / f32-accumulate
    # matmuls as the kernel (validates the fused/padded gate plumbing).
    ref_l, (ref_h, ref_c) = reference_forward(params, x, (h0, c0),
                                              matmul_dtype=jnp.bfloat16)
    assert jnp.allclose(logits, ref_l, atol=2e-3)
    assert jnp.allclose(h, ref_h, atol=2e-3)
    assert jnp.allclose(c, ref_c, atol=2e-3)

    # Loose check vs. the full-f32 reference (bound on bf16 weight rounding).
    ref_l32, (ref_h32, ref_c32) = reference_forward(params, x, (h0, c0))
    assert jnp.allclose(logits, ref_l32, atol=3e-2)
    assert jnp.allclose(h, ref_h32, atol=3e-2)
    assert jnp.allclose(c, ref_c32, atol=3e-2)

    print("KERNEL_OK")
</pallas_src>

<mosaic_0001>
module attributes {stable_mosaic.version = 11 : i64} {
  func.func @_fused_lstm_fc_kernel(%arg0: i32, %arg1: memref<8x8x128xf32, #tpu.memory_space<vmem>>, %arg2: memref<2x8x128xf32, #tpu.memory_space<vmem>>, %arg3: memref<2x8x128xf32, #tpu.memory_space<vmem>>, %arg4: memref<128x512xbf16, #tpu.memory_space<vmem>>, %arg5: memref<128x512xbf16, #tpu.memory_space<vmem>>, %arg6: memref<1x512xf32, #tpu.memory_space<vmem>>, %arg7: memref<128x512xbf16, #tpu.memory_space<vmem>>, %arg8: memref<128x512xbf16, #tpu.memory_space<vmem>>, %arg9: memref<1x512xf32, #tpu.memory_space<vmem>>, %arg10: memref<128x128xbf16, #tpu.memory_space<vmem>>, %arg11: memref<1x128xf32, #tpu.memory_space<vmem>>, %arg12: memref<8x8x128xf32, #tpu.memory_space<vmem>>, %arg13: memref<2x8x128xf32, #tpu.memory_space<vmem>>, %arg14: memref<2x8x128xf32, #tpu.memory_space<vmem>>, %arg15: memref<8x8x512xf32, #tpu.memory_space<vmem>>, %arg16: memref<8x8x128xf32, #tpu.memory_space<vmem>>) attributes {dimension_semantics = [#tpu.dimension_semantics<parallel>], iteration_bounds = array<i64: 1>, scalar_prefetch = 0 : i64, scratch_operands = 2 : i64, tpu.core_type = #tpu.core_type<tc>, window_params = [{transform_indices = @transform_0, window_bounds = array<i64: 8, 8, 128>}, {transform_indices = @transform_1, window_bounds = array<i64: 2, 8, 128>}, {transform_indices = @transform_2, window_bounds = array<i64: 2, 8, 128>}, {pipeline_mode = #tpu.pipeline_mode<synchronous>, transform_indices = @transform_3, window_bounds = array<i64: 128, 512>}, {pipeline_mode = #tpu.pipeline_mode<synchronous>, transform_indices = @transform_4, window_bounds = array<i64: 128, 512>}, {pipeline_mode = #tpu.pipeline_mode<synchronous>, transform_indices = @transform_5, window_bounds = array<i64: 1, 512>}, {pipeline_mode = #tpu.pipeline_mode<synchronous>, transform_indices = @transform_6, window_bounds = array<i64: 128, 512>}, {pipeline_mode = #tpu.pipeline_mode<synchronous>, transform_indices = @transform_7, window_bounds = array<i64: 128, 512>}, {pipeline_mode = #tpu.pipeline_mode<synchronous>, transform_indices = @transform_8, window_bounds = array<i64: 1, 512>}, {pipeline_mode = #tpu.pipeline_mode<synchronous>, transform_indices = @transform_9, window_bounds = array<i64: 128, 128>}, {pipeline_mode = #tpu.pipeline_mode<synchronous>, transform_indices = @transform_10, window_bounds = array<i64: 1, 128>}, {transform_indices = @transform_11, window_bounds = array<i64: 8, 8, 128>}, {transform_indices = @transform_12, window_bounds = array<i64: 2, 8, 128>}, {transform_indices = @transform_13, window_bounds = array<i64: 2, 8, 128>}]} {
    %c0 = arith.constant 0 : index
    %c0_0 = arith.constant 0 : index
    %c0_1 = arith.constant 0 : index
    %0 = vector.load %arg1[%c0, %c0_0, %c0_1] : memref<8x8x128xf32, #tpu.memory_space<vmem>>, vector<8x8x128xf32>
    %1 = vector.shape_cast %0 : vector<8x8x128xf32> to vector<64x128xf32>
    %2 = arith.truncf %1 : vector<64x128xf32> to vector<64x128xbf16>
    %c0_2 = arith.constant 0 : index
    %c0_3 = arith.constant 0 : index
    %3 = vector.load %arg4[%c0_2, %c0_3] : memref<128x512xbf16, #tpu.memory_space<vmem>>, vector<128x512xbf16>
    %cst = arith.constant dense<0.000000e+00> : vector<64x512xf32>
    %4 = tpu.matmul %2, %3, %cst {dimension_numbers = #tpu.dot_dimension_numbers<[1], [0], [0], [1], [0, 0, 1, 1], [], []>} : vector<64x128xbf16>, vector<128x512xbf16>, vector<64x512xf32> -> vector<64x512xf32>
    %c0_4 = arith.constant 0 : index
    %c0_5 = arith.constant 0 : index
    %5 = vector.load %arg6[%c0_4, %c0_5] : memref<1x512xf32, #tpu.memory_space<vmem>>, vector<1x512xf32>
    %6 = vector.broadcast %5 : vector<1x512xf32> to vector<64x512xf32>
    %7 = arith.addf %4, %6 : vector<64x512xf32>
    %8 = vector.shape_cast %7 : vector<64x512xf32> to vector<8x8x512xf32>
    %c0_6 = arith.constant 0 : index
    %c0_7 = arith.constant 0 : index
    %c0_8 = arith.constant 0 : index
    %9 = vector.load %arg15[%c0_6, %c0_7, %c0_8] : memref<8x8x512xf32, #tpu.memory_space<vmem>>, vector<8x8x512xf32>
    tpu.vector_store %arg15[%c0_6, %c0_7, %c0_8], %8 {strides = array<i32>} : memref<8x8x512xf32, #tpu.memory_space<vmem>>, vector<8x8x512xf32>,
    %c0_9 = arith.constant 0 : index
    %c0_10 = arith.constant 0 : index
    %10 = vector.load %arg5[%c0_9, %c0_10] : memref<128x512xbf16, #tpu.memory_space<vmem>>, vector<128x512xbf16>
    %c0_11 = arith.constant 0 : index
    %c0_12 = arith.constant 0 : index
    %c0_13 = arith.constant 0 : index
    %11 = vector.load %arg2[%c0_11, %c0_12, %c0_13] : memref<2x8x128xf32, #tpu.memory_space<vmem>>, vector<1x8x128xf32>
    %12 = vector.shape_cast %11 : vector<1x8x128xf32> to vector<8x128xf32>
    %c0_14 = arith.constant 0 : index
    %c0_15 = arith.constant 0 : index
    %c0_16 = arith.constant 0 : index
    %13 = vector.load %arg3[%c0_14, %c0_15, %c0_16] : memref<2x8x128xf32, #tpu.memory_space<vmem>>, vector<1x8x128xf32>
    %14 = vector.shape_cast %13 : vector<1x8x128xf32> to vector<8x128xf32>
    %c0_17 = arith.constant 0 : index
    %c0_18 = arith.constant 0 : index
    %c0_19 = arith.constant 0 : index
    %15 = vector.load %arg15[%c0_17, %c0_18, %c0_19] : memref<8x8x512xf32, #tpu.memory_space<vmem>>, vector<1x8x512xf32>
    %16 = vector.shape_cast %15 : vector<1x8x512xf32> to vector<8x512xf32>
    %17 = arith.truncf %12 : vector<8x128xf32> to vector<8x128xbf16>
    %cst_20 = arith.constant dense<0.000000e+00> : vector<8x512xf32>
    %18 = tpu.matmul %17, %10, %cst_20 {dimension_numbers = #tpu.dot_dimension_numbers<[1], [0], [0], [1], [0, 0, 1, 1], [], []>} : vector<8x128xbf16>, vector<128x512xbf16>, vector<8x512xf32> -> vector<8x512xf32>
    %19 = arith.addf %16, %18 : vector<8x512xf32>
    %20 = vector.extract_strided_slice %19 {offsets = [0, 0], sizes = [8, 128], strides = [1, 1]} : vector<8x512xf32> to vector<8x128xf32>
    %21 = arith.negf %20 : vector<8x128xf32>
    %22 = math.exp %21 : vector<8x128xf32>
    %cst_21 = arith.constant 1.000000e+00 : f32
    %23 = vector.broadcast %cst_21 : f32 to vector<8x128xf32>
    %24 = arith.addf %23, %22 : vector<8x128xf32>
    %25 = arith.divf %23, %24 : vector<8x128xf32>
    %26 = vector.extract_strided_slice %19 {offsets = [0, 128], sizes = [8, 128], strides = [1, 1]} : vector<8x512xf32> to vector<8x128xf32>
    %27 = arith.negf %26 : vector<8x128xf32>
    %28 = math.exp %27 : vector<8x128xf32>
    %cst_22 = arith.constant 1.000000e+00 : f32
    %29 = vector.broadcast %cst_22 : f32 to vector<8x128xf32>
    %30 = arith.addf %29, %28 : vector<8x128xf32>
    %31 = arith.divf %29, %30 : vector<8x128xf32>
    %32 = vector.extract_strided_slice %19 {offsets = [0, 256], sizes = [8, 128], strides = [1, 1]} : vector<8x512xf32> to vector<8x128xf32>
    %33 = math.tanh %32 : vector<8x128xf32>
    %34 = vector.extract_strided_slice %19 {offsets = [0, 384], sizes = [8, 128], strides = [1, 1]} : vector<8x512xf32> to vector<8x128xf32>
    %35 = arith.negf %34 : vector<8x128xf32>
    %36 = math.exp %35 : vector<8x128xf32>
    %cst_23 = arith.constant 1.000000e+00 : f32
    %37 = vector.broadcast %cst_23 : f32 to vector<8x128xf32>
    %38 = arith.addf %37, %36 : vector<8x128xf32>
    %39 = arith.divf %37, %38 : vector<8x128xf32>
    %40 = arith.mulf %31, %14 : vector<8x128xf32>
    %41 = arith.mulf %25, %33 : vector<8x128xf32>
    %42 = arith.addf %40, %41 : vector<8x128xf32>
    %43 = math.tanh %42 : vector<8x128xf32>
    %44 = arith.mulf %39, %43 : vector<8x128xf32>
    %c0_24 = arith.constant 0 : index
    %c0_25 = arith.constant 0 : index
    %c0_26 = arith.constant 0 : index
    %45 = vector.load %arg16[%c0_24, %c0_25, %c0_26] : memref<8x8x128xf32, #tpu.memory_space<vmem>>, vector<1x8x128xf32>
    %46 = vector.shape_cast %45 : vector<1x8x128xf32> to vector<8x128xf32>
    %47 = vector.shape_cast %44 : vector<8x128xf32> to vector<1x8x128xf32>
    tpu.vector_store %arg16[%c0_24, %c0_25, %c0_26], %47 {strides = array<i32>} : memref<8x8x128xf32, #tpu.memory_space<vmem>>, vector<1x8x128xf32>,
    %c1 = arith.constant 1 : index
    %c0_27 = arith.constant 0 : index
    %c0_28 = arith.constant 0 : index
    %48 = vector.load %arg15[%c1, %c0_27, %c0_28] : memref<8x8x512xf32, #tpu.memory_space<vmem>>, vector<1x8x512xf32>
    %49 = vector.shape_cast %48 : vector<1x8x512xf32> to vector<8x512xf32>
    %50 = arith.truncf %44 : vector<8x128xf32> to vector<8x128xbf16>
    %cst_29 = arith.constant dense<0.000000e+00> : vector<8x512xf32>
    %51 = tpu.matmul %50, %10, %cst_29 {dimension_numbers = #tpu.dot_dimension_numbers<[1], [0], [0], [1], [0, 0, 1, 1], [], []>} : vector<8x128xbf16>, vector<128x512xbf16>, vector<8x512xf32> -> vector<8x512xf32>
    %52 = arith.addf %49, %51 : vector<8x512xf32>
    %53 = vector.extract_strided_slice %52 {offsets = [0, 0], sizes = [8, 128], strides = [1, 1]} : vector<8x512xf32> to vector<8x128xf32>
    %54 = arith.negf %53 : vector<8x128xf32>
    %55 = math.exp %54 : vector<8x128xf32>
    %cst_30 = arith.constant 1.000000e+00 : f32
    %56 = vector.broadcast %cst_30 : f32 to vector<8x128xf32>
    %57 = arith.addf %56, %55 : vector<8x128xf32>
    %58 = arith.divf %56, %57 : vector<8x128xf32>
    %59 = vector.extract_strided_slice %52 {offsets = [0, 128], sizes = [8, 128], strides = [1, 1]} : vector<8x512xf32> to vector<8x128xf32>
    %60 = arith.negf %59 : vector<8x128xf32>
    %61 = math.exp %60 : vector<8x128xf32>
    %cst_31 = arith.constant 1.000000e+00 : f32
    %62 = vector.broadcast %cst_31 : f32 to vector<8x128xf32>
    %63 = arith.addf %62, %61 : vector<8x128xf32>
    %64 = arith.divf %62, %63 : vector<8x128xf32>
    %65 = vector.extract_strided_slice %52 {offsets = [0, 256], sizes = [8, 128], strides = [1, 1]} : vector<8x512xf32> to vector<8x128xf32>
    %66 = math.tanh %65 : vector<8x128xf32>
    %67 = vector.extract_strided_slice %52 {offsets = [0, 384], sizes = [8, 128], strides = [1, 1]} : vector<8x512xf32> to vector<8x128xf32>
    %68 = arith.negf %67 : vector<8x128xf32>
    %69 = math.exp %68 : vector<8x128xf32>
    %cst_32 = arith.constant 1.000000e+00 : f32
    %70 = vector.broadcast %cst_32 : f32 to vector<8x128xf32>
    %71 = arith.addf %70, %69 : vector<8x128xf32>
    %72 = arith.divf %70, %71 : vector<8x128xf32>
    %73 = arith.mulf %64, %42 : vector<8x128xf32>
    %74 = arith.mulf %58, %66 : vector<8x128xf32>
    %75 = arith.addf %73, %74 : vector<8x128xf32>
    %76 = math.tanh %75 : vector<8x128xf32>
    %77 = arith.mulf %72, %76 : vector<8x128xf32>
    %c1_33 = arith.constant 1 : index
    %c0_34 = arith.constant 0 : index
    %c0_35 = arith.constant 0 : index
    %78 = vector.load %arg16[%c1_33, %c0_34, %c0_35] : memref<8x8x128xf32, #tpu.memory_space<vmem>>, vector<1x8x128xf32>
    %79 = vector.shape_cast %78 : vector<1x8x128xf32> to vector<8x128xf32>
    %80 = vector.shape_cast %77 : vector<8x128xf32> to vector<1x8x128xf32>
    tpu.vector_store %arg16[%c1_33, %c0_34, %c0_35], %80 {strides = array<i32>} : memref<8x8x128xf32, #tpu.memory_space<vmem>>, vector<1x8x128xf32>,
    %c2 = arith.constant 2 : index
    %c0_36 = arith.constant 0 : index
    %c0_37 = arith.constant 0 : index
    %81 = vector.load %arg15[%c2, %c0_36, %c0_37] : memref<8x8x512xf32, #tpu.memory_space<vmem>>, vector<1x8x512xf32>
    %82 = vector.shape_cast %81 : vector<1x8x512xf32> to vector<8x512xf32>
    %83 = arith.truncf %77 : vector<8x128xf32> to vector<8x128xbf16>
    %cst_38 = arith.constant dense<0.000000e+00> : vector<8x512xf32>
    %84 = tpu.matmul %83, %10, %cst_38 {dimension_numbers = #tpu.dot_dimension_numbers<[1], [0], [0], [1], [0, 0, 1, 1], [], []>} : vector<8x128xbf16>, vector<128x512xbf16>, vector<8x512xf32> -> vector<8x512xf32>
    %85 = arith.addf %82, %84 : vector<8x512xf32>
    %86 = vector.extract_strided_slice %85 {offsets = [0, 0], sizes = [8, 128], strides = [1, 1]} : vector<8x512xf32> to vector<8x128xf32>
    %87 = arith.negf %86 : vector<8x128xf32>
    %88 = math.exp %87 : vector<8x128xf32>
    %cst_39 = arith.constant 1.000000e+00 : f32
    %89 = vector.broadcast %cst_39 : f32 to vector<8x128xf32>
    %90 = arith.addf %89, %88 : vector<8x128xf32>
    %91 = arith.divf %89, %90 : vector<8x128xf32>
    %92 = vector.extract_strided_slice %85 {offsets = [0, 128], sizes = [8, 128], strides = [1, 1]} : vector<8x512xf32> to vector<8x128xf32>
    %93 = arith.negf %92 : vector<8x128xf32>
    %94 = math.exp %93 : vector<8x128xf32>
    %cst_40 = arith.constant 1.000000e+00 : f32
    %95 = vector.broadcast %cst_40 : f32 to vector<8x128xf32>
    %96 = arith.addf %95, %94 : vector<8x128xf32>
    %97 = arith.divf %95, %96 : vector<8x128xf32>
    %98 = vector.extract_strided_slice %85 {offsets = [0, 256], sizes = [8, 128], strides = [1, 1]} : vector<8x512xf32> to vector<8x128xf32>
    %99 = math.tanh %98 : vector<8x128xf32>
    %100 = vector.extract_strided_slice %85 {offsets = [0, 384], sizes = [8, 128], strides = [1, 1]} : vector<8x512xf32> to vector<8x128xf32>
    %101 = arith.negf %100 : vector<8x128xf32>
    %102 = math.exp %101 : vector<8x128xf32>
    %cst_41 = arith.constant 1.000000e+00 : f32
    %103 = vector.broadcast %cst_41 : f32 to vector<8x128xf32>
    %104 = arith.addf %103, %102 : vector<8x128xf32>
    %105 = arith.divf %103, %104 : vector<8x128xf32>
    %106 = arith.mulf %97, %75 : vector<8x128xf32>
    %107 = arith.mulf %91, %99 : vector<8x128xf32>
    %108 = arith.addf %106, %107 : vector<8x128xf32>
    %109 = math.tanh %108 : vector<8x128xf32>
    %110 = arith.mulf %105, %109 : vector<8x128xf32>
    %c2_42 = arith.constant 2 : index
    %c0_43 = arith.constant 0 : index
    %c0_44 = arith.constant 0 : index
    %111 = vector.load %arg16[%c2_42, %c0_43, %c0_44] : memref<8x8x128xf32, #tpu.memory_space<vmem>>, vector<1x8x128xf32>
    %112 = vector.shape_cast %111 : vector<1x8x128xf32> to vector<8x128xf32>
    %113 = vector.shape_cast %110 : vector<8x128xf32> to vector<1x8x128xf32>
    tpu.vector_store %arg16[%c2_42, %c0_43, %c0_44], %113 {strides = array<i32>} : memref<8x8x128xf32, #tpu.memory_space<vmem>>, vector<1x8x128xf32>,
    %c3 = arith.constant 3 : index
    %c0_45 = arith.constant 0 : index
    %c0_46 = arith.constant 0 : index
    %114 = vector.load %arg15[%c3, %c0_45, %c0_46] : memref<8x8x512xf32, #tpu.memory_space<vmem>>, vector<1x8x512xf32>
    %115 = vector.shape_cast %114 : vector<1x8x512xf32> to vector<8x512xf32>
    %116 = arith.truncf %110 : vector<8x128xf32> to vector<8x128xbf16>
    %cst_47 = arith.constant dense<0.000000e+00> : vector<8x512xf32>
    %117 = tpu.matmul %116, %10, %cst_47 {dimension_numbers = #tpu.dot_dimension_numbers<[1], [0], [0], [1], [0, 0, 1, 1], [], []>} : vector<8x128xbf16>, vector<128x512xbf16>, vector<8x512xf32> -> vector<8x512xf32>
    %118 = arith.addf %115, %117 : vector<8x512xf32>
    %119 = vector.extract_strided_slice %118 {offsets = [0, 0], sizes = [8, 128], strides = [1, 1]} : vector<8x512xf32> to vector<8x128xf32>
    %120 = arith.negf %119 : vector<8x128xf32>
    %121 = math.exp %120 : vector<8x128xf32>
    %cst_48 = arith.constant 1.000000e+00 : f32
    %122 = vector.broadcast %cst_48 : f32 to vector<8x128xf32>
    %123 = arith.addf %122, %121 : vector<8x128xf32>
    %124 = arith.divf %122, %123 : vector<8x128xf32>
    %125 = vector.extract_strided_slice %118 {offsets = [0, 128], sizes = [8, 128], strides = [1, 1]} : vector<8x512xf32> to vector<8x128xf32>
    %126 = arith.negf %125 : vector<8x128xf32>
    %127 = math.exp %126 : vector<8x128xf32>
    %cst_49 = arith.constant 1.000000e+00 : f32
    %128 = vector.broadcast %cst_49 : f32 to vector<8x128xf32>
    %129 = arith.addf %128, %127 : vector<8x128xf32>
    %130 = arith.divf %128, %129 : vector<8x128xf32>
    %131 = vector.extract_strided_slice %118 {offsets = [0, 256], sizes = [8, 128], strides = [1, 1]} : vector<8x512xf32> to vector<8x128xf32>
    %132 = math.tanh %131 : vector<8x128xf32>
    %133 = vector.extract_strided_slice %118 {offsets = [0, 384], sizes = [8, 128], strides = [1, 1]} : vector<8x512xf32> to vector<8x128xf32>
    %134 = arith.negf %133 : vector<8x128xf32>
    %135 = math.exp %134 : vector<8x128xf32>
    %cst_50 = arith.constant 1.000000e+00 : f32
    %136 = vector.broadcast %cst_50 : f32 to vector<8x128xf32>
    %137 = arith.addf %136, %135 : vector<8x128xf32>
    %138 = arith.divf %136, %137 : vector<8x128xf32>
    %139 = arith.mulf %130, %108 : vector<8x128xf32>
    %140 = arith.mulf %124, %132 : vector<8x128xf32>
    %141 = arith.addf %139, %140 : vector<8x128xf32>
    %142 = math.tanh %141 : vector<8x128xf32>
    %143 = arith.mulf %138, %142 : vector<8x128xf32>
    %c3_51 = arith.constant 3 : index
    %c0_52 = arith.constant 0 : index
    %c0_53 = arith.constant 0 : index
    %144 = vector.load %arg16[%c3_51, %c0_52, %c0_53] : memref<8x8x128xf32, #tpu.memory_space<vmem>>, vector<1x8x128xf32>
    %145 = vector.shape_cast %144 : vector<1x8x128xf32> to vector<8x128xf32>
    %146 = vector.shape_cast %143 : vector<8x128xf32> to vector<1x8x128xf32>
    tpu.vector_store %arg16[%c3_51, %c0_52, %c0_53], %146 {strides = array<i32>} : memref<8x8x128xf32, #tpu.memory_space<vmem>>, vector<1x8x128xf32>,
    %c4 = arith.constant 4 : index
    %c0_54 = arith.constant 0 : index
    %c0_55 = arith.constant 0 : index
    %147 = vector.load %arg15[%c4, %c0_54, %c0_55] : memref<8x8x512xf32, #tpu.memory_space<vmem>>, vector<1x8x512xf32>
    %148 = vector.shape_cast %147 : vector<1x8x512xf32> to vector<8x512xf32>
    %149 = arith.truncf %143 : vector<8x128xf32> to vector<8x128xbf16>
    %cst_56 = arith.constant dense<0.000000e+00> : vector<8x512xf32>
    %150 = tpu.matmul %149, %10, %cst_56 {dimension_numbers = #tpu.dot_dimension_numbers<[1], [0], [0], [1], [0, 0, 1, 1], [], []>} : vector<8x128xbf16>, vector<128x512xbf16>, vector<8x512xf32> -> vector<8x512xf32>
    %151 = arith.addf %148, %150 : vector<8x512xf32>
    %152 = vector.extract_strided_slice %151 {offsets = [0, 0], sizes = [8, 128], strides = [1, 1]} : vector<8x512xf32> to vector<8x128xf32>
    %153 = arith.negf %152 : vector<8x128xf32>
    %154 = math.exp %153 : vector<8x128xf32>
    %cst_57 = arith.constant 1.000000e+00 : f32
    %155 = vector.broadcast %cst_57 : f32 to vector<8x128xf32>
    %156 = arith.addf %155, %154 : vector<8x128xf32>
    %157 = arith.divf %155, %156 : vector<8x128xf32>
    %158 = vector.extract_strided_slice %151 {offsets = [0, 128], sizes = [8, 128], strides = [1, 1]} : vector<8x512xf32> to vector<8x128xf32>
    %159 = arith.negf %158 : vector<8x128xf32>
    %160 = math.exp %159 : vector<8x128xf32>
    %cst_58 = arith.constant 1.000000e+00 : f32
    %161 = vector.broadcast %cst_58 : f32 to vector<8x128xf32>
    %162 = arith.addf %161, %160 : vector<8x128xf32>
    %163 = arith.divf %161, %162 : vector<8x128xf32>
    %164 = vector.extract_strided_slice %151 {offsets = [0, 256], sizes = [8, 128], strides = [1, 1]} : vector<8x512xf32> to vector<8x128xf32>
    %165 = math.tanh %164 : vector<8x128xf32>
    %166 = vector.extract_strided_slice %151 {offsets = [0, 384], sizes = [8, 128], strides = [1, 1]} : vector<8x512xf32> to vector<8x128xf32>
    %167 = arith.negf %166 : vector<8x128xf32>
    %168 = math.exp %167 : vector<8x128xf32>
    %cst_59 = arith.constant 1.000000e+00 : f32
    %169 = vector.broadcast %cst_59 : f32 to vector<8x128xf32>
    %170 = arith.addf %169, %168 : vector<8x128xf32>
    %171 = arith.divf %169, %170 : vector<8x128xf32>
    %172 = arith.mulf %163, %141 : vector<8x128xf32>
    %173 = arith.mulf %157, %165 : vector<8x128xf32>
    %174 = arith.addf %172, %173 : vector<8x128xf32>
    %175 = math.tanh %174 : vector<8x128xf32>
    %176 = arith.mulf %171, %175 : vector<8x128xf32>
    %c4_60 = arith.constant 4 : index
    %c0_61 = arith.constant 0 : index
    %c0_62 = arith.constant 0 : index
    %177 = vector.load %arg16[%c4_60, %c0_61, %c0_62] : memref<8x8x128xf32, #tpu.memory_space<vmem>>, vector<1x8x128xf32>
    %178 = vector.shape_cast %177 : vector<1x8x128xf32> to vector<8x128xf32>
    %179 = vector.shape_cast %176 : vector<8x128xf32> to vector<1x8x128xf32>
    tpu.vector_store %arg16[%c4_60, %c0_61, %c0_62], %179 {strides = array<i32>} : memref<8x8x128xf32, #tpu.memory_space<vmem>>, vector<1x8x128xf32>,
    %c5 = arith.constant 5 : index
    %c0_63 = arith.constant 0 : index
    %c0_64 = arith.constant 0 : index
    %180 = vector.load %arg15[%c5, %c0_63, %c0_64] : memref<8x8x512xf32, #tpu.memory_space<vmem>>, vector<1x8x512xf32>
    %181 = vector.shape_cast %180 : vector<1x8x512xf32> to vector<8x512xf32>
    %182 = arith.truncf %176 : vector<8x128xf32> to vector<8x128xbf16>
    %cst_65 = arith.constant dense<0.000000e+00> : vector<8x512xf32>
    %183 = tpu.matmul %182, %10, %cst_65 {dimension_numbers = #tpu.dot_dimension_numbers<[1], [0], [0], [1], [0, 0, 1, 1], [], []>} : vector<8x128xbf16>, vector<128x512xbf16>, vector<8x512xf32> -> vector<8x512xf32>
    %184 = arith.addf %181, %183 : vector<8x512xf32>
    %185 = vector.extract_strided_slice %184 {offsets = [0, 0], sizes = [8, 128], strides = [1, 1]} : vector<8x512xf32> to vector<8x128xf32>
    %186 = arith.negf %185 : vector<8x128xf32>
    %187 = math.exp %186 : vector<8x128xf32>
    %cst_66 = arith.constant 1.000000e+00 : f32
    %188 = vector.broadcast %cst_66 : f32 to vector<8x128xf32>
    %189 = arith.addf %188, %187 : vector<8x128xf32>
    %190 = arith.divf %188, %189 : vector<8x128xf32>
    %191 = vector.extract_strided_slice %184 {offsets = [0, 128], sizes = [8, 128], strides = [1, 1]} : vector<8x512xf32> to vector<8x128xf32>
    %192 = arith.negf %191 : vector<8x128xf32>
    %193 = math.exp %192 : vector<8x128xf32>
    %cst_67 = arith.constant 1.000000e+00 : f32
    %194 = vector.broadcast %cst_67 : f32 to vector<8x128xf32>
    %195 = arith.addf %194, %193 : vector<8x128xf32>
    %196 = arith.divf %194, %195 : vector<8x128xf32>
    %197 = vector.extract_strided_slice %184 {offsets = [0, 256], sizes = [8, 128], strides = [1, 1]} : vector<8x512xf32> to vector<8x128xf32>
    %198 = math.tanh %197 : vector<8x128xf32>
    %199 = vector.extract_strided_slice %184 {offsets = [0, 384], sizes = [8, 128], strides = [1, 1]} : vector<8x512xf32> to vector<8x128xf32>
    %200 = arith.negf %199 : vector<8x128xf32>
    %201 = math.exp %200 : vector<8x128xf32>
    %cst_68 = arith.constant 1.000000e+00 : f32
    %202 = vector.broadcast %cst_68 : f32 to vector<8x128xf32>
    %203 = arith.addf %202, %201 : vector<8x128xf32>
    %204 = arith.divf %202, %203 : vector<8x128xf32>
    %205 = arith.mulf %196, %174 : vector<8x128xf32>
    %206 = arith.mulf %190, %198 : vector<8x128xf32>
    %207 = arith.addf %205, %206 : vector<8x128xf32>
    %208 = math.tanh %207 : vector<8x128xf32>
    %209 = arith.mulf %204, %208 : vector<8x128xf32>
    %c5_69 = arith.constant 5 : index
    %c0_70 = arith.constant 0 : index
    %c0_71 = arith.constant 0 : index
    %210 = vector.load %arg16[%c5_69, %c0_70, %c0_71] : memref<8x8x128xf32, #tpu.memory_space<vmem>>, vector<1x8x128xf32>
    %211 = vector.shape_cast %210 : vector<1x8x128xf32> to vector<8x128xf32>
    %212 = vector.shape_cast %209 : vector<8x128xf32> to vector<1x8x128xf32>
    tpu.vector_store %arg16[%c5_69, %c0_70, %c0_71], %212 {strides = array<i32>} : memref<8x8x128xf32, #tpu.memory_space<vmem>>, vector<1x8x128xf32>,
    %c6 = arith.constant 6 : index
    %c0_72 = arith.constant 0 : index
    %c0_73 = arith.constant 0 : index
    %213 = vector.load %arg15[%c6, %c0_72, %c0_73] : memref<8x8x512xf32, #tpu.memory_space<vmem>>, vector<1x8x512xf32>
    %214 = vector.shape_cast %213 : vector<1x8x512xf32> to vector<8x512xf32>
    %215 = arith.truncf %209 : vector<8x128xf32> to vector<8x128xbf16>
    %cst_74 = arith.constant dense<0.000000e+00> : vector<8x512xf32>
    %216 = tpu.matmul %215, %10, %cst_74 {dimension_numbers = #tpu.dot_dimension_numbers<[1], [0], [0], [1], [0, 0, 1, 1], [], []>} : vector<8x128xbf16>, vector<128x512xbf16>, vector<8x512xf32> -> vector<8x512xf32>
    %217 = arith.addf %214, %216 : vector<8x512xf32>
    %218 = vector.extract_strided_slice %217 {offsets = [0, 0], sizes = [8, 128], strides = [1, 1]} : vector<8x512xf32> to vector<8x128xf32>
    %219 = arith.negf %218 : vector<8x128xf32>
    %220 = math.exp %219 : vector<8x128xf32>
    %cst_75 = arith.constant 1.000000e+00 : f32
    %221 = vector.broadcast %cst_75 : f32 to vector<8x128xf32>
    %222 = arith.addf %221, %220 : vector<8x128xf32>
    %223 = arith.divf %221, %222 : vector<8x128xf32>
    %224 = vector.extract_strided_slice %217 {offsets = [0, 128], sizes = [8, 128], strides = [1, 1]} : vector<8x512xf32> to vector<8x128xf32>
    %225 = arith.negf %224 : vector<8x128xf32>
    %226 = math.exp %225 : vector<8x128xf32>
    %cst_76 = arith.constant 1.000000e+00 : f32
    %227 = vector.broadcast %cst_76 : f32 to vector<8x128xf32>
    %228 = arith.addf %227, %226 : vector<8x128xf32>
    %229 = arith.divf %227, %228 : vector<8x128xf32>
    %230 = vector.extract_strided_slice %217 {offsets = [0, 256], sizes = [8, 128], strides = [1, 1]} : vector<8x512xf32> to vector<8x128xf32>
    %231 = math.tanh %230 : vector<8x128xf32>
    %232 = vector.extract_strided_slice %217 {offsets = [0, 384], sizes = [8, 128], strides = [1, 1]} : vector<8x512xf32> to vector<8x128xf32>
    %233 = arith.negf %232 : vector<8x128xf32>
    %234 = math.exp %233 : vector<8x128xf32>
    %cst_77 = arith.constant 1.000000e+00 : f32
    %235 = vector.broadcast %cst_77 : f32 to vector<8x128xf32>
    %236 = arith.addf %235, %234 : vector<8x128xf32>
    %237 = arith.divf %235, %236 : vector<8x128xf32>
    %238 = arith.mulf %229, %207 : vector<8x128xf32>
    %239 = arith.mulf %223, %231 : vector<8x128xf32>
    %240 = arith.addf %238, %239 : vector<8x128xf32>
    %241 = math.tanh %240 : vector<8x128xf32>
    %242 = arith.mulf %237, %241 : vector<8x128xf32>
    %c6_78 = arith.constant 6 : index
    %c0_79 = arith.constant 0 : index
    %c0_80 = arith.constant 0 : index
    %243 = vector.load %arg16[%c6_78, %c0_79, %c0_80] : memref<8x8x128xf32, #tpu.memory_space<vmem>>, vector<1x8x128xf32>
    %244 = vector.shape_cast %243 : vector<1x8x128xf32> to vector<8x128xf32>
    %245 = vector.shape_cast %242 : vector<8x128xf32> to vector<1x8x128xf32>
    tpu.vector_store %arg16[%c6_78, %c0_79, %c0_80], %245 {strides = array<i32>} : memref<8x8x128xf32, #tpu.memory_space<vmem>>, vector<1x8x128xf32>,
    %c7 = arith.constant 7 : index
    %c0_81 = arith.constant 0 : index
    %c0_82 = arith.constant 0 : index
    %246 = vector.load %arg15[%c7, %c0_81, %c0_82] : memref<8x8x512xf32, #tpu.memory_space<vmem>>, vector<1x8x512xf32>
    %247 = vector.shape_cast %246 : vector<1x8x512xf32> to vector<8x512xf32>
    %248 = arith.truncf %242 : vector<8x128xf32> to vector<8x128xbf16>
    %cst_83 = arith.constant dense<0.000000e+00> : vector<8x512xf32>
    %249 = tpu.matmul %248, %10, %cst_83 {dimension_numbers = #tpu.dot_dimension_numbers<[1], [0], [0], [1], [0, 0, 1, 1], [], []>} : vector<8x128xbf16>, vector<128x512xbf16>, vector<8x512xf32> -> vector<8x512xf32>
    %250 = arith.addf %247, %249 : vector<8x512xf32>
    %251 = vector.extract_strided_slice %250 {offsets = [0, 0], sizes = [8, 128], strides = [1, 1]} : vector<8x512xf32> to vector<8x128xf32>
    %252 = arith.negf %251 : vector<8x128xf32>
    %253 = math.exp %252 : vector<8x128xf32>
    %cst_84 = arith.constant 1.000000e+00 : f32
    %254 = vector.broadcast %cst_84 : f32 to vector<8x128xf32>
    %255 = arith.addf %254, %253 : vector<8x128xf32>
    %256 = arith.divf %254, %255 : vector<8x128xf32>
    %257 = vector.extract_strided_slice %250 {offsets = [0, 128], sizes = [8, 128], strides = [1, 1]} : vector<8x512xf32> to vector<8x128xf32>
    %258 = arith.negf %257 : vector<8x128xf32>
    %259 = math.exp %258 : vector<8x128xf32>
    %cst_85 = arith.constant 1.000000e+00 : f32
    %260 = vector.broadcast %cst_85 : f32 to vector<8x128xf32>
    %261 = arith.addf %260, %259 : vector<8x128xf32>
    %262 = arith.divf %260, %261 : vector<8x128xf32>
    %263 = vector.extract_strided_slice %250 {offsets = [0, 256], sizes = [8, 128], strides = [1, 1]} : vector<8x512xf32> to vector<8x128xf32>
    %264 = math.tanh %263 : vector<8x128xf32>
    %265 = vector.extract_strided_slice %250 {offsets = [0, 384], sizes = [8, 128], strides = [1, 1]} : vector<8x512xf32> to vector<8x128xf32>
    %266 = arith.negf %265 : vector<8x128xf32>
    %267 = math.exp %266 : vector<8x128xf32>
    %cst_86 = arith.constant 1.000000e+00 : f32
    %268 = vector.broadcast %cst_86 : f32 to vector<8x128xf32>
    %269 = arith.addf %268, %267 : vector<8x128xf32>
    %270 = arith.divf %268, %269 : vector<8x128xf32>
    %271 = arith.mulf %262, %240 : vector<8x128xf32>
    %272 = arith.mulf %256, %264 : vector<8x128xf32>
    %273 = arith.addf %271, %272 : vector<8x128xf32>
    %274 = math.tanh %273 : vector<8x128xf32>
    %275 = arith.mulf %270, %274 : vector<8x128xf32>
    %c7_87 = arith.constant 7 : index
    %c0_88 = arith.constant 0 : index
    %c0_89 = arith.constant 0 : index
    %276 = vector.load %arg16[%c7_87, %c0_88, %c0_89] : memref<8x8x128xf32, #tpu.memory_space<vmem>>, vector<1x8x128xf32>
    %277 = vector.shape_cast %276 : vector<1x8x128xf32> to vector<8x128xf32>
    %278 = vector.shape_cast %275 : vector<8x128xf32> to vector<1x8x128xf32>
    tpu.vector_store %arg16[%c7_87, %c0_88, %c0_89], %278 {strides = array<i32>} : memref<8x8x128xf32, #tpu.memory_space<vmem>>, vector<1x8x128xf32>,
    %c0_90 = arith.constant 0 : index
    %c0_91 = arith.constant 0 : index
    %c0_92 = arith.constant 0 : index
    %279 = vector.load %arg13[%c0_90, %c0_91, %c0_92] : memref<2x8x128xf32, #tpu.memory_space<vmem>>, vector<1x8x128xf32>
    %280 = vector.shape_cast %279 : vector<1x8x128xf32> to vector<8x128xf32>
    %281 = vector.shape_cast %275 : vector<8x128xf32> to vector<1x8x128xf32>
    tpu.vector_store %arg13[%c0_90, %c0_91, %c0_92], %281 {strides = array<i32>} : memref<2x8x128xf32, #tpu.memory_space<vmem>>, vector<1x8x128xf32>,
    %c0_93 = arith.constant 0 : index
    %c0_94 = arith.constant 0 : index
    %c0_95 = arith.constant 0 : index
    %282 = vector.load %arg14[%c0_93, %c0_94, %c0_95] : memref<2x8x128xf32, #tpu.memory_space<vmem>>, vector<1x8x128xf32>
    %283 = vector.shape_cast %282 : vector<1x8x128xf32> to vector<8x128xf32>
    %284 = vector.shape_cast %273 : vector<8x128xf32> to vector<1x8x128xf32>
    tpu.vector_store %arg14[%c0_93, %c0_94, %c0_95], %284 {strides = array<i32>} : memref<2x8x128xf32, #tpu.memory_space<vmem>>, vector<1x8x128xf32>,
    %c0_96 = arith.constant 0 : index
    %c0_97 = arith.constant 0 : index
    %c0_98 = arith.constant 0 : index
    %285 = vector.load %arg16[%c0_96, %c0_97, %c0_98] : memref<8x8x128xf32, #tpu.memory_space<vmem>>, vector<8x8x128xf32>
    %286 = vector.shape_cast %285 : vector<8x8x128xf32> to vector<64x128xf32>
    %287 = arith.truncf %286 : vector<64x128xf32> to vector<64x128xbf16>
    %c0_99 = arith.constant 0 : index
    %c0_100 = arith.constant 0 : index
    %288 = vector.load %arg7[%c0_99, %c0_100] : memref<128x512xbf16, #tpu.memory_space<vmem>>, vector<128x512xbf16>
    %cst_101 = arith.constant dense<0.000000e+00> : vector<64x512xf32>
    %289 = tpu.matmul %287, %288, %cst_101 {dimension_numbers = #tpu.dot_dimension_numbers<[1], [0], [0], [1], [0, 0, 1, 1], [], []>} : vector<64x128xbf16>, vector<128x512xbf16>, vector<64x512xf32> -> vector<64x512xf32>
    %c0_102 = arith.constant 0 : index
    %c0_103 = arith.constant 0 : index
    %290 = vector.load %arg9[%c0_102, %c0_103] : memref<1x512xf32, #tpu.memory_space<vmem>>, vector<1x512xf32>
    %291 = vector.broadcast %290 : vector<1x512xf32> to vector<64x512xf32>
    %292 = arith.addf %289, %291 : vector<64x512xf32>
    %293 = vector.shape_cast %292 : vector<64x512xf32> to vector<8x8x512xf32>
    %c0_104 = arith.constant 0 : index
    %c0_105 = arith.constant 0 : index
    %c0_106 = arith.constant 0 : index
    %294 = vector.load %arg15[%c0_104, %c0_105, %c0_106] : memref<8x8x512xf32, #tpu.memory_space<vmem>>, vector<8x8x512xf32>
    tpu.vector_store %arg15[%c0_104, %c0_105, %c0_106], %293 {strides = array<i32>} : memref<8x8x512xf32, #tpu.memory_space<vmem>>, vector<8x8x512xf32>,
    %c0_107 = arith.constant 0 : index
    %c0_108 = arith.constant 0 : index
    %295 = vector.load %arg8[%c0_107, %c0_108] : memref<128x512xbf16, #tpu.memory_space<vmem>>, vector<128x512xbf16>
    %c1_109 = arith.constant 1 : index
    %c0_110 = arith.constant 0 : index
    %c0_111 = arith.constant 0 : index
    %296 = vector.load %arg2[%c1_109, %c0_110, %c0_111] : memref<2x8x128xf32, #tpu.memory_space<vmem>>, vector<1x8x128xf32>
    %297 = vector.shape_cast %296 : vector<1x8x128xf32> to vector<8x128xf32>
    %c1_112 = arith.constant 1 : index
    %c0_113 = arith.constant 0 : index
    %c0_114 = arith.constant 0 : index
    %298 = vector.load %arg3[%c1_112, %c0_113, %c0_114] : memref<2x8x128xf32, #tpu.memory_space<vmem>>, vector<1x8x128xf32>
    %299 = vector.shape_cast %298 : vector<1x8x128xf32> to vector<8x128xf32>
    %c0_115 = arith.constant 0 : index
    %c0_116 = arith.constant 0 : index
    %c0_117 = arith.constant 0 : index
    %300 = vector.load %arg15[%c0_115, %c0_116, %c0_117] : memref<8x8x512xf32, #tpu.memory_space<vmem>>, vector<1x8x512xf32>
    %301 = vector.shape_cast %300 : vector<1x8x512xf32> to vector<8x512xf32>
    %302 = arith.truncf %297 : vector<8x128xf32> to vector<8x128xbf16>
    %cst_118 = arith.constant dense<0.000000e+00> : vector<8x512xf32>
    %303 = tpu.matmul %302, %295, %cst_118 {dimension_numbers = #tpu.dot_dimension_numbers<[1], [0], [0], [1], [0, 0, 1, 1], [], []>} : vector<8x128xbf16>, vector<128x512xbf16>, vector<8x512xf32> -> vector<8x512xf32>
    %304 = arith.addf %301, %303 : vector<8x512xf32>
    %305 = vector.extract_strided_slice %304 {offsets = [0, 0], sizes = [8, 128], strides = [1, 1]} : vector<8x512xf32> to vector<8x128xf32>
    %306 = arith.negf %305 : vector<8x128xf32>
    %307 = math.exp %306 : vector<8x128xf32>
    %cst_119 = arith.constant 1.000000e+00 : f32
    %308 = vector.broadcast %cst_119 : f32 to vector<8x128xf32>
    %309 = arith.addf %308, %307 : vector<8x128xf32>
    %310 = arith.divf %308, %309 : vector<8x128xf32>
    %311 = vector.extract_strided_slice %304 {offsets = [0, 128], sizes = [8, 128], strides = [1, 1]} : vector<8x512xf32> to vector<8x128xf32>
    %312 = arith.negf %311 : vector<8x128xf32>
    %313 = math.exp %312 : vector<8x128xf32>
    %cst_120 = arith.constant 1.000000e+00 : f32
    %314 = vector.broadcast %cst_120 : f32 to vector<8x128xf32>
    %315 = arith.addf %314, %313 : vector<8x128xf32>
    %316 = arith.divf %314, %315 : vector<8x128xf32>
    %317 = vector.extract_strided_slice %304 {offsets = [0, 256], sizes = [8, 128], strides = [1, 1]} : vector<8x512xf32> to vector<8x128xf32>
    %318 = math.tanh %317 : vector<8x128xf32>
    %319 = vector.extract_strided_slice %304 {offsets = [0, 384], sizes = [8, 128], strides = [1, 1]} : vector<8x512xf32> to vector<8x128xf32>
    %320 = arith.negf %319 : vector<8x128xf32>
    %321 = math.exp %320 : vector<8x128xf32>
    %cst_121 = arith.constant 1.000000e+00 : f32
    %322 = vector.broadcast %cst_121 : f32 to vector<8x128xf32>
    %323 = arith.addf %322, %321 : vector<8x128xf32>
    %324 = arith.divf %322, %323 : vector<8x128xf32>
    %325 = arith.mulf %316, %299 : vector<8x128xf32>
    %326 = arith.mulf %310, %318 : vector<8x128xf32>
    %327 = arith.addf %325, %326 : vector<8x128xf32>
    %328 = math.tanh %327 : vector<8x128xf32>
    %329 = arith.mulf %324, %328 : vector<8x128xf32>
    %c0_122 = arith.constant 0 : index
    %c0_123 = arith.constant 0 : index
    %c0_124 = arith.constant 0 : index
    %330 = vector.load %arg16[%c0_122, %c0_123, %c0_124] : memref<8x8x128xf32, #tpu.memory_space<vmem>>, vector<1x8x128xf32>
    %331 = vector.shape_cast %330 : vector<1x8x128xf32> to vector<8x128xf32>
    %332 = vector.shape_cast %329 : vector<8x128xf32> to vector<1x8x128xf32>
    tpu.vector_store %arg16[%c0_122, %c0_123, %c0_124], %332 {strides = array<i32>} : memref<8x8x128xf32, #tpu.memory_space<vmem>>, vector<1x8x128xf32>,
    %c1_125 = arith.constant 1 : index
    %c0_126 = arith.constant 0 : index
    %c0_127 = arith.constant 0 : index
    %333 = vector.load %arg15[%c1_125, %c0_126, %c0_127] : memref<8x8x512xf32, #tpu.memory_space<vmem>>, vector<1x8x512xf32>
    %334 = vector.shape_cast %333 : vector<1x8x512xf32> to vector<8x512xf32>
    %335 = arith.truncf %329 : vector<8x128xf32> to vector<8x128xbf16>
    %cst_128 = arith.constant dense<0.000000e+00> : vector<8x512xf32>
    %336 = tpu.matmul %335, %295, %cst_128 {dimension_numbers = #tpu.dot_dimension_numbers<[1], [0], [0], [1], [0, 0, 1, 1], [], []>} : vector<8x128xbf16>, vector<128x512xbf16>, vector<8x512xf32> -> vector<8x512xf32>
    %337 = arith.addf %334, %336 : vector<8x512xf32>
    %338 = vector.extract_strided_slice %337 {offsets = [0, 0], sizes = [8, 128], strides = [1, 1]} : vector<8x512xf32> to vector<8x128xf32>
    %339 = arith.negf %338 : vector<8x128xf32>
    %340 = math.exp %339 : vector<8x128xf32>
    %cst_129 = arith.constant 1.000000e+00 : f32
    %341 = vector.broadcast %cst_129 : f32 to vector<8x128xf32>
    %342 = arith.addf %341, %340 : vector<8x128xf32>
    %343 = arith.divf %341, %342 : vector<8x128xf32>
    %344 = vector.extract_strided_slice %337 {offsets = [0, 128], sizes = [8, 128], strides = [1, 1]} : vector<8x512xf32> to vector<8x128xf32>
    %345 = arith.negf %344 : vector<8x128xf32>
    %346 = math.exp %345 : vector<8x128xf32>
    %cst_130 = arith.constant 1.000000e+00 : f32
    %347 = vector.broadcast %cst_130 : f32 to vector<8x128xf32>
    %348 = arith.addf %347, %346 : vector<8x128xf32>
    %349 = arith.divf %347, %348 : vector<8x128xf32>
    %350 = vector.extract_strided_slice %337 {offsets = [0, 256], sizes = [8, 128], strides = [1, 1]} : vector<8x512xf32> to vector<8x128xf32>
    %351 = math.tanh %350 : vector<8x128xf32>
    %352 = vector.extract_strided_slice %337 {offsets = [0, 384], sizes = [8, 128], strides = [1, 1]} : vector<8x512xf32> to vector<8x128xf32>
    %353 = arith.negf %352 : vector<8x128xf32>
    %354 = math.exp %353 : vector<8x128xf32>
    %cst_131 = arith.constant 1.000000e+00 : f32
    %355 = vector.broadcast %cst_131 : f32 to vector<8x128xf32>
    %356 = arith.addf %355, %354 : vector<8x128xf32>
    %357 = arith.divf %355, %356 : vector<8x128xf32>
    %358 = arith.mulf %349, %327 : vector<8x128xf32>
    %359 = arith.mulf %343, %351 : vector<8x128xf32>
    %360 = arith.addf %358, %359 : vector<8x128xf32>
    %361 = math.tanh %360 : vector<8x128xf32>
    %362 = arith.mulf %357, %361 : vector<8x128xf32>
    %c1_132 = arith.constant 1 : index
    %c0_133 = arith.constant 0 : index
    %c0_134 = arith.constant 0 : index
    %363 = vector.load %arg16[%c1_132, %c0_133, %c0_134] : memref<8x8x128xf32, #tpu.memory_space<vmem>>, vector<1x8x128xf32>
    %364 = vector.shape_cast %363 : vector<1x8x128xf32> to vector<8x128xf32>
    %365 = vector.shape_cast %362 : vector<8x128xf32> to vector<1x8x128xf32>
    tpu.vector_store %arg16[%c1_132, %c0_133, %c0_134], %365 {strides = array<i32>} : memref<8x8x128xf32, #tpu.memory_space<vmem>>, vector<1x8x128xf32>,
    %c2_135 = arith.constant 2 : index
    %c0_136 = arith.constant 0 : index
    %c0_137 = arith.constant 0 : index
    %366 = vector.load %arg15[%c2_135, %c0_136, %c0_137] : memref<8x8x512xf32, #tpu.memory_space<vmem>>, vector<1x8x512xf32>
    %367 = vector.shape_cast %366 : vector<1x8x512xf32> to vector<8x512xf32>
    %368 = arith.truncf %362 : vector<8x128xf32> to vector<8x128xbf16>
    %cst_138 = arith.constant dense<0.000000e+00> : vector<8x512xf32>
    %369 = tpu.matmul %368, %295, %cst_138 {dimension_numbers = #tpu.dot_dimension_numbers<[1], [0], [0], [1], [0, 0, 1, 1], [], []>} : vector<8x128xbf16>, vector<128x512xbf16>, vector<8x512xf32> -> vector<8x512xf32>
    %370 = arith.addf %367, %369 : vector<8x512xf32>
    %371 = vector.extract_strided_slice %370 {offsets = [0, 0], sizes = [8, 128], strides = [1, 1]} : vector<8x512xf32> to vector<8x128xf32>
    %372 = arith.negf %371 : vector<8x128xf32>
    %373 = math.exp %372 : vector<8x128xf32>
    %cst_139 = arith.constant 1.000000e+00 : f32
    %374 = vector.broadcast %cst_139 : f32 to vector<8x128xf32>
    %375 = arith.addf %374, %373 : vector<8x128xf32>
    %376 = arith.divf %374, %375 : vector<8x128xf32>
    %377 = vector.extract_strided_slice %370 {offsets = [0, 128], sizes = [8, 128], strides = [1, 1]} : vector<8x512xf32> to vector<8x128xf32>
    %378 = arith.negf %377 : vector<8x128xf32>
    %379 = math.exp %378 : vector<8x128xf32>
    %cst_140 = arith.constant 1.000000e+00 : f32
    %380 = vector.broadcast %cst_140 : f32 to vector<8x128xf32>
    %381 = arith.addf %380, %379 : vector<8x128xf32>
    %382 = arith.divf %380, %381 : vector<8x128xf32>
    %383 = vector.extract_strided_slice %370 {offsets = [0, 256], sizes = [8, 128], strides = [1, 1]} : vector<8x512xf32> to vector<8x128xf32>
    %384 = math.tanh %383 : vector<8x128xf32>
    %385 = vector.extract_strided_slice %370 {offsets = [0, 384], sizes = [8, 128], strides = [1, 1]} : vector<8x512xf32> to vector<8x128xf32>
    %386 = arith.negf %385 : vector<8x128xf32>
    %387 = math.exp %386 : vector<8x128xf32>
    %cst_141 = arith.constant 1.000000e+00 : f32
    %388 = vector.broadcast %cst_141 : f32 to vector<8x128xf32>
    %389 = arith.addf %388, %387 : vector<8x128xf32>
    %390 = arith.divf %388, %389 : vector<8x128xf32>
    %391 = arith.mulf %382, %360 : vector<8x128xf32>
    %392 = arith.mulf %376, %384 : vector<8x128xf32>
    %393 = arith.addf %391, %392 : vector<8x128xf32>
    %394 = math.tanh %393 : vector<8x128xf32>
    %395 = arith.mulf %390, %394 : vector<8x128xf32>
    %c2_142 = arith.constant 2 : index
    %c0_143 = arith.constant 0 : index
    %c0_144 = arith.constant 0 : index
    %396 = vector.load %arg16[%c2_142, %c0_143, %c0_144] : memref<8x8x128xf32, #tpu.memory_space<vmem>>, vector<1x8x128xf32>
    %397 = vector.shape_cast %396 : vector<1x8x128xf32> to vector<8x128xf32>
    %398 = vector.shape_cast %395 : vector<8x128xf32> to vector<1x8x128xf32>
    tpu.vector_store %arg16[%c2_142, %c0_143, %c0_144], %398 {strides = array<i32>} : memref<8x8x128xf32, #tpu.memory_space<vmem>>, vector<1x8x128xf32>,
    %c3_145 = arith.constant 3 : index
    %c0_146 = arith.constant 0 : index
    %c0_147 = arith.constant 0 : index
    %399 = vector.load %arg15[%c3_145, %c0_146, %c0_147] : memref<8x8x512xf32, #tpu.memory_space<vmem>>, vector<1x8x512xf32>
    %400 = vector.shape_cast %399 : vector<1x8x512xf32> to vector<8x512xf32>
    %401 = arith.truncf %395 : vector<8x128xf32> to vector<8x128xbf16>
    %cst_148 = arith.constant dense<0.000000e+00> : vector<8x512xf32>
    %402 = tpu.matmul %401, %295, %cst_148 {dimension_numbers = #tpu.dot_dimension_numbers<[1], [0], [0], [1], [0, 0, 1, 1], [], []>} : vector<8x128xbf16>, vector<128x512xbf16>, vector<8x512xf32> -> vector<8x512xf32>
    %403 = arith.addf %400, %402 : vector<8x512xf32>
    %404 = vector.extract_strided_slice %403 {offsets = [0, 0], sizes = [8, 128], strides = [1, 1]} : vector<8x512xf32> to vector<8x128xf32>
    %405 = arith.negf %404 : vector<8x128xf32>
    %406 = math.exp %405 : vector<8x128xf32>
    %cst_149 = arith.constant 1.000000e+00 : f32
    %407 = vector.broadcast %cst_149 : f32 to vector<8x128xf32>
    %408 = arith.addf %407, %406 : vector<8x128xf32>
    %409 = arith.divf %407, %408 : vector<8x128xf32>
    %410 = vector.extract_strided_slice %403 {offsets = [0, 128], sizes = [8, 128], strides = [1, 1]} : vector<8x512xf32> to vector<8x128xf32>
    %411 = arith.negf %410 : vector<8x128xf32>
    %412 = math.exp %411 : vector<8x128xf32>
    %cst_150 = arith.constant 1.000000e+00 : f32
    %413 = vector.broadcast %cst_150 : f32 to vector<8x128xf32>
    %414 = arith.addf %413, %412 : vector<8x128xf32>
    %415 = arith.divf %413, %414 : vector<8x128xf32>
    %416 = vector.extract_strided_slice %403 {offsets = [0, 256], sizes = [8, 128], strides = [1, 1]} : vector<8x512xf32> to vector<8x128xf32>
    %417 = math.tanh %416 : vector<8x128xf32>
    %418 = vector.extract_strided_slice %403 {offsets = [0, 384], sizes = [8, 128], strides = [1, 1]} : vector<8x512xf32> to vector<8x128xf32>
    %419 = arith.negf %418 : vector<8x128xf32>
    %420 = math.exp %419 : vector<8x128xf32>
    %cst_151 = arith.constant 1.000000e+00 : f32
    %421 = vector.broadcast %cst_151 : f32 to vector<8x128xf32>
    %422 = arith.addf %421, %420 : vector<8x128xf32>
    %423 = arith.divf %421, %422 : vector<8x128xf32>
    %424 = arith.mulf %415, %393 : vector<8x128xf32>
    %425 = arith.mulf %409, %417 : vector<8x128xf32>
    %426 = arith.addf %424, %425 : vector<8x128xf32>
    %427 = math.tanh %426 : vector<8x128xf32>
    %428 = arith.mulf %423, %427 : vector<8x128xf32>
    %c3_152 = arith.constant 3 : index
    %c0_153 = arith.constant 0 : index
    %c0_154 = arith.constant 0 : index
    %429 = vector.load %arg16[%c3_152, %c0_153, %c0_154] : memref<8x8x128xf32, #tpu.memory_space<vmem>>, vector<1x8x128xf32>
    %430 = vector.shape_cast %429 : vector<1x8x128xf32> to vector<8x128xf32>
    %431 = vector.shape_cast %428 : vector<8x128xf32> to vector<1x8x128xf32>
    tpu.vector_store %arg16[%c3_152, %c0_153, %c0_154], %431 {strides = array<i32>} : memref<8x8x128xf32, #tpu.memory_space<vmem>>, vector<1x8x128xf32>,
    %c4_155 = arith.constant 4 : index
    %c0_156 = arith.constant 0 : index
    %c0_157 = arith.constant 0 : index
    %432 = vector.load %arg15[%c4_155, %c0_156, %c0_157] : memref<8x8x512xf32, #tpu.memory_space<vmem>>, vector<1x8x512xf32>
    %433 = vector.shape_cast %432 : vector<1x8x512xf32> to vector<8x512xf32>
    %434 = arith.truncf %428 : vector<8x128xf32> to vector<8x128xbf16>
    %cst_158 = arith.constant dense<0.000000e+00> : vector<8x512xf32>
    %435 = tpu.matmul %434, %295, %cst_158 {dimension_numbers = #tpu.dot_dimension_numbers<[1], [0], [0], [1], [0, 0, 1, 1], [], []>} : vector<8x128xbf16>, vector<128x512xbf16>, vector<8x512xf32> -> vector<8x512xf32>
    %436 = arith.addf %433, %435 : vector<8x512xf32>
    %437 = vector.extract_strided_slice %436 {offsets = [0, 0], sizes = [8, 128], strides = [1, 1]} : vector<8x512xf32> to vector<8x128xf32>
    %438 = arith.negf %437 : vector<8x128xf32>
    %439 = math.exp %438 : vector<8x128xf32>
    %cst_159 = arith.constant 1.000000e+00 : f32
    %440 = vector.broadcast %cst_159 : f32 to vector<8x128xf32>
    %441 = arith.addf %440, %439 : vector<8x128xf32>
    %442 = arith.divf %440, %441 : vector<8x128xf32>
    %443 = vector.extract_strided_slice %436 {offsets = [0, 128], sizes = [8, 128], strides = [1, 1]} : vector<8x512xf32> to vector<8x128xf32>
    %444 = arith.negf %443 : vector<8x128xf32>
    %445 = math.exp %444 : vector<8x128xf32>
    %cst_160 = arith.constant 1.000000e+00 : f32
    %446 = vector.broadcast %cst_160 : f32 to vector<8x128xf32>
    %447 = arith.addf %446, %445 : vector<8x128xf32>
    %448 = arith.divf %446, %447 : vector<8x128xf32>
    %449 = vector.extract_strided_slice %436 {offsets = [0, 256], sizes = [8, 128], strides = [1, 1]} : vector<8x512xf32> to vector<8x128xf32>
    %450 = math.tanh %449 : vector<8x128xf32>
    %451 = vector.extract_strided_slice %436 {offsets = [0, 384], sizes = [8, 128], strides = [1, 1]} : vector<8x512xf32> to vector<8x128xf32>
    %452 = arith.negf %451 : vector<8x128xf32>
    %453 = math.exp %452 : vector<8x128xf32>
    %cst_161 = arith.constant 1.000000e+00 : f32
    %454 = vector.broadcast %cst_161 : f32 to vector<8x128xf32>
    %455 = arith.addf %454, %453 : vector<8x128xf32>
    %456 = arith.divf %454, %455 : vector<8x128xf32>
    %457 = arith.mulf %448, %426 : vector<8x128xf32>
    %458 = arith.mulf %442, %450 : vector<8x128xf32>
    %459 = arith.addf %457, %458 : vector<8x128xf32>
    %460 = math.tanh %459 : vector<8x128xf32>
    %461 = arith.mulf %456, %460 : vector<8x128xf32>
    %c4_162 = arith.constant 4 : index
    %c0_163 = arith.constant 0 : index
    %c0_164 = arith.constant 0 : index
    %462 = vector.load %arg16[%c4_162, %c0_163, %c0_164] : memref<8x8x128xf32, #tpu.memory_space<vmem>>, vector<1x8x128xf32>
    %463 = vector.shape_cast %462 : vector<1x8x128xf32> to vector<8x128xf32>
    %464 = vector.shape_cast %461 : vector<8x128xf32> to vector<1x8x128xf32>
    tpu.vector_store %arg16[%c4_162, %c0_163, %c0_164], %464 {strides = array<i32>} : memref<8x8x128xf32, #tpu.memory_space<vmem>>, vector<1x8x128xf32>,
    %c5_165 = arith.constant 5 : index
    %c0_166 = arith.constant 0 : index
    %c0_167 = arith.constant 0 : index
    %465 = vector.load %arg15[%c5_165, %c0_166, %c0_167] : memref<8x8x512xf32, #tpu.memory_space<vmem>>, vector<1x8x512xf32>
    %466 = vector.shape_cast %465 : vector<1x8x512xf32> to vector<8x512xf32>
    %467 = arith.truncf %461 : vector<8x128xf32> to vector<8x128xbf16>
    %cst_168 = arith.constant dense<0.000000e+00> : vector<8x512xf32>
    %468 = tpu.matmul %467, %295, %cst_168 {dimension_numbers = #tpu.dot_dimension_numbers<[1], [0], [0], [1], [0, 0, 1, 1], [], []>} : vector<8x128xbf16>, vector<128x512xbf16>, vector<8x512xf32> -> vector<8x512xf32>
    %469 = arith.addf %466, %468 : vector<8x512xf32>
    %470 = vector.extract_strided_slice %469 {offsets = [0, 0], sizes = [8, 128], strides = [1, 1]} : vector<8x512xf32> to vector<8x128xf32>
    %471 = arith.negf %470 : vector<8x128xf32>
    %472 = math.exp %471 : vector<8x128xf32>
    %cst_169 = arith.constant 1.000000e+00 : f32
    %473 = vector.broadcast %cst_169 : f32 to vector<8x128xf32>
    %474 = arith.addf %473, %472 : vector<8x128xf32>
    %475 = arith.divf %473, %474 : vector<8x128xf32>
    %476 = vector.extract_strided_slice %469 {offsets = [0, 128], sizes = [8, 128], strides = [1, 1]} : vector<8x512xf32> to vector<8x128xf32>
    %477 = arith.negf %476 : vector<8x128xf32>
    %478 = math.exp %477 : vector<8x128xf32>
    %cst_170 = arith.constant 1.000000e+00 : f32
    %479 = vector.broadcast %cst_170 : f32 to vector<8x128xf32>
    %480 = arith.addf %479, %478 : vector<8x128xf32>
    %481 = arith.divf %479, %480 : vector<8x128xf32>
    %482 = vector.extract_strided_slice %469 {offsets = [0, 256], sizes = [8, 128], strides = [1, 1]} : vector<8x512xf32> to vector<8x128xf32>
    %483 = math.tanh %482 : vector<8x128xf32>
    %484 = vector.extract_strided_slice %469 {offsets = [0, 384], sizes = [8, 128], strides = [1, 1]} : vector<8x512xf32> to vector<8x128xf32>
    %485 = arith.negf %484 : vector<8x128xf32>
    %486 = math.exp %485 : vector<8x128xf32>
    %cst_171 = arith.constant 1.000000e+00 : f32
    %487 = vector.broadcast %cst_171 : f32 to vector<8x128xf32>
    %488 = arith.addf %487, %486 : vector<8x128xf32>
    %489 = arith.divf %487, %488 : vector<8x128xf32>
    %490 = arith.mulf %481, %459 : vector<8x128xf32>
    %491 = arith.mulf %475, %483 : vector<8x128xf32>
    %492 = arith.addf %490, %491 : vector<8x128xf32>
    %493 = math.tanh %492 : vector<8x128xf32>
    %494 = arith.mulf %489, %493 : vector<8x128xf32>
    %c5_172 = arith.constant 5 : index
    %c0_173 = arith.constant 0 : index
    %c0_174 = arith.constant 0 : index
    %495 = vector.load %arg16[%c5_172, %c0_173, %c0_174] : memref<8x8x128xf32, #tpu.memory_space<vmem>>, vector<1x8x128xf32>
    %496 = vector.shape_cast %495 : vector<1x8x128xf32> to vector<8x128xf32>
    %497 = vector.shape_cast %494 : vector<8x128xf32> to vector<1x8x128xf32>
    tpu.vector_store %arg16[%c5_172, %c0_173, %c0_174], %497 {strides = array<i32>} : memref<8x8x128xf32, #tpu.memory_space<vmem>>, vector<1x8x128xf32>,
    %c6_175 = arith.constant 6 : index
    %c0_176 = arith.constant 0 : index
    %c0_177 = arith.constant 0 : index
    %498 = vector.load %arg15[%c6_175, %c0_176, %c0_177] : memref<8x8x512xf32, #tpu.memory_space<vmem>>, vector<1x8x512xf32>
    %499 = vector.shape_cast %498 : vector<1x8x512xf32> to vector<8x512xf32>
    %500 = arith.truncf %494 : vector<8x128xf32> to vector<8x128xbf16>
    %cst_178 = arith.constant dense<0.000000e+00> : vector<8x512xf32>
    %501 = tpu.matmul %500, %295, %cst_178 {dimension_numbers = #tpu.dot_dimension_numbers<[1], [0], [0], [1], [0, 0, 1, 1], [], []>} : vector<8x128xbf16>, vector<128x512xbf16>, vector<8x512xf32> -> vector<8x512xf32>
    %502 = arith.addf %499, %501 : vector<8x512xf32>
    %503 = vector.extract_strided_slice %502 {offsets = [0, 0], sizes = [8, 128], strides = [1, 1]} : vector<8x512xf32> to vector<8x128xf32>
    %504 = arith.negf %503 : vector<8x128xf32>
    %505 = math.exp %504 : vector<8x128xf32>
    %cst_179 = arith.constant 1.000000e+00 : f32
    %506 = vector.broadcast %cst_179 : f32 to vector<8x128xf32>
    %507 = arith.addf %506, %505 : vector<8x128xf32>
    %508 = arith.divf %506, %507 : vector<8x128xf32>
    %509 = vector.extract_strided_slice %502 {offsets = [0, 128], sizes = [8, 128], strides = [1, 1]} : vector<8x512xf32> to vector<8x128xf32>
    %510 = arith.negf %509 : vector<8x128xf32>
    %511 = math.exp %510 : vector<8x128xf32>
    %cst_180 = arith.constant 1.000000e+00 : f32
    %512 = vector.broadcast %cst_180 : f32 to vector<8x128xf32>
    %513 = arith.addf %512, %511 : vector<8x128xf32>
    %514 = arith.divf %512, %513 : vector<8x128xf32>
    %515 = vector.extract_strided_slice %502 {offsets = [0, 256], sizes = [8, 128], strides = [1, 1]} : vector<8x512xf32> to vector<8x128xf32>
    %516 = math.tanh %515 : vector<8x128xf32>
    %517 = vector.extract_strided_slice %502 {offsets = [0, 384], sizes = [8, 128], strides = [1, 1]} : vector<8x512xf32> to vector<8x128xf32>
    %518 = arith.negf %517 : vector<8x128xf32>
    %519 = math.exp %518 : vector<8x128xf32>
    %cst_181 = arith.constant 1.000000e+00 : f32
    %520 = vector.broadcast %cst_181 : f32 to vector<8x128xf32>
    %521 = arith.addf %520, %519 : vector<8x128xf32>
    %522 = arith.divf %520, %521 : vector<8x128xf32>
    %523 = arith.mulf %514, %492 : vector<8x128xf32>
    %524 = arith.mulf %508, %516 : vector<8x128xf32>
    %525 = arith.addf %523, %524 : vector<8x128xf32>
    %526 = math.tanh %525 : vector<8x128xf32>
    %527 = arith.mulf %522, %526 : vector<8x128xf32>
    %c6_182 = arith.constant 6 : index
    %c0_183 = arith.constant 0 : index
    %c0_184 = arith.constant 0 : index
    %528 = vector.load %arg16[%c6_182, %c0_183, %c0_184] : memref<8x8x128xf32, #tpu.memory_space<vmem>>, vector<1x8x128xf32>
    %529 = vector.shape_cast %528 : vector<1x8x128xf32> to vector<8x128xf32>
    %530 = vector.shape_cast %527 : vector<8x128xf32> to vector<1x8x128xf32>
    tpu.vector_store %arg16[%c6_182, %c0_183, %c0_184], %530 {strides = array<i32>} : memref<8x8x128xf32, #tpu.memory_space<vmem>>, vector<1x8x128xf32>,
    %c7_185 = arith.constant 7 : index
    %c0_186 = arith.constant 0 : index
    %c0_187 = arith.constant 0 : index
    %531 = vector.load %arg15[%c7_185, %c0_186, %c0_187] : memref<8x8x512xf32, #tpu.memory_space<vmem>>, vector<1x8x512xf32>
    %532 = vector.shape_cast %531 : vector<1x8x512xf32> to vector<8x512xf32>
    %533 = arith.truncf %527 : vector<8x128xf32> to vector<8x128xbf16>
    %cst_188 = arith.constant dense<0.000000e+00> : vector<8x512xf32>
    %534 = tpu.matmul %533, %295, %cst_188 {dimension_numbers = #tpu.dot_dimension_numbers<[1], [0], [0], [1], [0, 0, 1, 1], [], []>} : vector<8x128xbf16>, vector<128x512xbf16>, vector<8x512xf32> -> vector<8x512xf32>
    %535 = arith.addf %532, %534 : vector<8x512xf32>
    %536 = vector.extract_strided_slice %535 {offsets = [0, 0], sizes = [8, 128], strides = [1, 1]} : vector<8x512xf32> to vector<8x128xf32>
    %537 = arith.negf %536 : vector<8x128xf32>
    %538 = math.exp %537 : vector<8x128xf32>
    %cst_189 = arith.constant 1.000000e+00 : f32
    %539 = vector.broadcast %cst_189 : f32 to vector<8x128xf32>
    %540 = arith.addf %539, %538 : vector<8x128xf32>
    %541 = arith.divf %539, %540 : vector<8x128xf32>
    %542 = vector.extract_strided_slice %535 {offsets = [0, 128], sizes = [8, 128], strides = [1, 1]} : vector<8x512xf32> to vector<8x128xf32>
    %543 = arith.negf %542 : vector<8x128xf32>
    %544 = math.exp %543 : vector<8x128xf32>
    %cst_190 = arith.constant 1.000000e+00 : f32
    %545 = vector.broadcast %cst_190 : f32 to vector<8x128xf32>
    %546 = arith.addf %545, %544 : vector<8x128xf32>
    %547 = arith.divf %545, %546 : vector<8x128xf32>
    %548 = vector.extract_strided_slice %535 {offsets = [0, 256], sizes = [8, 128], strides = [1, 1]} : vector<8x512xf32> to vector<8x128xf32>
    %549 = math.tanh %548 : vector<8x128xf32>
    %550 = vector.extract_strided_slice %535 {offsets = [0, 384], sizes = [8, 128], strides = [1, 1]} : vector<8x512xf32> to vector<8x128xf32>
    %551 = arith.negf %550 : vector<8x128xf32>
    %552 = math.exp %551 : vector<8x128xf32>
    %cst_191 = arith.constant 1.000000e+00 : f32
    %553 = vector.broadcast %cst_191 : f32 to vector<8x128xf32>
    %554 = arith.addf %553, %552 : vector<8x128xf32>
    %555 = arith.divf %553, %554 : vector<8x128xf32>
    %556 = arith.mulf %547, %525 : vector<8x128xf32>
    %557 = arith.mulf %541, %549 : vector<8x128xf32>
    %558 = arith.addf %556, %557 : vector<8x128xf32>
    %559 = math.tanh %558 : vector<8x128xf32>
    %560 = arith.mulf %555, %559 : vector<8x128xf32>
    %c7_192 = arith.constant 7 : index
    %c0_193 = arith.constant 0 : index
    %c0_194 = arith.constant 0 : index
    %561 = vector.load %arg16[%c7_192, %c0_193, %c0_194] : memref<8x8x128xf32, #tpu.memory_space<vmem>>, vector<1x8x128xf32>
    %562 = vector.shape_cast %561 : vector<1x8x128xf32> to vector<8x128xf32>
    %563 = vector.shape_cast %560 : vector<8x128xf32> to vector<1x8x128xf32>
    tpu.vector_store %arg16[%c7_192, %c0_193, %c0_194], %563 {strides = array<i32>} : memref<8x8x128xf32, #tpu.memory_space<vmem>>, vector<1x8x128xf32>,
    %c1_195 = arith.constant 1 : index
    %c0_196 = arith.constant 0 : index
    %c0_197 = arith.constant 0 : index
    %564 = vector.load %arg13[%c1_195, %c0_196, %c0_197] : memref<2x8x128xf32, #tpu.memory_space<vmem>>, vector<1x8x128xf32>
    %565 = vector.shape_cast %564 : vector<1x8x128xf32> to vector<8x128xf32>
    %566 = vector.shape_cast %560 : vector<8x128xf32> to vector<1x8x128xf32>
    tpu.vector_store %arg13[%c1_195, %c0_196, %c0_197], %566 {strides = array<i32>} : memref<2x8x128xf32, #tpu.memory_space<vmem>>, vector<1x8x128xf32>,
    %c1_198 = arith.constant 1 : index
    %c0_199 = arith.constant 0 : index
    %c0_200 = arith.constant 0 : index
    %567 = vector.load %arg14[%c1_198, %c0_199, %c0_200] : memref<2x8x128xf32, #tpu.memory_space<vmem>>, vector<1x8x128xf32>
    %568 = vector.shape_cast %567 : vector<1x8x128xf32> to vector<8x128xf32>
    %569 = vector.shape_cast %558 : vector<8x128xf32> to vector<1x8x128xf32>
    tpu.vector_store %arg14[%c1_198, %c0_199, %c0_200], %569 {strides = array<i32>} : memref<2x8x128xf32, #tpu.memory_space<vmem>>, vector<1x8x128xf32>,
    %c0_201 = arith.constant 0 : index
    %c0_202 = arith.constant 0 : index
    %c0_203 = arith.constant 0 : index
    %570 = vector.load %arg16[%c0_201, %c0_202, %c0_203] : memref<8x8x128xf32, #tpu.memory_space<vmem>>, vector<8x8x128xf32>
    %571 = vector.shape_cast %570 : vector<8x8x128xf32> to vector<64x128xf32>
    %572 = arith.truncf %571 : vector<64x128xf32> to vector<64x128xbf16>
    %c0_204 = arith.constant 0 : index
    %c0_205 = arith.constant 0 : index
    %573 = vector.load %arg10[%c0_204, %c0_205] : memref<128x128xbf16, #tpu.memory_space<vmem>>, vector<128x128xbf16>
    %cst_206 = arith.constant dense<0.000000e+00> : vector<64x128xf32>
    %574 = tpu.matmul %572, %573, %cst_206 {dimension_numbers = #tpu.dot_dimension_numbers<[1], [0], [0], [1], [0, 0, 1, 1], [], []>} : vector<64x128xbf16>, vector<128x128xbf16>, vector<64x128xf32> -> vector<64x128xf32>
    %c0_207 = arith.constant 0 : index
    %c0_208 = arith.constant 0 : index
    %575 = vector.load %arg11[%c0_207, %c0_208] : memref<1x128xf32, #tpu.memory_space<vmem>>, vector<1x128xf32>
    %576 = vector.broadcast %575 : vector<1x128xf32> to vector<64x128xf32>
    %577 = arith.addf %574, %576 : vector<64x128xf32>
    %578 = vector.shape_cast %577 : vector<64x128xf32> to vector<8x8x128xf32>
    %c0_209 = arith.constant 0 : index
    %c0_210 = arith.constant 0 : index
    %c0_211 = arith.constant 0 : index
    %579 = vector.load %arg12[%c0_209, %c0_210, %c0_211] : memref<8x8x128xf32, #tpu.memory_space<vmem>>, vector<8x8x128xf32>
    tpu.vector_store %arg12[%c0_209, %c0_210, %c0_211], %578 {strides = array<i32>} : memref<8x8x128xf32, #tpu.memory_space<vmem>>, vector<8x8x128xf32>,
    return
  }
  func.func @transform_0(%arg0: i32) -> (i32, i32, i32) {
    %c0_i32 = arith.constant 0 : i32
    %c0_i32_0 = arith.constant 0 : i32
    %c0_i32_1 = arith.constant 0 : i32
    return %c0_i32, %arg0, %c0_i32_0 : i32, i32, i32
  }
  func.func @transform_1(%arg0: i32) -> (i32, i32, i32) {
    %c0_i32 = arith.constant 0 : i32
    %c0_i32_0 = arith.constant 0 : i32
    %c0_i32_1 = arith.constant 0 : i32
    return %c0_i32, %arg0, %c0_i32_0 : i32, i32, i32
  }
  func.func @transform_2(%arg0: i32) -> (i32, i32, i32) {
    %c0_i32 = arith.constant 0 : i32
    %c0_i32_0 = arith.constant 0 : i32
    %c0_i32_1 = arith.constant 0 : i32
    return %c0_i32, %arg0, %c0_i32_0 : i32, i32, i32
  }
  func.func @transform_3(%arg0: i32) -> (i32, i32) {
    %c0_i32 = arith.constant 0 : i32
    %c0_i32_0 = arith.constant 0 : i32
    %c0_i32_1 = arith.constant 0 : i32
    return %c0_i32, %c0_i32_0 : i32, i32
  }
  func.func @transform_4(%arg0: i32) -> (i32, i32) {
    %c0_i32 = arith.constant 0 : i32
    %c0_i32_0 = arith.constant 0 : i32
    %c0_i32_1 = arith.constant 0 : i32
    return %c0_i32, %c0_i32_0 : i32, i32
  }
  func.func @transform_5(%arg0: i32) -> (i32, i32) {
    %c0_i32 = arith.constant 0 : i32
    %c0_i32_0 = arith.constant 0 : i32
    %c0_i32_1 = arith.constant 0 : i32
    return %c0_i32, %c0_i32_0 : i32, i32
  }
  func.func @transform_6(%arg0: i32) -> (i32, i32) {
    %c0_i32 = arith.constant 0 : i32
    %c0_i32_0 = arith.constant 0 : i32
    %c0_i32_1 = arith.constant 0 : i32
    return %c0_i32, %c0_i32_0 : i32, i32
  }
  func.func @transform_7(%arg0: i32) -> (i32, i32) {
    %c0_i32 = arith.constant 0 : i32
    %c0_i32_0 = arith.constant 0 : i32
    %c0_i32_1 = arith.constant 0 : i32
    return %c0_i32, %c0_i32_0 : i32, i32
  }
  func.func @transform_8(%arg0: i32) -> (i32, i32) {
    %c0_i32 = arith.constant 0 : i32
    %c0_i32_0 = arith.constant 0 : i32
    %c0_i32_1 = arith.constant 0 : i32
    return %c0_i32, %c0_i32_0 : i32, i32
  }
  func.func @transform_9(%arg0: i32) -> (i32, i32) {
    %c0_i32 = arith.constant 0 : i32
    %c0_i32_0 = arith.constant 0 : i32
    %c0_i32_1 = arith.constant 0 : i32
    return %c0_i32, %c0_i32_0 : i32, i32
  }
  func.func @transform_10(%arg0: i32) -> (i32, i32) {
    %c0_i32 = arith.constant 0 : i32
    %c0_i32_0 = arith.constant 0 : i32
    %c0_i32_1 = arith.constant 0 : i32
    return %c0_i32, %c0_i32_0 : i32, i32
  }
  func.func @transform_11(%arg0: i32) -> (i32, i32, i32) {
    %c0_i32 = arith.constant 0 : i32
    %c0_i32_0 = arith.constant 0 : i32
    %c0_i32_1 = arith.constant 0 : i32
    return %c0_i32, %arg0, %c0_i32_0 : i32, i32, i32
  }
  func.func @transform_12(%arg0: i32) -> (i32, i32, i32) {
    %c0_i32 = arith.constant 0 : i32
    %c0_i32_0 = arith.constant 0 : i32
    %c0_i32_1 = arith.constant 0 : i32
    return %c0_i32, %arg0, %c0_i32_0 : i32, i32, i32
  }
  func.func @transform_13(%arg0: i32) -> (i32, i32, i32) {
    %c0_i32 = arith.constant 0 : i32
    %c0_i32_0 = arith.constant 0 : i32
    %c0_i32_1 = arith.constant 0 : i32
    return %c0_i32, %arg0, %c0_i32_0 : i32, i32, i32
  }
}

</mosaic_0001>

<llo_original>
// kernel: tpu_custom_call.1
$region0: #{tpu_custom_call.1}
  #allocation0 [shape = 'u32[]', space=smem, size = 0x4, offset = 0x4, fixed_abs, tag = 'smem constant byte address 0x4 - core index']
  #allocation1 [shape = 'u32[144,128]{1,0:T(1,128)}', space=vmem, size = 0x12000, scoped, tag = 'internal scratch']
  #allocation2 [shape = 'f32[8,8,512]{2,1,0:T(8,128)}', space=vmem, size = 0x20000, scoped, tag = 'scratch operand']
  #allocation3 [shape = 'f32[8,8,128]{2,1,0:T(8,128)}', space=vmem, size = 0x8000, scoped, tag = 'scratch operand']
  %s0 = inlined_call_operand.hbm [shape: f32[8,8,128], index: 0, kind: input, shape index: {}]
  %s1 = inlined_call_operand.hbm [shape: f32[2,8,128], index: 1, kind: input, shape index: {}]
  %s2 = inlined_call_operand.hbm [shape: f32[2,8,128], index: 2, kind: input, shape index: {}]
  %s3 = inlined_call_operand.hbm [shape: bf16[128,512], index: 3, kind: input, shape index: {}]
  %s4 = inlined_call_operand.hbm [shape: bf16[128,512], index: 4, kind: input, shape index: {}]
  %s5 = inlined_call_operand.vmem [shape: f32[1,512], index: 5, kind: input, shape index: {}]
  %s6 = inlined_call_operand.hbm [shape: bf16[128,512], index: 6, kind: input, shape index: {}]
  %s7 = inlined_call_operand.hbm [shape: bf16[128,512], index: 7, kind: input, shape index: {}]
  %s8 = inlined_call_operand.vmem [shape: f32[1,512], index: 8, kind: input, shape index: {}]
  %s9 = inlined_call_operand.hbm [shape: bf16[128,128], index: 9, kind: input, shape index: {}]
  %s10 = inlined_call_operand.vmem [shape: f32[1,128], index: 10, kind: input, shape index: {}]
  %s11 = inlined_call_operand.hbm [shape: f32[8,8,128], index: 11, kind: output, shape index: {0}]
  %s12 = inlined_call_operand.hbm [shape: f32[2,8,128], index: 12, kind: output, shape index: {1}]
  %s13 = inlined_call_operand.hbm [shape: f32[2,8,128], index: 13, kind: output, shape index: {2}]
  %14 = xla_tuple %s11, %s12, %s13
  %s15 = sld [smem:[#allocation0]]
  $region102: #{tpu_custom_call.1} parent=0
    _
  %s17 = ssub.s32 1, %s15
  %s18 = scalar_select 0, %s17, %s15
  $region1: #{tpu_custom_call.1} parent=0
    #allocation4 [shape = 'u8[32768]{0}', space=vmem, size = 0x8000, scoped, tag = 'input window, operand 0, single buffered']
    #allocation5 [shape = 's32[1]{0}', space=sflag, size = 0x4, scoped, tag = 'scoped memory for tpu_custom_call.1']
    #allocation6 [shape = 's32[1]{0}', space=sflag, size = 0x4, scoped, tag = 'scoped memory for tpu_custom_call.1']
    #allocation7 [shape = 'u8[8192]{0}', space=vmem, size = 0x2000, scoped, tag = 'input window, operand 1, single buffered']
    #allocation8 [shape = 's32[1]{0}', space=sflag, size = 0x4, scoped, tag = 'scoped memory for tpu_custom_call.1']
    #allocation9 [shape = 'u8[8192]{0}', space=vmem, size = 0x2000, scoped, tag = 'input window, operand 2, single buffered']
    #allocation10 [shape = 'u8[131072]{0}', space=vmem, size = 0x20000, scoped, tag = 'input window, operand 3, single buffered']
    #allocation11 [shape = 's32[1]{0}', space=sflag, size = 0x4, scoped, tag = 'scoped memory for tpu_custom_call.1']
    #allocation12 [shape = 'u8[131072]{0}', space=vmem, size = 0x20000, scoped, tag = 'input window, operand 4, single buffered']
    #allocation13 [shape = 'u8[131072]{0}', space=vmem, size = 0x20000, scoped, tag = 'input window, operand 6, single buffered']
    #allocation14 [shape = 's32[1]{0}', space=sflag, size = 0x4, scoped, tag = 'scoped memory for tpu_custom_call.1']
    #allocation15 [shape = 'u8[131072]{0}', space=vmem, size = 0x20000, scoped, tag = 'input window, operand 7, single buffered']
    #allocation16 [shape = 'u8[32768]{0}', space=vmem, size = 0x8000, scoped, tag = 'input window, operand 9, single buffered']
    #allocation17 [shape = 's32[1]{0}', space=sflag, size = 0x4, scoped, tag = 'scoped memory for tpu_custom_call.1']
    #allocation18 [shape = 'u8[32768]{0}', space=vmem, size = 0x8000, scoped, tag = 'output window, operand 0, single buffered']
    #allocation19 [shape = 'u8[8192]{0}', space=vmem, size = 0x2000, scoped, tag = 'output window, operand 1, single buffered']
    #allocation20 [shape = 's32[1]{0}', space=sflag, size = 0x4, scoped, tag = 'scoped memory for tpu_custom_call.1']
    #allocation21 [shape = 'u8[8192]{0}', space=vmem, size = 0x2000, scoped, tag = 'output window, operand 2, single buffered']
    %19 = vsyncpa [#allocation5], 0
    %20 = vsyncpa [#allocation8], 0
    %21 = vsyncpa [#allocation11], 0
    %22 = vsyncpa [#allocation14], 0
    %23 = vsyncpa [#allocation17], 0
    %24 = vsyncpa [#allocation6], 0
    %25 = vsyncpa [#allocation20], 0
    // Predicated region
    $region2: #{tpu_custom_call.1} parent=1 // pred_check
      _
    $region3: #{tpu_custom_call.1} parent=1 // pred_check_branch
      %27 = sbr.rel (0) target = $region5
    $region4: #{tpu_custom_call.1} parent=1 // pred_region
      %s29 = ssub.s32 1024, 1024
      %30 = vsyncadd [#allocation5], %s29
      %s31 = sshll.u32 [#allocation4], 4
      %s32 = int_to_ptr.vmem [resolvable:$true] %s31
      %37 = dma.hbm_to_vmem [thread:$0]  %s0, 1024, %s32, [#allocation5], 128, 128, 8
    $region5: #{tpu_custom_call.1} parent=1 // pred_fallthru
      _
    // Predicated region
    $region6: #{tpu_custom_call.1} parent=1 // pred_check
      _
    $region7: #{tpu_custom_call.1} parent=1 // pred_check_branch
      %39 = sbr.rel (0) target = $region9
    $region8: #{tpu_custom_call.1} parent=1 // pred_region
      %s41 = ssub.s32 256, 256
      %42 = vsyncadd [#allocation8], %s41
      %s43 = sshll.u32 [#allocation7], 4
      %s44 = int_to_ptr.vmem [resolvable:$true] %s43
      %49 = dma.hbm_to_vmem [thread:$0]  %s1, 256, %s44, [#allocation8], 128, 128, 8
    $region9: #{tpu_custom_call.1} parent=1 // pred_fallthru
      _
    // Predicated region
    $region10: #{tpu_custom_call.1} parent=1 // pred_check
      _
    $region11: #{tpu_custom_call.1} parent=1 // pred_check_branch
      %51 = sbr.rel (0) target = $region13
    $region12: #{tpu_custom_call.1} parent=1 // pred_region
      %s53 = ssub.s32 256, 256
      %54 = vsyncadd [#allocation8], %s53
      %s55 = sshll.u32 [#allocation9], 4
      %s56 = int_to_ptr.vmem [resolvable:$true] %s55
      %61 = dma.hbm_to_vmem [thread:$0]  %s2, 256, %s56, [#allocation8], 128, 128, 8
    $region13: #{tpu_custom_call.1} parent=1 // pred_fallthru
      _
    // Predicated region
    $region14: #{tpu_custom_call.1} parent=1 // pred_check
      _
    $region15: #{tpu_custom_call.1} parent=1 // pred_check_branch
      %63 = sbr.rel (0) target = $region17
    $region16: #{tpu_custom_call.1} parent=1 // pred_region
      %s65 = ssub.s32 4096, 4096
      %66 = vsyncadd [#allocation11], %s65
      %s67 = sshll.u32 [#allocation10], 4
      %s68 = int_to_ptr.vmem [resolvable:$true] %s67
      %73 = dma.hbm_to_vmem [thread:$0]  %s3, 4096, %s68, [#allocation11], 256, 256, 16
    $region17: #{tpu_custom_call.1} parent=1 // pred_fallthru
      _
    // Predicated region
    $region18: #{tpu_custom_call.1} parent=1 // pred_check
      _
    $region19: #{tpu_custom_call.1} parent=1 // pred_check_branch
      %75 = sbr.rel (0) target = $region21
    $region20: #{tpu_custom_call.1} parent=1 // pred_region
      %s77 = ssub.s32 4096, 4096
      %78 = vsyncadd [#allocation11], %s77
      %s79 = sshll.u32 [#allocation12], 4
      %s80 = int_to_ptr.vmem [resolvable:$true] %s79
      %85 = dma.hbm_to_vmem [thread:$0]  %s4, 4096, %s80, [#allocation11], 256, 256, 16
    $region21: #{tpu_custom_call.1} parent=1 // pred_fallthru
      _
    // Predicated region
    $region22: #{tpu_custom_call.1} parent=1 // pred_check
      _
    $region23: #{tpu_custom_call.1} parent=1 // pred_check_branch
      %87 = sbr.rel (0) target = $region25
    $region24: #{tpu_custom_call.1} parent=1 // pred_region
      _
    $region25: #{tpu_custom_call.1} parent=1 // pred_fallthru
      _
    // Predicated region
    $region26: #{tpu_custom_call.1} parent=1 // pred_check
      _
    $region27: #{tpu_custom_call.1} parent=1 // pred_check_branch
      %89 = sbr.rel (0) target = $region29
    $region28: #{tpu_custom_call.1} parent=1 // pred_region
      %s91 = ssub.s32 4096, 4096
      %92 = vsyncadd [#allocation14], %s91
      %s93 = sshll.u32 [#allocation13], 4
      %s94 = int_to_ptr.vmem [resolvable:$true] %s93
      %99 = dma.hbm_to_vmem [thread:$0]  %s6, 4096, %s94, [#allocation14], 256, 256, 16
    $region29: #{tpu_custom_call.1} parent=1 // pred_fallthru
      _
    // Predicated region
    $region30: #{tpu_custom_call.1} parent=1 // pred_check
      _
    $region31: #{tpu_custom_call.1} parent=1 // pred_check_branch
      %101 = sbr.rel (0) target = $region33
    $region32: #{tpu_custom_call.1} parent=1 // pred_region
      %s103 = ssub.s32 4096, 4096
      %104 = vsyncadd [#allocation14], %s103
      %s105 = sshll.u32 [#allocation15], 4
      %s106 = int_to_ptr.vmem [resolvable:$true] %s105
      %111 = dma.hbm_to_vmem [thread:$0]  %s7, 4096, %s106, [#allocation14], 256, 256, 16
    $region33: #{tpu_custom_call.1} parent=1 // pred_fallthru
      _
    // Predicated region
    $region34: #{tpu_custom_call.1} parent=1 // pred_check
      _
    $region35: #{tpu_custom_call.1} parent=1 // pred_check_branch
      %113 = sbr.rel (0) target = $region37
    $region36: #{tpu_custom_call.1} parent=1 // pred_region
      _
    $region37: #{tpu_custom_call.1} parent=1 // pred_fallthru
      _
    // Predicated region
    $region38: #{tpu_custom_call.1} parent=1 // pred_check
      _
    $region39: #{tpu_custom_call.1} parent=1 // pred_check_branch
      %115 = sbr.rel (0) target = $region41
    $region40: #{tpu_custom_call.1} parent=1 // pred_region
      %s117 = ssub.s32 1024, 1024
      %118 = vsyncadd [#allocation17], %s117
      %s119 = sshll.u32 [#allocation16], 4
      %s120 = int_to_ptr.vmem [resolvable:$true] %s119
      %125 = dma.hbm_to_vmem [thread:$0]  %s9, 1024, %s120, [#allocation17], 64, 64, 4
    $region41: #{tpu_custom_call.1} parent=1 // pred_fallthru
      _
    // Predicated region
    $region42: #{tpu_custom_call.1} parent=1 // pred_check
      _
    $region43: #{tpu_custom_call.1} parent=1 // pred_check_branch
      %127 = sbr.rel (0) target = $region45
    $region44: #{tpu_custom_call.1} parent=1 // pred_region
      _
    $region45: #{tpu_custom_call.1} parent=1 // pred_fallthru
      _
    // Predicated region
    $region46: #{tpu_custom_call.1} parent=1 // pred_check
      _
    $region47: #{tpu_custom_call.1} parent=1 // pred_check_branch
      %129 = sbr.rel (0) target = $region49
    $region48: #{tpu_custom_call.1} parent=1 // pred_region
      %130 = dma.done [#allocation5], 1024
    $region49: #{tpu_custom_call.1} parent=1 // pred_fallthru
      _
    // Predicated region
    $region50: #{tpu_custom_call.1} parent=1 // pred_check
      _
    $region51: #{tpu_custom_call.1} parent=1 // pred_check_branch
      %132 = sbr.rel (0) target = $region53
    $region52: #{tpu_custom_call.1} parent=1 // pred_region
      %133 = dma.done [#allocation8], 256
    $region53: #{tpu_custom_call.1} parent=1 // pred_fallthru
      _
    // Predicated region
    $region54: #{tpu_custom_call.1} parent=1 // pred_check
      _
    $region55: #{tpu_custom_call.1} parent=1 // pred_check_branch
      %135 = sbr.rel (0) target = $region57
    $region56: #{tpu_custom_call.1} parent=1 // pred_region
      %136 = dma.done [#allocation8], 256
    $region57: #{tpu_custom_call.1} parent=1 // pred_fallthru
      _
    // Predicated region
    $region58: #{tpu_custom_call.1} parent=1 // pred_check
      _
    $region59: #{tpu_custom_call.1} parent=1 // pred_check_branch
      %138 = sbr.rel (0) target = $region61
    $region60: #{tpu_custom_call.1} parent=1 // pred_region
      %139 = dma.done [#allocation11], 4096
    $region61: #{tpu_custom_call.1} parent=1 // pred_fallthru
      _
    // Predicated region
    $region62: #{tpu_custom_call.1} parent=1 // pred_check
      _
    $region63: #{tpu_custom_call.1} parent=1 // pred_check_branch
      %141 = sbr.rel (0) target = $region65
    $region64: #{tpu_custom_call.1} parent=1 // pred_region
      %142 = dma.done [#allocation11], 4096
    $region65: #{tpu_custom_call.1} parent=1 // pred_fallthru
      _
    // Predicated region
    $region66: #{tpu_custom_call.1} parent=1 // pred_check
      _
    $region67: #{tpu_custom_call.1} parent=1 // pred_check_branch
      %144 = sbr.rel (0) target = $region69
    $region68: #{tpu_custom_call.1} parent=1 // pred_region
      %145 = dma.done [#allocation14], 4096
    $region69: #{tpu_custom_call.1} parent=1 // pred_fallthru
      _
    // Predicated region
    $region70: #{tpu_custom_call.1} parent=1 // pred_check
      _
    $region71: #{tpu_custom_call.1} parent=1 // pred_check_branch
      %147 = sbr.rel (0) target = $region73
    $region72: #{tpu_custom_call.1} parent=1 // pred_region
      %148 = dma.done [#allocation14], 4096
    $region73: #{tpu_custom_call.1} parent=1 // pred_fallthru
      _
    // Predicated region
    $region74: #{tpu_custom_call.1} parent=1 // pred_check
      _
    $region75: #{tpu_custom_call.1} parent=1 // pred_check_branch
      %150 = sbr.rel (0) target = $region77
    $region76: #{tpu_custom_call.1} parent=1 // pred_region
      %151 = dma.done [#allocation17], 1024
    $region77: #{tpu_custom_call.1} parent=1 // pred_fallthru
      _
    %v153 = vld [vmem:[#allocation4] sm:$0xff]
    %v154 = vld [vmem:[#allocation4 + $0x8] sm:$0xff]
    %v155 = vld [vmem:[#allocation4 + $0x10] sm:$0xff]
    %v156 = vld [vmem:[#allocation4 + $0x18] sm:$0xff]
    %v157 = vld [vmem:[#allocation4 + $0x20] sm:$0xff]
    %v158 = vld [vmem:[#allocation4 + $0x28] sm:$0xff]
    %v159 = vld [vmem:[#allocation4 + $0x30] sm:$0xff]
    %v160 = vld [vmem:[#allocation4 + $0x38] sm:$0xff]
    %v161 = vpack.c.bf16 %v154, %v153
    %v162 = vpack.c.bf16 %v156, %v155
    %v163 = vpack.c.bf16 %v158, %v157
    %v164 = vpack.c.bf16 %v160, %v159
    %v165 = vld [vmem:[#allocation10] sm:$0xff]
    %v166 = vld [vmem:[#allocation10 + $0x8] sm:$0xff]
    %v167 = vld [vmem:[#allocation10 + $0x10] sm:$0xff]
    %v168 = vld [vmem:[#allocation10 + $0x18] sm:$0xff]
    %v169 = vld [vmem:[#allocation10 + $0x20] sm:$0xff]
    %v170 = vld [vmem:[#allocation10 + $0x28] sm:$0xff]
    %v171 = vld [vmem:[#allocation10 + $0x30] sm:$0xff]
    %v172 = vld [vmem:[#allocation10 + $0x38] sm:$0xff]
    %v173 = vld [vmem:[#allocation10 + $0x40] sm:$0xff]
    %v174 = vld [vmem:[#allocation10 + $0x48] sm:$0xff]
    %v175 = vld [vmem:[#allocation10 + $0x50] sm:$0xff]
    %v176 = vld [vmem:[#allocation10 + $0x58] sm:$0xff]
    %v177 = vld [vmem:[#allocation10 + $0x60] sm:$0xff]
    %v178 = vld [vmem:[#allocation10 + $0x68] sm:$0xff]
    %v179 = vld [vmem:[#allocation10 + $0x70] sm:$0xff]
    %v180 = vld [vmem:[#allocation10 + $0x78] sm:$0xff]
    %v181 = vld [vmem:[#allocation10 + $0x80] sm:$0xff]
    %v182 = vld [vmem:[#allocation10 + $0x88] sm:$0xff]
    %v183 = vld [vmem:[#allocation10 + $0x90] sm:$0xff]
    %v184 = vld [vmem:[#allocation10 + $0x98] sm:$0xff]
    %v185 = vld [vmem:[#allocation10 + $0xa0] sm:$0xff]
    %v186 = vld [vmem:[#allocation10 + $0xa8] sm:$0xff]
    %v187 = vld [vmem:[#allocation10 + $0xb0] sm:$0xff]
    %v188 = vld [vmem:[#allocation10 + $0xb8] sm:$0xff]
    %v189 = vld [vmem:[#allocation10 + $0xc0] sm:$0xff]
    %v190 = vld [vmem:[#allocation10 + $0xc8] sm:$0xff]
    %v191 = vld [vmem:[#allocation10 + $0xd0] sm:$0xff]
    %v192 = vld [vmem:[#allocation10 + $0xd8] sm:$0xff]
    %v193 = vld [vmem:[#allocation10 + $0xe0] sm:$0xff]
    %v194 = vld [vmem:[#allocation10 + $0xe8] sm:$0xff]
    %v195 = vld [vmem:[#allocation10 + $0xf0] sm:$0xff]
    %v196 = vld [vmem:[#allocation10 + $0xf8] sm:$0xff]
    %v197 = vld [vmem:[%s5] sm:$0xf]
    %v199 = vlaneseq
    %v200 = vshrl.u32 %v199, 7
    %v201 = vsub.s32 0, %v200
    %v202 = vrot.slane %v197, %v201
    %v203 = vlaneseq
    %v204 = vshrl.u32 %v203, 7
    %v205 = vsub.s32 1, %v204
    %v206 = vrot.slane %v197, %v205
    %v207 = vlaneseq
    %v208 = vshrl.u32 %v207, 7
    %v209 = vsub.s32 2, %v208
    %v210 = vrot.slane %v197, %v209
    %v211 = vlaneseq
    %v212 = vshrl.u32 %v211, 7
    %v213 = vsub.s32 3, %v212
    %v214 = vrot.slane %v197, %v213
    %v251 = vunpack.c.l.b16 %v165
    %v252 = vunpack.c.h.b16 %v165
    %v253 = vunpack.c.l.b16 %v166
    %v254 = vunpack.c.h.b16 %v166
    %v255 = vunpack.c.l.b16 %v167
    %v256 = vunpack.c.h.b16 %v167
    %v257 = vunpack.c.l.b16 %v168
    %v258 = vunpack.c.h.b16 %v168
    %v259 = vunpack.c.l.b16 %v169
    %v260 = vunpack.c.h.b16 %v169
    %v261 = vunpack.c.l.b16 %v170
    %v262 = vunpack.c.h.b16 %v170
    %v263 = vunpack.c.l.b16 %v171
    %v264 = vunpack.c.h.b16 %v171
    %v265 = vunpack.c.l.b16 %v172
    %v266 = vunpack.c.h.b16 %v172
    %v267 = vunpack.c.l.b16 %v173
    %v268 = vunpack.c.h.b16 %v173
    %v269 = vunpack.c.l.b16 %v174
    %v270 = vunpack.c.h.b16 %v174
    %v271 = vunpack.c.l.b16 %v175
    %v272 = vunpack.c.h.b16 %v175
    %v273 = vunpack.c.l.b16 %v176
    %v274 = vunpack.c.h.b16 %v176
    %v275 = vunpack.c.l.b16 %v177
    %v276 = vunpack.c.h.b16 %v177
    %v277 = vunpack.c.l.b16 %v178
    %v278 = vunpack.c.h.b16 %v178
    %v279 = vunpack.c.l.b16 %v179
    %v280 = vunpack.c.h.b16 %v179
    %v281 = vunpack.c.l.b16 %v180
    %v282 = vunpack.c.h.b16 %v180
    %v283 = vunpack.c.l.b16 %v181
    %v284 = vunpack.c.h.b16 %v181
    %v285 = vunpack.c.l.b16 %v182
    %v286 = vunpack.c.h.b16 %v182
    %v287 = vunpack.c.l.b16 %v183
    %v288 = vunpack.c.h.b16 %v183
    %v289 = vunpack.c.l.b16 %v184
    %v290 = vunpack.c.h.b16 %v184
    %v291 = vunpack.c.l.b16 %v185
    %v292 = vunpack.c.h.b16 %v185
    %v293 = vunpack.c.l.b16 %v186
    %v294 = vunpack.c.h.b16 %v186
    %v295 = vunpack.c.l.b16 %v187
    %v296 = vunpack.c.h.b16 %v187
    %v297 = vunpack.c.l.b16 %v188
    %v298 = vunpack.c.h.b16 %v188
    %v299 = vunpack.c.l.b16 %v189
    %v300 = vunpack.c.h.b16 %v189
    %v301 = vunpack.c.l.b16 %v190
    %v302 = vunpack.c.h.b16 %v190
    %v303 = vunpack.c.l.b16 %v191
    %v304 = vunpack.c.h.b16 %v191
    %v305 = vunpack.c.l.b16 %v192
    %v306 = vunpack.c.h.b16 %v192
    %v307 = vunpack.c.l.b16 %v193
    %v308 = vunpack.c.h.b16 %v193
    %v309 = vunpack.c.l.b16 %v194
    %v310 = vunpack.c.h.b16 %v194
    %v311 = vunpack.c.l.b16 %v195
    %v312 = vunpack.c.h.b16 %v195
    %v313 = vunpack.c.l.b16 %v196
    %v314 = vunpack.c.h.b16 %v196
    %v315 = vpack.c.b16 %v255, %v251
    %v316 = vpack.c.b16 %v256, %v252
    %v317 = vpack.c.b16 %v257, %v253
    %v318 = vpack.c.b16 %v258, %v254
    %v319 = vpack.c.b16 %v263, %v259
    %v320 = vpack.c.b16 %v264, %v260
    %v321 = vpack.c.b16 %v265, %v261
    %v322 = vpack.c.b16 %v266, %v262
    %v323 = vpack.c.b16 %v271, %v267
    %v324 = vpack.c.b16 %v272, %v268
    %v325 = vpack.c.b16 %v273, %v269
    %v326 = vpack.c.b16 %v274, %v270
    %v327 = vpack.c.b16 %v279, %v275
    %v328 = vpack.c.b16 %v280, %v276
    %v329 = vpack.c.b16 %v281, %v277
    %v330 = vpack.c.b16 %v282, %v278
    %v331 = vpack.c.b16 %v287, %v283
    %v332 = vpack.c.b16 %v288, %v284
    %v333 = vpack.c.b16 %v289, %v285
    %v334 = vpack.c.b16 %v290, %v286
    %v335 = vpack.c.b16 %v295, %v291
    %v336 = vpack.c.b16 %v296, %v292
    %v337 = vpack.c.b16 %v297, %v293
    %v338 = vpack.c.b16 %v298, %v294
    %v339 = vpack.c.b16 %v303, %v299
    %v340 = vpack.c.b16 %v304, %v300
    %v341 = vpack.c.b16 %v305, %v301
    %v342 = vpack.c.b16 %v306, %v302
    %v343 = vpack.c.b16 %v311, %v307
    %v344 = vpack.c.b16 %v312, %v308
    %v345 = vpack.c.b16 %v313, %v309
    %v346 = vpack.c.b16 %v314, %v310
    %379 = vmatprep.subr.bf16.mxu0 %v316
    %380 = vmatpush1.bf16.msra.mxu0 %v315
    %381 = vmatprep.subr.bf16.mxu0 %v320
    %382 = vmatpush1.bf16.msra.mxu0 %v319
    %383 = vmatprep.subr.bf16.mxu0 %v324
    %384 = vmatpush1.bf16.msra.mxu0 %v323
    %385 = vmatprep.subr.bf16.mxu0 %v328
    %386 = vmatpush1.bf16.msra.mxu0 %v327
    %387 = vmatprep.subr.bf16.mxu0 %v332
    %388 = vmatpush1.bf16.msra.mxu0 %v331
    %389 = vmatprep.subr.bf16.mxu0 %v336
    %390 = vmatpush1.bf16.msra.mxu0 %v335
    %391 = vmatprep.subr.bf16.mxu0 %v340
    %392 = vmatpush1.bf16.msra.mxu0 %v339
    %393 = vmatprep.subr.bf16.mxu0 %v344
    %394 = vmatpush1.bf16.msra.mxu0 %v343
    %395 = vmatprep.subr.bf16.mxu0 0
    %396 = vmatpush1.bf16.msra.mxu0 0
    %397 = vmatprep.subr.bf16.mxu0 0
    %398 = vmatpush1.bf16.msra.mxu0 0
    %399 = vmatprep.subr.bf16.mxu0 0
    %400 = vmatpush1.bf16.msra.mxu0 0
    %401 = vmatprep.subr.bf16.mxu0 0
    %402 = vmatpush1.bf16.msra.mxu0 0
    %403 = vmatprep.subr.bf16.mxu0 0
    %404 = vmatpush1.bf16.msra.mxu0 0
    %405 = vmatprep.subr.bf16.mxu0 0
    %406 = vmatpush1.bf16.msra.mxu0 0
    %407 = vmatprep.subr.bf16.mxu0 0
    %408 = vmatpush1.bf16.msra.mxu0 0
    %409 = vmatprep.subr.bf16.mxu0 0
    %410 = vmatpush1.bf16.msra.mxu0 0
    %411 = vmatprep.mubr.bf16.mxu0 0
    %412 = vmatmul.mubr.bf16.gmra.mrb[0].mxu0 %v161
    %v413 = vpop.f32.mrb[0].mxu0
    %v414 = vadd.f32 %v202, %v413
    %v415 = vpop.f32.mrb[0].mxu0
    %v416 = vadd.f32 %v206, %v415
    %v417 = vpop.f32.mrb[0].mxu0
    %v418 = vadd.f32 %v202, %v417
    %v419 = vpop.f32.mrb[0].mxu0
    %v420 = vadd.f32 %v206, %v419
    %421 = vmatprep.mubr.bf16.mxu0 0
    %422 = vmatmul.mubr.bf16.gmra.mrb[0].mxu0 %v162
    %v423 = vpop.f32.mrb[0].mxu0
    %v424 = vadd.f32 %v202, %v423
    %v425 = vpop.f32.mrb[0].mxu0
    %v426 = vadd.f32 %v206, %v425
    %v427 = vpop.f32.mrb[0].mxu0
    %v428 = vadd.f32 %v202, %v427
    %v429 = vpop.f32.mrb[0].mxu0
    %v430 = vadd.f32 %v206, %v429
    %431 = vmatprep.mubr.bf16.mxu0 0
    %432 = vmatmul.mubr.bf16.gmra.mrb[0].mxu0 %v163
    %v433 = vpop.f32.mrb[0].mxu0
    %v434 = vadd.f32 %v202, %v433
    %v435 = vpop.f32.mrb[0].mxu0
    %v436 = vadd.f32 %v206, %v435
    %v437 = vpop.f32.mrb[0].mxu0
    %v438 = vadd.f32 %v202, %v437
    %v439 = vpop.f32.mrb[0].mxu0
    %v440 = vadd.f32 %v206, %v439
    %441 = vmatprep.mubr.bf16.mxu0 0
    %442 = vmatmul.mubr.bf16.gmra.mrb[0].mxu0 %v164
    %v443 = vpop.f32.mrb[0].mxu0
    %v444 = vadd.f32 %v202, %v443
    %v445 = vpop.f32.mrb[0].mxu0
    %v446 = vadd.f32 %v206, %v445
    %v447 = vpop.f32.mrb[0].mxu0
    %v448 = vadd.f32 %v202, %v447
    %v449 = vpop.f32.mrb[0].mxu0
    %v450 = vadd.f32 %v206, %v449
    %451 = vdwg.mxu0
    %452 = vmatprep.subr.bf16.mxu0 %v318
    %453 = vmatpush1.bf16.msra.mxu0 %v317
    %454 = vmatprep.subr.bf16.mxu0 %v322
    %455 = vmatpush1.bf16.msra.mxu0 %v321
    %456 = vmatprep.subr.bf16.mxu0 %v326
    %457 = vmatpush1.bf16.msra.mxu0 %v325
    %458 = vmatprep.subr.bf16.mxu0 %v330
    %459 = vmatpush1.bf16.msra.mxu0 %v329
    %460 = vmatprep.subr.bf16.mxu0 %v334
    %461 = vmatpush1.bf16.msra.mxu0 %v333
    %462 = vmatprep.subr.bf16.mxu0 %v338
    %463 = vmatpush1.bf16.msra.mxu0 %v337
    %464 = vmatprep.subr.bf16.mxu0 %v342
    %465 = vmatpush1.bf16.msra.mxu0 %v341
    %466 = vmatprep.subr.bf16.mxu0 %v346
    %467 = vmatpush1.bf16.msra.mxu0 %v345
    %468 = vmatprep.subr.bf16.mxu0 0
    %469 = vmatpush1.bf16.msra.mxu0 0
    %470 = vmatprep.subr.bf16.mxu0 0
    %471 = vmatpush1.bf16.msra.mxu0 0
    %472 = vmatprep.subr.bf16.mxu0 0
    %473 = vmatpush1.bf16.msra.mxu0 0
    %474 = vmatprep.subr.bf16.mxu0 0
    %475 = vmatpush1.bf16.msra.mxu0 0
    %476 = vmatprep.subr.bf16.mxu0 0
    %477 = vmatpush1.bf16.msra.mxu0 0
    %478 = vmatprep.subr.bf16.mxu0 0
    %479 = vmatpush1.bf16.msra.mxu0 0
    %480 = vmatprep.subr.bf16.mxu0 0
    %481 = vmatpush1.bf16.msra.mxu0 0
    %482 = vmatprep.subr.bf16.mxu0 0
    %483 = vmatpush1.bf16.msra.mxu0 0
    %484 = vmatprep.mubr.bf16.mxu0 0
    %485 = vmatmul.mubr.bf16.gmra.mrb[0].mxu0 %v161
    %v486 = vpop.f32.mrb[0].mxu0
    %v487 = vadd.f32 %v210, %v486
    %v488 = vpop.f32.mrb[0].mxu0
    %v489 = vadd.f32 %v214, %v488
    %v490 = vpop.f32.mrb[0].mxu0
    %v491 = vadd.f32 %v210, %v490
    %v492 = vpop.f32.mrb[0].mxu0
    %v493 = vadd.f32 %v214, %v492
    %494 = vmatprep.mubr.bf16.mxu0 0
    %495 = vmatmul.mubr.bf16.gmra.mrb[0].mxu0 %v162
    %v496 = vpop.f32.mrb[0].mxu0
    %v497 = vadd.f32 %v210, %v496
    %v498 = vpop.f32.mrb[0].mxu0
    %v499 = vadd.f32 %v214, %v498
    %v500 = vpop.f32.mrb[0].mxu0
    %v501 = vadd.f32 %v210, %v500
    %v502 = vpop.f32.mrb[0].mxu0
    %v503 = vadd.f32 %v214, %v502
    %504 = vmatprep.mubr.bf16.mxu0 0
    %505 = vmatmul.mubr.bf16.gmra.mrb[0].mxu0 %v163
    %v506 = vpop.f32.mrb[0].mxu0
    %v507 = vadd.f32 %v210, %v506
    %v508 = vpop.f32.mrb[0].mxu0
    %v509 = vadd.f32 %v214, %v508
    %v510 = vpop.f32.mrb[0].mxu0
    %v511 = vadd.f32 %v210, %v510
    %v512 = vpop.f32.mrb[0].mxu0
    %v513 = vadd.f32 %v214, %v512
    %514 = vmatprep.mubr.bf16.mxu0 0
    %515 = vmatmul.mubr.bf16.gmra.mrb[0].mxu0 %v164
    %v516 = vpop.f32.mrb[0].mxu0
    %v517 = vadd.f32 %v210, %v516
    %v518 = vpop.f32.mrb[0].mxu0
    %v519 = vadd.f32 %v214, %v518
    %v520 = vpop.f32.mrb[0].mxu0
    %v521 = vadd.f32 %v210, %v520
    %v522 = vpop.f32.mrb[0].mxu0
    %v523 = vadd.f32 %v214, %v522
    %524 = vdwg.mxu0
    %525 = vst [vmem:[#allocation2] sm:$0xff] %v414
    %526 = vst [vmem:[#allocation2 + $0x8] sm:$0xff] %v416
    %527 = vst [vmem:[#allocation2 + $0x10] sm:$0xff] %v487
    %528 = vst [vmem:[#allocation2 + $0x18] sm:$0xff] %v489
    %529 = vst [vmem:[#allocation2 + $0x20] sm:$0xff] %v418
    %530 = vst [vmem:[#allocation2 + $0x28] sm:$0xff] %v420
    %531 = vst [vmem:[#allocation2 + $0x30] sm:$0xff] %v491
    %532 = vst [vmem:[#allocation2 + $0x38] sm:$0xff] %v493
    %533 = vst [vmem:[#allocation2 + $0x40] sm:$0xff] %v424
    %534 = vst [vmem:[#allocation2 + $0x48] sm:$0xff] %v426
    %535 = vst [vmem:[#allocation2 + $0x50] sm:$0xff] %v497
    %536 = vst [vmem:[#allocation2 + $0x58] sm:$0xff] %v499
    %537 = vst [vmem:[#allocation2 + $0x60] sm:$0xff] %v428
    %538 = vst [vmem:[#allocation2 + $0x68] sm:$0xff] %v430
    %539 = vst [vmem:[#allocation2 + $0x70] sm:$0xff] %v501
    %540 = vst [vmem:[#allocation2 + $0x78] sm:$0xff] %v503
    %541 = vst [vmem:[#allocation2 + $0x80] sm:$0xff] %v434
    %542 = vst [vmem:[#allocation2 + $0x88] sm:$0xff] %v436
    %543 = vst [vmem:[#allocation2 + $0x90] sm:$0xff] %v507
    %544 = vst [vmem:[#allocation2 + $0x98] sm:$0xff] %v509
    %545 = vst [vmem:[#allocation2 + $0xa0] sm:$0xff] %v438
    %546 = vst [vmem:[#allocation2 + $0xa8] sm:$0xff] %v440
    %547 = vst [vmem:[#allocation2 + $0xb0] sm:$0xff] %v511
    %548 = vst [vmem:[#allocation2 + $0xb8] sm:$0xff] %v513
    %549 = vst [vmem:[#allocation2 + $0xc0] sm:$0xff] %v444
    %550 = vst [vmem:[#allocation2 + $0xc8] sm:$0xff] %v446
    %551 = vst [vmem:[#allocation2 + $0xd0] sm:$0xff] %v517
    %552 = vst [vmem:[#allocation2 + $0xd8] sm:$0xff] %v519
    %553 = vst [vmem:[#allocation2 + $0xe0] sm:$0xff] %v448
    %554 = vst [vmem:[#allocation2 + $0xe8] sm:$0xff] %v450
    %555 = vst [vmem:[#allocation2 + $0xf0] sm:$0xff] %v521
    %556 = vst [vmem:[#allocation2 + $0xf8] sm:$0xff] %v523
    %v557 = vld [vmem:[#allocation12] sm:$0xff]
    %v558 = vld [vmem:[#allocation12 + $0x8] sm:$0xff]
    %v559 = vld [vmem:[#allocation12 + $0x10] sm:$0xff]
    %v560 = vld [vmem:[#allocation12 + $0x18] sm:$0xff]
    %v561 = vld [vmem:[#allocation12 + $0x20] sm:$0xff]
    %v562 = vld [vmem:[#allocation12 + $0x28] sm:$0xff]
    %v563 = vld [vmem:[#allocation12 + $0x30] sm:$0xff]
    %v564 = vld [vmem:[#allocation12 + $0x38] sm:$0xff]
    %v565 = vld [vmem:[#allocation12 + $0x40] sm:$0xff]
    %v566 = vld [vmem:[#allocation12 + $0x48] sm:$0xff]
    %v567 = vld [vmem:[#allocation12 + $0x50] sm:$0xff]
    %v568 = vld [vmem:[#allocation12 + $0x58] sm:$0xff]
    %v569 = vld [vmem:[#allocation12 + $0x60] sm:$0xff]
    %v570 = vld [vmem:[#allocation12 + $0x68] sm:$0xff]
    %v571 = vld [vmem:[#allocation12 + $0x70] sm:$0xff]
    %v572 = vld [vmem:[#allocation12 + $0x78] sm:$0xff]
    %v573 = vld [vmem:[#allocation12 + $0x80] sm:$0xff]
    %v574 = vld [vmem:[#allocation12 + $0x88] sm:$0xff]
    %v575 = vld [vmem:[#allocation12 + $0x90] sm:$0xff]
    %v576 = vld [vmem:[#allocation12 + $0x98] sm:$0xff]
    %v577 = vld [vmem:[#allocation12 + $0xa0] sm:$0xff]
    %v578 = vld [vmem:[#allocation12 + $0xa8] sm:$0xff]
    %v579 = vld [vmem:[#allocation12 + $0xb0] sm:$0xff]
    %v580 = vld [vmem:[#allocation12 + $0xb8] sm:$0xff]
    %v581 = vld [vmem:[#allocation12 + $0xc0] sm:$0xff]
    %v582 = vld [vmem:[#allocation12 + $0xc8] sm:$0xff]
    %v583 = vld [vmem:[#allocation12 + $0xd0] sm:$0xff]
    %v584 = vld [vmem:[#allocation12 + $0xd8] sm:$0xff]
    %v585 = vld [vmem:[#allocation12 + $0xe0] sm:$0xff]
    %v586 = vld [vmem:[#allocation12 + $0xe8] sm:$0xff]
    %v587 = vld [vmem:[#allocation12 + $0xf0] sm:$0xff]
    %v588 = vld [vmem:[#allocation12 + $0xf8] sm:$0xff]
    %v589 = vld [vmem:[#allocation7] sm:$0xff]
    %v590 = vld [vmem:[#allocation9] sm:$0xff]
    %v591 = vld [vmem:[#allocation2] sm:$0xff]
    %v592 = vld [vmem:[#allocation2 + $0x8] sm:$0xff]
    %v593 = vld [vmem:[#allocation2 + $0x10] sm:$0xff]
    %v594 = vld [vmem:[#allocation2 + $0x18] sm:$0xff]
    %v595 = vpack.c.bf16 %v589, %v589
    %v628 = vunpack.c.l.b16 %v557
    %v629 = vunpack.c.h.b16 %v557
    %v630 = vunpack.c.l.b16 %v558
    %v631 = vunpack.c.h.b16 %v558
    %v632 = vunpack.c.l.b16 %v559
    %v633 = vunpack.c.h.b16 %v559
    %v634 = vunpack.c.l.b16 %v560
    %v635 = vunpack.c.h.b16 %v560
    %v636 = vunpack.c.l.b16 %v561
    %v637 = vunpack.c.h.b16 %v561
    %v638 = vunpack.c.l.b16 %v562
    %v639 = vunpack.c.h.b16 %v562
    %v640 = vunpack.c.l.b16 %v563
    %v641 = vunpack.c.h.b16 %v563
    %v642 = vunpack.c.l.b16 %v564
    %v643 = vunpack.c.h.b16 %v564
    %v644 = vunpack.c.l.b16 %v565
    %v645 = vunpack.c.h.b16 %v565
    %v646 = vunpack.c.l.b16 %v566
    %v647 = vunpack.c.h.b16 %v566
    %v648 = vunpack.c.l.b16 %v567
    %v649 = vunpack.c.h.b16 %v567
    %v650 = vunpack.c.l.b16 %v568
    %v651 = vunpack.c.h.b16 %v568
    %v652 = vunpack.c.l.b16 %v569
    %v653 = vunpack.c.h.b16 %v569
    %v654 = vunpack.c.l.b16 %v570
    %v655 = vunpack.c.h.b16 %v570
    %v656 = vunpack.c.l.b16 %v571
    %v657 = vunpack.c.h.b16 %v571
    %v658 = vunpack.c.l.b16 %v572
    %v659 = vunpack.c.h.b16 %v572
    %v660 = vunpack.c.l.b16 %v573
    %v661 = vunpack.c.h.b16 %v573
    %v662 = vunpack.c.l.b16 %v574
    %v663 = vunpack.c.h.b16 %v574
    %v664 = vunpack.c.l.b16 %v575
    %v665 = vunpack.c.h.b16 %v575
    %v666 = vunpack.c.l.b16 %v576
    %v667 = vunpack.c.h.b16 %v576
    %v668 = vunpack.c.l.b16 %v577
    %v669 = vunpack.c.h.b16 %v577
    %v670 = vunpack.c.l.b16 %v578
    %v671 = vunpack.c.h.b16 %v578
    %v672 = vunpack.c.l.b16 %v579
    %v673 = vunpack.c.h.b16 %v579
    %v674 = vunpack.c.l.b16 %v580
    %v675 = vunpack.c.h.b16 %v580
    %v676 = vunpack.c.l.b16 %v581
    %v677 = vunpack.c.h.b16 %v581
    %v678 = vunpack.c.l.b16 %v582
    %v679 = vunpack.c.h.b16 %v582
    %v680 = vunpack.c.l.b16 %v583
    %v681 = vunpack.c.h.b16 %v583
    %v682 = vunpack.c.l.b16 %v584
    %v683 = vunpack.c.h.b16 %v584
    %v684 = vunpack.c.l.b16 %v585
    %v685 = vunpack.c.h.b16 %v585
    %v686 = vunpack.c.l.b16 %v586
    %v687 = vunpack.c.h.b16 %v586
    %v688 = vunpack.c.l.b16 %v587
    %v689 = vunpack.c.h.b16 %v587
    %v690 = vunpack.c.l.b16 %v588
    %v691 = vunpack.c.h.b16 %v588
    %v692 = vpack.c.b16 %v632, %v628
    %v693 = vpack.c.b16 %v633, %v629
    %v694 = vpack.c.b16 %v634, %v630
    %v695 = vpack.c.b16 %v635, %v631
    %v696 = vpack.c.b16 %v640, %v636
    %v697 = vpack.c.b16 %v641, %v637
    %v698 = vpack.c.b16 %v642, %v638
    %v699 = vpack.c.b16 %v643, %v639
    %v700 = vpack.c.b16 %v648, %v644
    %v701 = vpack.c.b16 %v649, %v645
    %v702 = vpack.c.b16 %v650, %v646
    %v703 = vpack.c.b16 %v651, %v647
    %v704 = vpack.c.b16 %v656, %v652
    %v705 = vpack.c.b16 %v657, %v653
    %v706 = vpack.c.b16 %v658, %v654
    %v707 = vpack.c.b16 %v659, %v655
    %v708 = vpack.c.b16 %v664, %v660
    %v709 = vpack.c.b16 %v665, %v661
    %v710 = vpack.c.b16 %v666, %v662
    %v711 = vpack.c.b16 %v667, %v663
    %v712 = vpack.c.b16 %v672, %v668
    %v713 = vpack.c.b16 %v673, %v669
    %v714 = vpack.c.b16 %v674, %v670
    %v715 = vpack.c.b16 %v675, %v671
    %v716 = vpack.c.b16 %v680, %v676
    %v717 = vpack.c.b16 %v681, %v677
    %v718 = vpack.c.b16 %v682, %v678
    %v719 = vpack.c.b16 %v683, %v679
    %v720 = vpack.c.b16 %v688, %v684
    %v721 = vpack.c.b16 %v689, %v685
    %v722 = vpack.c.b16 %v690, %v686
    %v723 = vpack.c.b16 %v691, %v687
    %756 = vmatprep.subr.bf16.mxu0 %v693
    %757 = vmatpush1.bf16.msra.mxu0 %v692
    %758 = vmatprep.subr.bf16.mxu0 %v697
    %759 = vmatpush1.bf16.msra.mxu0 %v696
    %760 = vmatprep.subr.bf16.mxu0 %v701
    %761 = vmatpush1.bf16.msra.mxu0 %v700
    %762 = vmatprep.subr.bf16.mxu0 %v705
    %763 = vmatpush1.bf16.msra.mxu0 %v704
    %764 = vmatprep.subr.bf16.mxu0 %v709
    %765 = vmatpush1.bf16.msra.mxu0 %v708
    %766 = vmatprep.subr.bf16.mxu0 %v713
    %767 = vmatpush1.bf16.msra.mxu0 %v712
    %768 = vmatprep.subr.bf16.mxu0 %v717
    %769 = vmatpush1.bf16.msra.mxu0 %v716
    %770 = vmatprep.subr.bf16.mxu0 %v721
    %771 = vmatpush1.bf16.msra.mxu0 %v720
    %772 = vmatprep.subr.bf16.mxu0 0
    %773 = vmatpush1.bf16.msra.mxu0 0
    %774 = vmatprep.subr.bf16.mxu0 0
    %775 = vmatpush1.bf16.msra.mxu0 0
    %776 = vmatprep.subr.bf16.mxu0 0
    %777 = vmatpush1.bf16.msra.mxu0 0
    %778 = vmatprep.subr.bf16.mxu0 0
    %779 = vmatpush1.bf16.msra.mxu0 0
    %780 = vmatprep.subr.bf16.mxu0 0
    %781 = vmatpush1.bf16.msra.mxu0 0
    %782 = vmatprep.subr.bf16.mxu0 0
    %783 = vmatpush1.bf16.msra.mxu0 0
    %784 = vmatprep.subr.bf16.mxu0 0
    %785 = vmatpush1.bf16.msra.mxu0 0
    %786 = vmatprep.subr.bf16.mxu0 0
    %787 = vmatpush1.bf16.msra.mxu0 0
    %788 = vmatprep.mubr.bf16.mxu0 0
    %789 = vmatmul.mubr.bf16.gmra.mrb[0].mxu0 %v595
    %v790 = vpop.f32.mrb[0].mxu0
    %v791 = vadd.f32 0.0, %v790
    %v792 = vpop.f32.mrb[0].mxu0
    %v793 = vadd.f32 0.0, %v792
    %v794 = vpop.f32.mrb[0].mxu0
    %v795 = vpop.f32.mrb[0].mxu0
    %796 = vdwg.mxu0
    %797 = vmatprep.subr.bf16.mxu0 %v695
    %798 = vmatpush1.bf16.msra.mxu0 %v694
    %799 = vmatprep.subr.bf16.mxu0 %v699
    %800 = vmatpush1.bf16.msra.mxu0 %v698
    %801 = vmatprep.subr.bf16.mxu0 %v703
    %802 = vmatpush1.bf16.msra.mxu0 %v702
    %803 = vmatprep.subr.bf16.mxu0 %v707
    %804 = vmatpush1.bf16.msra.mxu0 %v706
    %805 = vmatprep.subr.bf16.mxu0 %v711
    %806 = vmatpush1.bf16.msra.mxu0 %v710
    %807 = vmatprep.subr.bf16.mxu0 %v715
    %808 = vmatpush1.bf16.msra.mxu0 %v714
    %809 = vmatprep.subr.bf16.mxu0 %v719
    %810 = vmatpush1.bf16.msra.mxu0 %v718
    %811 = vmatprep.subr.bf16.mxu0 %v723
    %812 = vmatpush1.bf16.msra.mxu0 %v722
    %813 = vmatprep.subr.bf16.mxu0 0
    %814 = vmatpush1.bf16.msra.mxu0 0
    %815 = vmatprep.subr.bf16.mxu0 0
    %816 = vmatpush1.bf16.msra.mxu0 0
    %817 = vmatprep.subr.bf16.mxu0 0
    %818 = vmatpush1.bf16.msra.mxu0 0
    %819 = vmatprep.subr.bf16.mxu0 0
    %820 = vmatpush1.bf16.msra.mxu0 0
    %821 = vmatprep.subr.bf16.mxu0 0
    %822 = vmatpush1.bf16.msra.mxu0 0
    %823 = vmatprep.subr.bf16.mxu0 0
    %824 = vmatpush1.bf16.msra.mxu0 0
    %825 = vmatprep.subr.bf16.mxu0 0
    %826 = vmatpush1.bf16.msra.mxu0 0
    %827 = vmatprep.subr.bf16.mxu0 0
    %828 = vmatpush1.bf16.msra.mxu0 0
    %829 = vmatprep.mubr.bf16.mxu0 0
    %830 = vmatmul.mubr.bf16.gmra.mrb[0].mxu0 %v595
    %v831 = vpop.f32.mrb[0].mxu0
    %v832 = vadd.f32 0.0, %v831
    %v833 = vpop.f32.mrb[0].mxu0
    %v834 = vadd.f32 0.0, %v833
    %v835 = vpop.f32.mrb[0].mxu0
    %v836 = vpop.f32.mrb[0].mxu0
    %837 = vdwg.mxu0
    %v838 = vadd.f32 %v591, %v791
    %v839 = vadd.f32 %v592, %v793
    %v840 = vadd.f32 %v593, %v832
    %v841 = vadd.f32 %v594, %v834
    %v842 = vxor.u32 %v838, 2147483648
    %v843 = vmul.f32 %v842, 1.442695
    %v844 = vpow.pop %v843
    %v845 = vadd.f32 %v844, 1.0
    %v846 = vrcp.pop %v845
    %v847 = vmul.f32 1.0, %v846
    %v848 = vxor.u32 %v839, 2147483648
    %v849 = vmul.f32 %v848, 1.442695
    %v850 = vpow.pop %v849
    %v851 = vadd.f32 %v850, 1.0
    %v852 = vrcp.pop %v851
    %v853 = vmul.f32 1.0, %v852
    %v854 = vtanh.pop %v840
    %v855 = vxor.u32 %v841, 2147483648
    %v856 = vmul.f32 %v855, 1.442695
    %v857 = vpow.pop %v856
    %v858 = vadd.f32 %v857, 1.0
    %v859 = vrcp.pop %v858
    %v860 = vmul.f32 1.0, %v859
    %v861 = vmul.f32 %v853, %v590
    %v862 = vmul.f32 %v847, %v854
    %v863 = vadd.f32 %v861, %v862
    %v864 = vtanh.pop %v863
    %v865 = vmul.f32 %v860, %v864
    %866 = vst [vmem:[#allocation3] sm:$0xff] %v865
    %s867 = scalar_lea.vmem [#allocation2], 32
    %v868 = vld [vmem:[%s867] sm:$0xff]
    %v869 = vld [vmem:[%s867 + $0x8] sm:$0xff]
    %v870 = vld [vmem:[%s867 + $0x10] sm:$0xff]
    %v871 = vld [vmem:[%s867 + $0x18] sm:$0xff]
    %v872 = vpack.c.bf16 %v865, %v865
    %873 = vmatprep.subr.bf16.mxu0 %v693
    %874 = vmatpush1.bf16.msra.mxu0 %v692
    %875 = vmatprep.subr.bf16.mxu0 %v697
    %876 = vmatpush1.bf16.msra.mxu0 %v696
    %877 = vmatprep.subr.bf16.mxu0 %v701
    %878 = vmatpush1.bf16.msra.mxu0 %v700
    %879 = vmatprep.subr.bf16.mxu0 %v705
    %880 = vmatpush1.bf16.msra.mxu0 %v704
    %881 = vmatprep.subr.bf16.mxu0 %v709
    %882 = vmatpush1.bf16.msra.mxu0 %v708
    %883 = vmatprep.subr.bf16.mxu0 %v713
    %884 = vmatpush1.bf16.msra.mxu0 %v712
    %885 = vmatprep.subr.bf16.mxu0 %v717
    %886 = vmatpush1.bf16.msra.mxu0 %v716
    %887 = vmatprep.subr.bf16.mxu0 %v721
    %888 = vmatpush1.bf16.msra.mxu0 %v720
    %889 = vmatprep.subr.bf16.mxu0 0
    %890 = vmatpush1.bf16.msra.mxu0 0
    %891 = vmatprep.subr.bf16.mxu0 0
    %892 = vmatpush1.bf16.msra.mxu0 0
    %893 = vmatprep.subr.bf16.mxu0 0
    %894 = vmatpush1.bf16.msra.mxu0 0
    %895 = vmatprep.subr.bf16.mxu0 0
    %896 = vmatpush1.bf16.msra.mxu0 0
    %897 = vmatprep.subr.bf16.mxu0 0
    %898 = vmatpush1.bf16.msra.mxu0 0
    %899 = vmatprep.subr.bf16.mxu0 0
    %900 = vmatpush1.bf16.msra.mxu0 0
    %901 = vmatprep.subr.bf16.mxu0 0
    %902 = vmatpush1.bf16.msra.mxu0 0
    %903 = vmatprep.subr.bf16.mxu0 0
    %904 = vmatpush1.bf16.msra.mxu0 0
    %905 = vmatprep.mubr.bf16.mxu0 0
    %906 = vmatmul.mubr.bf16.gmra.mrb[0].mxu0 %v872
    %v907 = vpop.f32.mrb[0].mxu0
    %v908 = vadd.f32 0.0, %v907
    %v909 = vpop.f32.mrb[0].mxu0
    %v910 = vadd.f32 0.0, %v909
    %v911 = vpop.f32.mrb[0].mxu0
    %v912 = vpop.f32.mrb[0].mxu0
    %913 = vdwg.mxu0
    %914 = vmatprep.subr.bf16.mxu0 %v695
    %915 = vmatpush1.bf16.msra.mxu0 %v694
    %916 = vmatprep.subr.bf16.mxu0 %v699
    %917 = vmatpush1.bf16.msra.mxu0 %v698
    %918 = vmatprep.subr.bf16.mxu0 %v703
    %919 = vmatpush1.bf16.msra.mxu0 %v702
    %920 = vmatprep.subr.bf16.mxu0 %v707
    %921 = vmatpush1.bf16.msra.mxu0 %v706
    %922 = vmatprep.subr.bf16.mxu0 %v711
    %923 = vmatpush1.bf16.msra.mxu0 %v710
    %924 = vmatprep.subr.bf16.mxu0 %v715
    %925 = vmatpush1.bf16.msra.mxu0 %v714
    %926 = vmatprep.subr.bf16.mxu0 %v719
    %927 = vmatpush1.bf16.msra.mxu0 %v718
    %928 = vmatprep.subr.bf16.mxu0 %v723
    %929 = vmatpush1.bf16.msra.mxu0 %v722
    %930 = vmatprep.subr.bf16.mxu0 0
    %931 = vmatpush1.bf16.msra.mxu0 0
    %932 = vmatprep.subr.bf16.mxu0 0
    %933 = vmatpush1.bf16.msra.mxu0 0
    %934 = vmatprep.subr.bf16.mxu0 0
    %935 = vmatpush1.bf16.msra.mxu0 0
    %936 = vmatprep.subr.bf16.mxu0 0
    %937 = vmatpush1.bf16.msra.mxu0 0
    %938 = vmatprep.subr.bf16.mxu0 0
    %939 = vmatpush1.bf16.msra.mxu0 0
    %940 = vmatprep.subr.bf16.mxu0 0
    %941 = vmatpush1.bf16.msra.mxu0 0
    %942 = vmatprep.subr.bf16.mxu0 0
    %943 = vmatpush1.bf16.msra.mxu0 0
    %944 = vmatprep.subr.bf16.mxu0 0
    %945 = vmatpush1.bf16.msra.mxu0 0
    %946 = vmatprep.mubr.bf16.mxu0 0
    %947 = vmatmul.mubr.bf16.gmra.mrb[0].mxu0 %v872
    %v948 = vpop.f32.mrb[0].mxu0
    %v949 = vadd.f32 0.0, %v948
    %v950 = vpop.f32.mrb[0].mxu0
    %v951 = vadd.f32 0.0, %v950
    %v952 = vpop.f32.mrb[0].mxu0
    %v953 = vpop.f32.mrb[0].mxu0
    %954 = vdwg.mxu0
    %v955 = vadd.f32 %v868, %v908
    %v956 = vadd.f32 %v869, %v910
    %v957 = vadd.f32 %v870, %v949
    %v958 = vadd.f32 %v871, %v951
    %v959 = vxor.u32 %v955, 2147483648
    %v960 = vmul.f32 %v959, 1.442695
    %v961 = vpow.pop %v960
    %v962 = vadd.f32 %v961, 1.0
    %v963 = vrcp.pop %v962
    %v964 = vmul.f32 1.0, %v963
    %v965 = vxor.u32 %v956, 2147483648
    %v966 = vmul.f32 %v965, 1.442695
    %v967 = vpow.pop %v966
    %v968 = vadd.f32 %v967, 1.0
    %v969 = vrcp.pop %v968
    %v970 = vmul.f32 1.0, %v969
    %v971 = vtanh.pop %v957
    %v972 = vxor.u32 %v958, 2147483648
    %v973 = vmul.f32 %v972, 1.442695
    %v974 = vpow.pop %v973
    %v975 = vadd.f32 %v974, 1.0
    %v976 = vrcp.pop %v975
    %v977 = vmul.f32 1.0, %v976
    %v978 = vmul.f32 %v970, %v863
    %v979 = vmul.f32 %v964, %v971
    %v980 = vadd.f32 %v978, %v979
    %v981 = vtanh.pop %v980
    %v982 = vmul.f32 %v977, %v981
    %s983 = scalar_lea.vmem [#allocation3], 8
    %984 = vst [vmem:[%s983] sm:$0xff] %v982
    %s985 = scalar_lea.vmem [#allocation2], 64
    %v986 = vld [vmem:[%s985] sm:$0xff]
    %v987 = vld [vmem:[%s985 + $0x8] sm:$0xff]
    %v988 = vld [vmem:[%s985 + $0x10] sm:$0xff]
    %v989 = vld [vmem:[%s985 + $0x18] sm:$0xff]
    %v990 = vpack.c.bf16 %v982, %v982
    %991 = vmatprep.subr.bf16.mxu0 %v693
    %992 = vmatpush1.bf16.msra.mxu0 %v692
    %993 = vmatprep.subr.bf16.mxu0 %v697
    %994 = vmatpush1.bf16.msra.mxu0 %v696
    %995 = vmatprep.subr.bf16.mxu0 %v701
    %996 = vmatpush1.bf16.msra.mxu0 %v700
    %997 = vmatprep.subr.bf16.mxu0 %v705
    %998 = vmatpush1.bf16.msra.mxu0 %v704
    %999 = vmatprep.subr.bf16.mxu0 %v709
    %1000 = vmatpush1.bf16.msra.mxu0 %v708
    %1001 = vmatprep.subr.bf16.mxu0 %v713
    %1002 = vmatpush1.bf16.msra.mxu0 %v712
    %1003 = vmatprep.subr.bf16.mxu0 %v717
    %1004 = vmatpush1.bf16.msra.mxu0 %v716
    %1005 = vmatprep.subr.bf16.mxu0 %v721
    %1006 = vmatpush1.bf16.msra.mxu0 %v720
    %1007 = vmatprep.subr.bf16.mxu0 0
    %1008 = vmatpush1.bf16.msra.mxu0 0
    %1009 = vmatprep.subr.bf16.mxu0 0
    %1010 = vmatpush1.bf16.msra.mxu0 0
    %1011 = vmatprep.subr.bf16.mxu0 0
    %1012 = vmatpush1.bf16.msra.mxu0 0
    %1013 = vmatprep.subr.bf16.mxu0 0
    %1014 = vmatpush1.bf16.msra.mxu0 0
    %1015 = vmatprep.subr.bf16.mxu0 0
    %1016 = vmatpush1.bf16.msra.mxu0 0
    %1017 = vmatprep.subr.bf16.mxu0 0
    %1018 = vmatpush1.bf16.msra.mxu0 0
    %1019 = vmatprep.subr.bf16.mxu0 0
    %1020 = vmatpush1.bf16.msra.mxu0 0
    %1021 = vmatprep.subr.bf16.mxu0 0
    %1022 = vmatpush1.bf16.msra.mxu0 0
    %1023 = vmatprep.mubr.bf16.mxu0 0
    %1024 = vmatmul.mubr.bf16.gmra.mrb[0].mxu0 %v990
    %v1025 = vpop.f32.mrb[0].mxu0
    %v1026 = vadd.f32 0.0, %v1025
    %v1027 = vpop.f32.mrb[0].mxu0
    %v1028 = vadd.f32 0.0, %v1027
    %v1029 = vpop.f32.mrb[0].mxu0
    %v1030 = vpop.f32.mrb[0].mxu0
    %1031 = vdwg.mxu0
    %1032 = vmatprep.subr.bf16.mxu0 %v695
    %1033 = vmatpush1.bf16.msra.mxu0 %v694
    %1034 = vmatprep.subr.bf16.mxu0 %v699
    %1035 = vmatpush1.bf16.msra.mxu0 %v698
    %1036 = vmatprep.subr.bf16.mxu0 %v703
    %1037 = vmatpush1.bf16.msra.mxu0 %v702
    %1038 = vmatprep.subr.bf16.mxu0 %v707
    %1039 = vmatpush1.bf16.msra.mxu0 %v706
    %1040 = vmatprep.subr.bf16.mxu0 %v711
    %1041 = vmatpush1.bf16.msra.mxu0 %v710
    %1042 = vmatprep.subr.bf16.mxu0 %v715
    %1043 = vmatpush1.bf16.msra.mxu0 %v714
    %1044 = vmatprep.subr.bf16.mxu0 %v719
    %1045 = vmatpush1.bf16.msra.mxu0 %v718
    %1046 = vmatprep.subr.bf16.mxu0 %v723
    %1047 = vmatpush1.bf16.msra.mxu0 %v722
    %1048 = vmatprep.subr.bf16.mxu0 0
    %1049 = vmatpush1.bf16.msra.mxu0 0
    %1050 = vmatprep.subr.bf16.mxu0 0
    %1051 = vmatpush1.bf16.msra.mxu0 0
    %1052 = vmatprep.subr.bf16.mxu0 0
    %1053 = vmatpush1.bf16.msra.mxu0 0
    %1054 = vmatprep.subr.bf16.mxu0 0
    %1055 = vmatpush1.bf16.msra.mxu0 0
    %1056 = vmatprep.subr.bf16.mxu0 0
    %1057 = vmatpush1.bf16.msra.mxu0 0
    %1058 = vmatprep.subr.bf16.mxu0 0
    %1059 = vmatpush1.bf16.msra.mxu0 0
    %1060 = vmatprep.subr.bf16.mxu0 0
    %1061 = vmatpush1.bf16.msra.mxu0 0
    %1062 = vmatprep.subr.bf16.mxu0 0
    %1063 = vmatpush1.bf16.msra.mxu0 0
    %1064 = vmatprep.mubr.bf16.mxu0 0
    %1065 = vmatmul.mubr.bf16.gmra.mrb[0].mxu0 %v990
    %v1066 = vpop.f32.mrb[0].mxu0
    %v1067 = vadd.f32 0.0, %v1066
    %v1068 = vpop.f32.mrb[0].mxu0
    %v1069 = vadd.f32 0.0, %v1068
    %v1070 = vpop.f32.mrb[0].mxu0
    %v1071 = vpop.f32.mrb[0].mxu0
    %1072 = vdwg.mxu0
    %v1073 = vadd.f32 %v986, %v1026
    %v1074 = vadd.f32 %v987, %v1028
    %v1075 = vadd.f32 %v988, %v1067
    %v1076 = vadd.f32 %v989, %v1069
    %v1077 = vxor.u32 %v1073, 2147483648
    %v1078 = vmul.f32 %v1077, 1.442695
    %v1079 = vpow.pop %v1078
    %v1080 = vadd.f32 %v1079, 1.0
    %v1081 = vrcp.pop %v1080
    %v1082 = vmul.f32 1.0, %v1081
    %v1083 = vxor.u32 %v1074, 2147483648
    %v1084 = vmul.f32 %v1083, 1.442695
    %v1085 = vpow.pop %v1084
    %v1086 = vadd.f32 %v1085, 1.0
    %v1087 = vrcp.pop %v1086
    %v1088 = vmul.f32 1.0, %v1087
    %v1089 = vtanh.pop %v1075
    %v1090 = vxor.u32 %v1076, 2147483648
    %v1091 = vmul.f32 %v1090, 1.442695
    %v1092 = vpow.pop %v1091
    %v1093 = vadd.f32 %v1092, 1.0
    %v1094 = vrcp.pop %v1093
    %v1095 = vmul.f32 1.0, %v1094
    %v1096 = vmul.f32 %v1088, %v980
    %v1097 = vmul.f32 %v1082, %v1089
    %v1098 = vadd.f32 %v1096, %v1097
    %v1099 = vtanh.pop %v1098
    %v1100 = vmul.f32 %v1095, %v1099
    %s1101 = scalar_lea.vmem [#allocation3], 16
    %1102 = vst [vmem:[%s1101] sm:$0xff] %v1100
    %s1103 = scalar_lea.vmem [#allocation2], 96
    %v1104 = vld [vmem:[%s1103] sm:$0xff]
    %v1105 = vld [vmem:[%s1103 + $0x8] sm:$0xff]
    %v1106 = vld [vmem:[%s1103 + $0x10] sm:$0xff]
    %v1107 = vld [vmem:[%s1103 + $0x18] sm:$0xff]
    %v1108 = vpack.c.bf16 %v1100, %v1100
    %1109 = vmatprep.subr.bf16.mxu0 %v693
    %1110 = vmatpush1.bf16.msra.mxu0 %v692
    %1111 = vmatprep.subr.bf16.mxu0 %v697
    %1112 = vmatpush1.bf16.msra.mxu0 %v696
    %1113 = vmatprep.subr.bf16.mxu0 %v701
    %1114 = vmatpush1.bf16.msra.mxu0 %v700
    %1115 = vmatprep.subr.bf16.mxu0 %v705
    %1116 = vmatpush1.bf16.msra.mxu0 %v704
    %1117 = vmatprep.subr.bf16.mxu0 %v709
    %1118 = vmatpush1.bf16.msra.mxu0 %v708
    %1119 = vmatprep.subr.bf16.mxu0 %v713
    %1120 = vmatpush1.bf16.msra.mxu0 %v712
    %1121 = vmatprep.subr.bf16.mxu0 %v717
    %1122 = vmatpush1.bf16.msra.mxu0 %v716
    %1123 = vmatprep.subr.bf16.mxu0 %v721
    %1124 = vmatpush1.bf16.msra.mxu0 %v720
    %1125 = vmatprep.subr.bf16.mxu0 0
    %1126 = vmatpush1.bf16.msra.mxu0 0
    %1127 = vmatprep.subr.bf16.mxu0 0
    %1128 = vmatpush1.bf16.msra.mxu0 0
    %1129 = vmatprep.subr.bf16.mxu0 0
    %1130 = vmatpush1.bf16.msra.mxu0 0
    %1131 = vmatprep.subr.bf16.mxu0 0
    %1132 = vmatpush1.bf16.msra.mxu0 0
    %1133 = vmatprep.subr.bf16.mxu0 0
    %1134 = vmatpush1.bf16.msra.mxu0 0
    %1135 = vmatprep.subr.bf16.mxu0 0
    %1136 = vmatpush1.bf16.msra.mxu0 0
    %1137 = vmatprep.subr.bf16.mxu0 0
    %1138 = vmatpush1.bf16.msra.mxu0 0
    %1139 = vmatprep.subr.bf16.mxu0 0
    %1140 = vmatpush1.bf16.msra.mxu0 0
    %1141 = vmatprep.mubr.bf16.mxu0 0
    %1142 = vmatmul.mubr.bf16.gmra.mrb[0].mxu0 %v1108
    %v1143 = vpop.f32.mrb[0].mxu0
    %v1144 = vadd.f32 0.0, %v1143
    %v1145 = vpop.f32.mrb[0].mxu0
    %v1146 = vadd.f32 0.0, %v1145
    %v1147 = vpop.f32.mrb[0].mxu0
    %v1148 = vpop.f32.mrb[0].mxu0
    %1149 = vdwg.mxu0
    %1150 = vmatprep.subr.bf16.mxu0 %v695
    %1151 = vmatpush1.bf16.msra.mxu0 %v694
    %1152 = vmatprep.subr.bf16.mxu0 %v699
    %1153 = vmatpush1.bf16.msra.mxu0 %v698
    %1154 = vmatprep.subr.bf16.mxu0 %v703
    %1155 = vmatpush1.bf16.msra.mxu0 %v702
    %1156 = vmatprep.subr.bf16.mxu0 %v707
    %1157 = vmatpush1.bf16.msra.mxu0 %v706
    %1158 = vmatprep.subr.bf16.mxu0 %v711
    %1159 = vmatpush1.bf16.msra.mxu0 %v710
    %1160 = vmatprep.subr.bf16.mxu0 %v715
    %1161 = vmatpush1.bf16.msra.mxu0 %v714
    %1162 = vmatprep.subr.bf16.mxu0 %v719
    %1163 = vmatpush1.bf16.msra.mxu0 %v718
    %1164 = vmatprep.subr.bf16.mxu0 %v723
    %1165 = vmatpush1.bf16.msra.mxu0 %v722
    %1166 = vmatprep.subr.bf16.mxu0 0
    %1167 = vmatpush1.bf16.msra.mxu0 0
    %1168 = vmatprep.subr.bf16.mxu0 0
    %1169 = vmatpush1.bf16.msra.mxu0 0
    %1170 = vmatprep.subr.bf16.mxu0 0
    %1171 = vmatpush1.bf16.msra.mxu0 0
    %1172 = vmatprep.subr.bf16.mxu0 0
    %1173 = vmatpush1.bf16.msra.mxu0 0
    %1174 = vmatprep.subr.bf16.mxu0 0
    %1175 = vmatpush1.bf16.msra.mxu0 0
    %1176 = vmatprep.subr.bf16.mxu0 0
    %1177 = vmatpush1.bf16.msra.mxu0 0
    %1178 = vmatprep.subr.bf16.mxu0 0
    %1179 = vmatpush1.bf16.msra.mxu0 0
    %1180 = vmatprep.subr.bf16.mxu0 0
    %1181 = vmatpush1.bf16.msra.mxu0 0
    %1182 = vmatprep.mubr.bf16.mxu0 0
    %1183 = vmatmul.mubr.bf16.gmra.mrb[0].mxu0 %v1108
    %v1184 = vpop.f32.mrb[0].mxu0
    %v1185 = vadd.f32 0.0, %v1184
    %v1186 = vpop.f32.mrb[0].mxu0
    %v1187 = vadd.f32 0.0, %v1186
    %v1188 = vpop.f32.mrb[0].mxu0
    %v1189 = vpop.f32.mrb[0].mxu0
    %1190 = vdwg.mxu0
    %v1191 = vadd.f32 %v1104, %v1144
    %v1192 = vadd.f32 %v1105, %v1146
    %v1193 = vadd.f32 %v1106, %v1185
    %v1194 = vadd.f32 %v1107, %v1187
    %v1195 = vxor.u32 %v1191, 2147483648
    %v1196 = vmul.f32 %v1195, 1.442695
    %v1197 = vpow.pop %v1196
    %v1198 = vadd.f32 %v1197, 1.0
    %v1199 = vrcp.pop %v1198
    %v1200 = vmul.f32 1.0, %v1199
    %v1201 = vxor.u32 %v1192, 2147483648
    %v1202 = vmul.f32 %v1201, 1.442695
    %v1203 = vpow.pop %v1202
    %v1204 = vadd.f32 %v1203, 1.0
    %v1205 = vrcp.pop %v1204
    %v1206 = vmul.f32 1.0, %v1205
    %v1207 = vtanh.pop %v1193
    %v1208 = vxor.u32 %v1194, 2147483648
    %v1209 = vmul.f32 %v1208, 1.442695
    %v1210 = vpow.pop %v1209
    %v1211 = vadd.f32 %v1210, 1.0
    %v1212 = vrcp.pop %v1211
    %v1213 = vmul.f32 1.0, %v1212
    %v1214 = vmul.f32 %v1206, %v1098
    %v1215 = vmul.f32 %v1200, %v1207
    %v1216 = vadd.f32 %v1214, %v1215
    %v1217 = vtanh.pop %v1216
    %v1218 = vmul.f32 %v1213, %v1217
    %s1219 = scalar_lea.vmem [#allocation3], 24
    %1220 = vst [vmem:[%s1219] sm:$0xff] %v1218
    %s1221 = scalar_lea.vmem [#allocation2], 128
    %v1222 = vld [vmem:[%s1221] sm:$0xff]
    %v1223 = vld [vmem:[%s1221 + $0x8] sm:$0xff]
    %v1224 = vld [vmem:[%s1221 + $0x10] sm:$0xff]
    %v1225 = vld [vmem:[%s1221 + $0x18] sm:$0xff]
    %v1226 = vpack.c.bf16 %v1218, %v1218
    %1227 = vmatprep.subr.bf16.mxu0 %v693
    %1228 = vmatpush1.bf16.msra.mxu0 %v692
    %1229 = vmatprep.subr.bf16.mxu0 %v697
    %1230 = vmatpush1.bf16.msra.mxu0 %v696
    %1231 = vmatprep.subr.bf16.mxu0 %v701
    %1232 = vmatpush1.bf16.msra.mxu0 %v700
    %1233 = vmatprep.subr.bf16.mxu0 %v705
    %1234 = vmatpush1.bf16.msra.mxu0 %v704
    %1235 = vmatprep.subr.bf16.mxu0 %v709
    %1236 = vmatpush1.bf16.msra.mxu0 %v708
    %1237 = vmatprep.subr.bf16.mxu0 %v713
    %1238 = vmatpush1.bf16.msra.mxu0 %v712
    %1239 = vmatprep.subr.bf16.mxu0 %v717
    %1240 = vmatpush1.bf16.msra.mxu0 %v716
    %1241 = vmatprep.subr.bf16.mxu0 %v721
    %1242 = vmatpush1.bf16.msra.mxu0 %v720
    %1243 = vmatprep.subr.bf16.mxu0 0
    %1244 = vmatpush1.bf16.msra.mxu0 0
    %1245 = vmatprep.subr.bf16.mxu0 0
    %1246 = vmatpush1.bf16.msra.mxu0 0
    %1247 = vmatprep.subr.bf16.mxu0 0
    %1248 = vmatpush1.bf16.msra.mxu0 0
    %1249 = vmatprep.subr.bf16.mxu0 0
    %1250 = vmatpush1.bf16.msra.mxu0 0
    %1251 = vmatprep.subr.bf16.mxu0 0
    %1252 = vmatpush1.bf16.msra.mxu0 0
    %1253 = vmatprep.subr.bf16.mxu0 0
    %1254 = vmatpush1.bf16.msra.mxu0 0
    %1255 = vmatprep.subr.bf16.mxu0 0
    %1256 = vmatpush1.bf16.msra.mxu0 0
    %1257 = vmatprep.subr.bf16.mxu0 0
    %1258 = vmatpush1.bf16.msra.mxu0 0
    %1259 = vmatprep.mubr.bf16.mxu0 0
    %1260 = vmatmul.mubr.bf16.gmra.mrb[0].mxu0 %v1226
    %v1261 = vpop.f32.mrb[0].mxu0
    %v1262 = vadd.f32 0.0, %v1261
    %v1263 = vpop.f32.mrb[0].mxu0
    %v1264 = vadd.f32 0.0, %v1263
    %v1265 = vpop.f32.mrb[0].mxu0
    %v1266 = vpop.f32.mrb[0].mxu0
    %1267 = vdwg.mxu0
    %1268 = vmatprep.subr.bf16.mxu0 %v695
    %1269 = vmatpush1.bf16.msra.mxu0 %v694
    %1270 = vmatprep.subr.bf16.mxu0 %v699
    %1271 = vmatpush1.bf16.msra.mxu0 %v698
    %1272 = vmatprep.subr.bf16.mxu0 %v703
    %1273 = vmatpush1.bf16.msra.mxu0 %v702
    %1274 = vmatprep.subr.bf16.mxu0 %v707
    %1275 = vmatpush1.bf16.msra.mxu0 %v706
    %1276 = vmatprep.subr.bf16.mxu0 %v711
    %1277 = vmatpush1.bf16.msra.mxu0 %v710
    %1278 = vmatprep.subr.bf16.mxu0 %v715
    %1279 = vmatpush1.bf16.msra.mxu0 %v714
    %1280 = vmatprep.subr.bf16.mxu0 %v719
    %1281 = vmatpush1.bf16.msra.mxu0 %v718
    %1282 = vmatprep.subr.bf16.mxu0 %v723
    %1283 = vmatpush1.bf16.msra.mxu0 %v722
    %1284 = vmatprep.subr.bf16.mxu0 0
    %1285 = vmatpush1.bf16.msra.mxu0 0
    %1286 = vmatprep.subr.bf16.mxu0 0
    %1287 = vmatpush1.bf16.msra.mxu0 0
    %1288 = vmatprep.subr.bf16.mxu0 0
    %1289 = vmatpush1.bf16.msra.mxu0 0
    %1290 = vmatprep.subr.bf16.mxu0 0
    %1291 = vmatpush1.bf16.msra.mxu0 0
    %1292 = vmatprep.subr.bf16.mxu0 0
    %1293 = vmatpush1.bf16.msra.mxu0 0
    %1294 = vmatprep.subr.bf16.mxu0 0
    %1295 = vmatpush1.bf16.msra.mxu0 0
    %1296 = vmatprep.subr.bf16.mxu0 0
    %1297 = vmatpush1.bf16.msra.mxu0 0
    %1298 = vmatprep.subr.bf16.mxu0 0
    %1299 = vmatpush1.bf16.msra.mxu0 0
    %1300 = vmatprep.mubr.bf16.mxu0 0
    %1301 = vmatmul.mubr.bf16.gmra.mrb[0].mxu0 %v1226
    %v1302 = vpop.f32.mrb[0].mxu0
    %v1303 = vadd.f32 0.0, %v1302
    %v1304 = vpop.f32.mrb[0].mxu0
    %v1305 = vadd.f32 0.0, %v1304
    %v1306 = vpop.f32.mrb[0].mxu0
    %v1307 = vpop.f32.mrb[0].mxu0
    %1308 = vdwg.mxu0
    %v1309 = vadd.f32 %v1222, %v1262
    %v1310 = vadd.f32 %v1223, %v1264
    %v1311 = vadd.f32 %v1224, %v1303
    %v1312 = vadd.f32 %v1225, %v1305
    %v1313 = vxor.u32 %v1309, 2147483648
    %v1314 = vmul.f32 %v1313, 1.442695
    %v1315 = vpow.pop %v1314
    %v1316 = vadd.f32 %v1315, 1.0
    %v1317 = vrcp.pop %v1316
    %v1318 = vmul.f32 1.0, %v1317
    %v1319 = vxor.u32 %v1310, 2147483648
    %v1320 = vmul.f32 %v1319, 1.442695
    %v1321 = vpow.pop %v1320
    %v1322 = vadd.f32 %v1321, 1.0
    %v1323 = vrcp.pop %v1322
    %v1324 = vmul.f32 1.0, %v1323
    %v1325 = vtanh.pop %v1311
    %v1326 = vxor.u32 %v1312, 2147483648
    %v1327 = vmul.f32 %v1326, 1.442695
    %v1328 = vpow.pop %v1327
    %v1329 = vadd.f32 %v1328, 1.0
    %v1330 = vrcp.pop %v1329
    %v1331 = vmul.f32 1.0, %v1330
    %v1332 = vmul.f32 %v1324, %v1216
    %v1333 = vmul.f32 %v1318, %v1325
    %v1334 = vadd.f32 %v1332, %v1333
    %v1335 = vtanh.pop %v1334
    %v1336 = vmul.f32 %v1331, %v1335
    %s1337 = scalar_lea.vmem [#allocation3], 32
    %1338 = vst [vmem:[%s1337] sm:$0xff] %v1336
    %s1339 = scalar_lea.vmem [#allocation2], 160
    %v1340 = vld [vmem:[%s1339] sm:$0xff]
    %v1341 = vld [vmem:[%s1339 + $0x8] sm:$0xff]
    %v1342 = vld [vmem:[%s1339 + $0x10] sm:$0xff]
    %v1343 = vld [vmem:[%s1339 + $0x18] sm:$0xff]
    %v1344 = vpack.c.bf16 %v1336, %v1336
    %1345 = vmatprep.subr.bf16.mxu0 %v693
    %1346 = vmatpush1.bf16.msra.mxu0 %v692
    %1347 = vmatprep.subr.bf16.mxu0 %v697
    %1348 = vmatpush1.bf16.msra.mxu0 %v696
    %1349 = vmatprep.subr.bf16.mxu0 %v701
    %1350 = vmatpush1.bf16.msra.mxu0 %v700
    %1351 = vmatprep.subr.bf16.mxu0 %v705
    %1352 = vmatpush1.bf16.msra.mxu0 %v704
    %1353 = vmatprep.subr.bf16.mxu0 %v709
    %1354 = vmatpush1.bf16.msra.mxu0 %v708
    %1355 = vmatprep.subr.bf16.mxu0 %v713
    %1356 = vmatpush1.bf16.msra.mxu0 %v712
    %1357 = vmatprep.subr.bf16.mxu0 %v717
    %1358 = vmatpush1.bf16.msra.mxu0 %v716
    %1359 = vmatprep.subr.bf16.mxu0 %v721
    %1360 = vmatpush1.bf16.msra.mxu0 %v720
    %1361 = vmatprep.subr.bf16.mxu0 0
    %1362 = vmatpush1.bf16.msra.mxu0 0
    %1363 = vmatprep.subr.bf16.mxu0 0
    %1364 = vmatpush1.bf16.msra.mxu0 0
    %1365 = vmatprep.subr.bf16.mxu0 0
    %1366 = vmatpush1.bf16.msra.mxu0 0
    %1367 = vmatprep.subr.bf16.mxu0 0
    %1368 = vmatpush1.bf16.msra.mxu0 0
    %1369 = vmatprep.subr.bf16.mxu0 0
    %1370 = vmatpush1.bf16.msra.mxu0 0
    %1371 = vmatprep.subr.bf16.mxu0 0
    %1372 = vmatpush1.bf16.msra.mxu0 0
    %1373 = vmatprep.subr.bf16.mxu0 0
    %1374 = vmatpush1.bf16.msra.mxu0 0
    %1375 = vmatprep.subr.bf16.mxu0 0
    %1376 = vmatpush1.bf16.msra.mxu0 0
    %1377 = vmatprep.mubr.bf16.mxu0 0
    %1378 = vmatmul.mubr.bf16.gmra.mrb[0].mxu0 %v1344
    %v1379 = vpop.f32.mrb[0].mxu0
    %v1380 = vadd.f32 0.0, %v1379
    %v1381 = vpop.f32.mrb[0].mxu0
    %v1382 = vadd.f32 0.0, %v1381
    %v1383 = vpop.f32.mrb[0].mxu0
    %v1384 = vpop.f32.mrb[0].mxu0
    %1385 = vdwg.mxu0
    %1386 = vmatprep.subr.bf16.mxu0 %v695
    %1387 = vmatpush1.bf16.msra.mxu0 %v694
    %1388 = vmatprep.subr.bf16.mxu0 %v699
    %1389 = vmatpush1.bf16.msra.mxu0 %v698
    %1390 = vmatprep.subr.bf16.mxu0 %v703
    %1391 = vmatpush1.bf16.msra.mxu0 %v702
    %1392 = vmatprep.subr.bf16.mxu0 %v707
    %1393 = vmatpush1.bf16.msra.mxu0 %v706
    %1394 = vmatprep.subr.bf16.mxu0 %v711
    %1395 = vmatpush1.bf16.msra.mxu0 %v710
    %1396 = vmatprep.subr.bf16.mxu0 %v715
    %1397 = vmatpush1.bf16.msra.mxu0 %v714
    %1398 = vmatprep.subr.bf16.mxu0 %v719
    %1399 = vmatpush1.bf16.msra.mxu0 %v718
    %1400 = vmatprep.subr.bf16.mxu0 %v723
    %1401 = vmatpush1.bf16.msra.mxu0 %v722
    %1402 = vmatprep.subr.bf16.mxu0 0
    %1403 = vmatpush1.bf16.msra.mxu0 0
    %1404 = vmatprep.subr.bf16.mxu0 0
    %1405 = vmatpush1.bf16.msra.mxu0 0
    %1406 = vmatprep.subr.bf16.mxu0 0
    %1407 = vmatpush1.bf16.msra.mxu0 0
    %1408 = vmatprep.subr.bf16.mxu0 0
    %1409 = vmatpush1.bf16.msra.mxu0 0
    %1410 = vmatprep.subr.bf16.mxu0 0
    %1411 = vmatpush1.bf16.msra.mxu0 0
    %1412 = vmatprep.subr.bf16.mxu0 0
    %1413 = vmatpush1.bf16.msra.mxu0 0
    %1414 = vmatprep.subr.bf16.mxu0 0
    %1415 = vmatpush1.bf16.msra.mxu0 0
    %1416 = vmatprep.subr.bf16.mxu0 0
    %1417 = vmatpush1.bf16.msra.mxu0 0
    %1418 = vmatprep.mubr.bf16.mxu0 0
    %1419 = vmatmul.mubr.bf16.gmra.mrb[0].mxu0 %v1344
    %v1420 = vpop.f32.mrb[0].mxu0
    %v1421 = vadd.f32 0.0, %v1420
    %v1422 = vpop.f32.mrb[0].mxu0
    %v1423 = vadd.f32 0.0, %v1422
    %v1424 = vpop.f32.mrb[0].mxu0
    %v1425 = vpop.f32.mrb[0].mxu0
    %1426 = vdwg.mxu0
    %v1427 = vadd.f32 %v1340, %v1380
    %v1428 = vadd.f32 %v1341, %v1382
    %v1429 = vadd.f32 %v1342, %v1421
    %v1430 = vadd.f32 %v1343, %v1423
    %v1431 = vxor.u32 %v1427, 2147483648
    %v1432 = vmul.f32 %v1431, 1.442695
    %v1433 = vpow.pop %v1432
    %v1434 = vadd.f32 %v1433, 1.0
    %v1435 = vrcp.pop %v1434
    %v1436 = vmul.f32 1.0, %v1435
    %v1437 = vxor.u32 %v1428, 2147483648
    %v1438 = vmul.f32 %v1437, 1.442695
    %v1439 = vpow.pop %v1438
    %v1440 = vadd.f32 %v1439, 1.0
    %v1441 = vrcp.pop %v1440
    %v1442 = vmul.f32 1.0, %v1441
    %v1443 = vtanh.pop %v1429
    %v1444 = vxor.u32 %v1430, 2147483648
    %v1445 = vmul.f32 %v1444, 1.442695
    %v1446 = vpow.pop %v1445
    %v1447 = vadd.f32 %v1446, 1.0
    %v1448 = vrcp.pop %v1447
    %v1449 = vmul.f32 1.0, %v1448
    %v1450 = vmul.f32 %v1442, %v1334
    %v1451 = vmul.f32 %v1436, %v1443
    %v1452 = vadd.f32 %v1450, %v1451
    %v1453 = vtanh.pop %v1452
    %v1454 = vmul.f32 %v1449, %v1453
    %s1455 = scalar_lea.vmem [#allocation3], 40
    %1456 = vst [vmem:[%s1455] sm:$0xff] %v1454
    %s1457 = scalar_lea.vmem [#allocation2], 192
    %v1458 = vld [vmem:[%s1457] sm:$0xff]
    %v1459 = vld [vmem:[%s1457 + $0x8] sm:$0xff]
    %v1460 = vld [vmem:[%s1457 + $0x10] sm:$0xff]
    %v1461 = vld [vmem:[%s1457 + $0x18] sm:$0xff]
    %v1462 = vpack.c.bf16 %v1454, %v1454
    %1463 = vmatprep.subr.bf16.mxu0 %v693
    %1464 = vmatpush1.bf16.msra.mxu0 %v692
    %1465 = vmatprep.subr.bf16.mxu0 %v697
    %1466 = vmatpush1.bf16.msra.mxu0 %v696
    %1467 = vmatprep.subr.bf16.mxu0 %v701
    %1468 = vmatpush1.bf16.msra.mxu0 %v700
    %1469 = vmatprep.subr.bf16.mxu0 %v705
    %1470 = vmatpush1.bf16.msra.mxu0 %v704
    %1471 = vmatprep.subr.bf16.mxu0 %v709
    %1472 = vmatpush1.bf16.msra.mxu0 %v708
    %1473 = vmatprep.subr.bf16.mxu0 %v713
    %1474 = vmatpush1.bf16.msra.mxu0 %v712
    %1475 = vmatprep.subr.bf16.mxu0 %v717
    %1476 = vmatpush1.bf16.msra.mxu0 %v716
    %1477 = vmatprep.subr.bf16.mxu0 %v721
    %1478 = vmatpush1.bf16.msra.mxu0 %v720
    %1479 = vmatprep.subr.bf16.mxu0 0
    %1480 = vmatpush1.bf16.msra.mxu0 0
    %1481 = vmatprep.subr.bf16.mxu0 0
    %1482 = vmatpush1.bf16.msra.mxu0 0
    %1483 = vmatprep.subr.bf16.mxu0 0
    %1484 = vmatpush1.bf16.msra.mxu0 0
    %1485 = vmatprep.subr.bf16.mxu0 0
    %1486 = vmatpush1.bf16.msra.mxu0 0
    %1487 = vmatprep.subr.bf16.mxu0 0
    %1488 = vmatpush1.bf16.msra.mxu0 0
    %1489 = vmatprep.subr.bf16.mxu0 0
    %1490 = vmatpush1.bf16.msra.mxu0 0
    %1491 = vmatprep.subr.bf16.mxu0 0
    %1492 = vmatpush1.bf16.msra.mxu0 0
    %1493 = vmatprep.subr.bf16.mxu0 0
    %1494 = vmatpush1.bf16.msra.mxu0 0
    %1495 = vmatprep.mubr.bf16.mxu0 0
    %1496 = vmatmul.mubr.bf16.gmra.mrb[0].mxu0 %v1462
    %v1497 = vpop.f32.mrb[0].mxu0
    %v1498 = vadd.f32 0.0, %v1497
    %v1499 = vpop.f32.mrb[0].mxu0
    %v1500 = vadd.f32 0.0, %v1499
    %v1501 = vpop.f32.mrb[0].mxu0
    %v1502 = vpop.f32.mrb[0].mxu0
    %1503 = vdwg.mxu0
    %1504 = vmatprep.subr.bf16.mxu0 %v695
    %1505 = vmatpush1.bf16.msra.mxu0 %v694
    %1506 = vmatprep.subr.bf16.mxu0 %v699
    %1507 = vmatpush1.bf16.msra.mxu0 %v698
    %1508 = vmatprep.subr.bf16.mxu0 %v703
    %1509 = vmatpush1.bf16.msra.mxu0 %v702
    %1510 = vmatprep.subr.bf16.mxu0 %v707
    %1511 = vmatpush1.bf16.msra.mxu0 %v706
    %1512 = vmatprep.subr.bf16.mxu0 %v711
    %1513 = vmatpush1.bf16.msra.mxu0 %v710
    %1514 = vmatprep.subr.bf16.mxu0 %v715
    %1515 = vmatpush1.bf16.msra.mxu0 %v714
    %1516 = vmatprep.subr.bf16.mxu0 %v719
    %1517 = vmatpush1.bf16.msra.mxu0 %v718
    %1518 = vmatprep.subr.bf16.mxu0 %v723
    %1519 = vmatpush1.bf16.msra.mxu0 %v722
    %1520 = vmatprep.subr.bf16.mxu0 0
    %1521 = vmatpush1.bf16.msra.mxu0 0
    %1522 = vmatprep.subr.bf16.mxu0 0
    %1523 = vmatpush1.bf16.msra.mxu0 0
    %1524 = vmatprep.subr.bf16.mxu0 0
    %1525 = vmatpush1.bf16.msra.mxu0 0
    %1526 = vmatprep.subr.bf16.mxu0 0
    %1527 = vmatpush1.bf16.msra.mxu0 0
    %1528 = vmatprep.subr.bf16.mxu0 0
    %1529 = vmatpush1.bf16.msra.mxu0 0
    %1530 = vmatprep.subr.bf16.mxu0 0
    %1531 = vmatpush1.bf16.msra.mxu0 0
    %1532 = vmatprep.subr.bf16.mxu0 0
    %1533 = vmatpush1.bf16.msra.mxu0 0
    %1534 = vmatprep.subr.bf16.mxu0 0
    %1535 = vmatpush1.bf16.msra.mxu0 0
    %1536 = vmatprep.mubr.bf16.mxu0 0
    %1537 = vmatmul.mubr.bf16.gmra.mrb[0].mxu0 %v1462
    %v1538 = vpop.f32.mrb[0].mxu0
    %v1539 = vadd.f32 0.0, %v1538
    %v1540 = vpop.f32.mrb[0].mxu0
    %v1541 = vadd.f32 0.0, %v1540
    %v1542 = vpop.f32.mrb[0].mxu0
    %v1543 = vpop.f32.mrb[0].mxu0
    %1544 = vdwg.mxu0
    %v1545 = vadd.f32 %v1458, %v1498
    %v1546 = vadd.f32 %v1459, %v1500
    %v1547 = vadd.f32 %v1460, %v1539
    %v1548 = vadd.f32 %v1461, %v1541
    %v1549 = vxor.u32 %v1545, 2147483648
    %v1550 = vmul.f32 %v1549, 1.442695
    %v1551 = vpow.pop %v1550
    %v1552 = vadd.f32 %v1551, 1.0
    %v1553 = vrcp.pop %v1552
    %v1554 = vmul.f32 1.0, %v1553
    %v1555 = vxor.u32 %v1546, 2147483648
    %v1556 = vmul.f32 %v1555, 1.442695
    %v1557 = vpow.pop %v1556
    %v1558 = vadd.f32 %v1557, 1.0
    %v1559 = vrcp.pop %v1558
    %v1560 = vmul.f32 1.0, %v1559
    %v1561 = vtanh.pop %v1547
    %v1562 = vxor.u32 %v1548, 2147483648
    %v1563 = vmul.f32 %v1562, 1.442695
    %v1564 = vpow.pop %v1563
    %v1565 = vadd.f32 %v1564, 1.0
    %v1566 = vrcp.pop %v1565
    %v1567 = vmul.f32 1.0, %v1566
    %v1568 = vmul.f32 %v1560, %v1452
    %v1569 = vmul.f32 %v1554, %v1561
    %v1570 = vadd.f32 %v1568, %v1569
    %v1571 = vtanh.pop %v1570
    %v1572 = vmul.f32 %v1567, %v1571
    %s1573 = scalar_lea.vmem [#allocation3], 48
    %1574 = vst [vmem:[%s1573] sm:$0xff] %v1572
    %s1575 = scalar_lea.vmem [#allocation2], 224
    %v1576 = vld [vmem:[%s1575] sm:$0xff]
    %v1577 = vld [vmem:[%s1575 + $0x8] sm:$0xff]
    %v1578 = vld [vmem:[%s1575 + $0x10] sm:$0xff]
    %v1579 = vld [vmem:[%s1575 + $0x18] sm:$0xff]
    %v1580 = vpack.c.bf16 %v1572, %v1572
    %1581 = vmatprep.subr.bf16.mxu0 %v693
    %1582 = vmatpush1.bf16.msra.mxu0 %v692
    %1583 = vmatprep.subr.bf16.mxu0 %v697
    %1584 = vmatpush1.bf16.msra.mxu0 %v696
    %1585 = vmatprep.subr.bf16.mxu0 %v701
    %1586 = vmatpush1.bf16.msra.mxu0 %v700
    %1587 = vmatprep.subr.bf16.mxu0 %v705
    %1588 = vmatpush1.bf16.msra.mxu0 %v704
    %1589 = vmatprep.subr.bf16.mxu0 %v709
    %1590 = vmatpush1.bf16.msra.mxu0 %v708
    %1591 = vmatprep.subr.bf16.mxu0 %v713
    %1592 = vmatpush1.bf16.msra.mxu0 %v712
    %1593 = vmatprep.subr.bf16.mxu0 %v717
    %1594 = vmatpush1.bf16.msra.mxu0 %v716
    %1595 = vmatprep.subr.bf16.mxu0 %v721
    %1596 = vmatpush1.bf16.msra.mxu0 %v720
    %1597 = vmatprep.subr.bf16.mxu0 0
    %1598 = vmatpush1.bf16.msra.mxu0 0
    %1599 = vmatprep.subr.bf16.mxu0 0
    %1600 = vmatpush1.bf16.msra.mxu0 0
    %1601 = vmatprep.subr.bf16.mxu0 0
    %1602 = vmatpush1.bf16.msra.mxu0 0
    %1603 = vmatprep.subr.bf16.mxu0 0
    %1604 = vmatpush1.bf16.msra.mxu0 0
    %1605 = vmatprep.subr.bf16.mxu0 0
    %1606 = vmatpush1.bf16.msra.mxu0 0
    %1607 = vmatprep.subr.bf16.mxu0 0
    %1608 = vmatpush1.bf16.msra.mxu0 0
    %1609 = vmatprep.subr.bf16.mxu0 0
    %1610 = vmatpush1.bf16.msra.mxu0 0
    %1611 = vmatprep.subr.bf16.mxu0 0
    %1612 = vmatpush1.bf16.msra.mxu0 0
    %1613 = vmatprep.mubr.bf16.mxu0 0
    %1614 = vmatmul.mubr.bf16.gmra.mrb[0].mxu0 %v1580
    %v1615 = vpop.f32.mrb[0].mxu0
    %v1616 = vadd.f32 0.0, %v1615
    %v1617 = vpop.f32.mrb[0].mxu0
    %v1618 = vadd.f32 0.0, %v1617
    %v1619 = vpop.f32.mrb[0].mxu0
    %v1620 = vpop.f32.mrb[0].mxu0
    %1621 = vdwg.mxu0
    %1622 = vmatprep.subr.bf16.mxu0 %v695
    %1623 = vmatpush1.bf16.msra.mxu0 %v694
    %1624 = vmatprep.subr.bf16.mxu0 %v699
    %1625 = vmatpush1.bf16.msra.mxu0 %v698
    %1626 = vmatprep.subr.bf16.mxu0 %v703
    %1627 = vmatpush1.bf16.msra.mxu0 %v702
    %1628 = vmatprep.subr.bf16.mxu0 %v707
    %1629 = vmatpush1.bf16.msra.mxu0 %v706
    %1630 = vmatprep.subr.bf16.mxu0 %v711
    %1631 = vmatpush1.bf16.msra.mxu0 %v710
    %1632 = vmatprep.subr.bf16.mxu0 %v715
    %1633 = vmatpush1.bf16.msra.mxu0 %v714
    %1634 = vmatprep.subr.bf16.mxu0 %v719
    %1635 = vmatpush1.bf16.msra.mxu0 %v718
    %1636 = vmatprep.subr.bf16.mxu0 %v723
    %1637 = vmatpush1.bf16.msra.mxu0 %v722
    %1638 = vmatprep.subr.bf16.mxu0 0
    %1639 = vmatpush1.bf16.msra.mxu0 0
    %1640 = vmatprep.subr.bf16.mxu0 0
    %1641 = vmatpush1.bf16.msra.mxu0 0
    %1642 = vmatprep.subr.bf16.mxu0 0
    %1643 = vmatpush1.bf16.msra.mxu0 0
    %1644 = vmatprep.subr.bf16.mxu0 0
    %1645 = vmatpush1.bf16.msra.mxu0 0
    %1646 = vmatprep.subr.bf16.mxu0 0
    %1647 = vmatpush1.bf16.msra.mxu0 0
    %1648 = vmatprep.subr.bf16.mxu0 0
    %1649 = vmatpush1.bf16.msra.mxu0 0
    %1650 = vmatprep.subr.bf16.mxu0 0
    %1651 = vmatpush1.bf16.msra.mxu0 0
    %1652 = vmatprep.subr.bf16.mxu0 0
    %1653 = vmatpush1.bf16.msra.mxu0 0
    %1654 = vmatprep.mubr.bf16.mxu0 0
    %1655 = vmatmul.mubr.bf16.gmra.mrb[0].mxu0 %v1580
    %v1656 = vpop.f32.mrb[0].mxu0
    %v1657 = vadd.f32 0.0, %v1656
    %v1658 = vpop.f32.mrb[0].mxu0
    %v1659 = vadd.f32 0.0, %v1658
    %v1660 = vpop.f32.mrb[0].mxu0
    %v1661 = vpop.f32.mrb[0].mxu0
    %1662 = vdwg.mxu0
    %v1663 = vadd.f32 %v1576, %v1616
    %v1664 = vadd.f32 %v1577, %v1618
    %v1665 = vadd.f32 %v1578, %v1657
    %v1666 = vadd.f32 %v1579, %v1659
    %v1667 = vxor.u32 %v1663, 2147483648
    %v1668 = vmul.f32 %v1667, 1.442695
    %v1669 = vpow.pop %v1668
    %v1670 = vadd.f32 %v1669, 1.0
    %v1671 = vrcp.pop %v1670
    %v1672 = vmul.f32 1.0, %v1671
    %v1673 = vxor.u32 %v1664, 2147483648
    %v1674 = vmul.f32 %v1673, 1.442695
    %v1675 = vpow.pop %v1674
    %v1676 = vadd.f32 %v1675, 1.0
    %v1677 = vrcp.pop %v1676
    %v1678 = vmul.f32 1.0, %v1677
    %v1679 = vtanh.pop %v1665
    %v1680 = vxor.u32 %v1666, 2147483648
    %v1681 = vmul.f32 %v1680, 1.442695
    %v1682 = vpow.pop %v1681
    %v1683 = vadd.f32 %v1682, 1.0
    %v1684 = vrcp.pop %v1683
    %v1685 = vmul.f32 1.0, %v1684
    %v1686 = vmul.f32 %v1678, %v1570
    %v1687 = vmul.f32 %v1672, %v1679
    %v1688 = vadd.f32 %v1686, %v1687
    %v1689 = vtanh.pop %v1688
    %v1690 = vmul.f32 %v1685, %v1689
    %s1691 = scalar_lea.vmem [#allocation3], 56
    %1692 = vst [vmem:[%s1691] sm:$0xff] %v1690
    %1693 = vst [vmem:[#allocation19] sm:$0xff] %v1690
    %1694 = vst [vmem:[#allocation21] sm:$0xff] %v1688
    %v1695 = vld [vmem:[#allocation3] sm:$0xff]
    %v1696 = vld [vmem:[#allocation3 + $0x8] sm:$0xff]
    %v1697 = vld [vmem:[#allocation3 + $0x10] sm:$0xff]
    %v1698 = vld [vmem:[#allocation3 + $0x18] sm:$0xff]
    %v1699 = vld [vmem:[#allocation3 + $0x20] sm:$0xff]
    %v1700 = vld [vmem:[#allocation3 + $0x28] sm:$0xff]
    %v1701 = vld [vmem:[#allocation3 + $0x30] sm:$0xff]
    %v1702 = vld [vmem:[#allocation3 + $0x38] sm:$0xff]
    %v1703 = vpack.c.bf16 %v1696, %v1695
    %v1704 = vpack.c.bf16 %v1698, %v1697
    %v1705 = vpack.c.bf16 %v1700, %v1699
    %v1706 = vpack.c.bf16 %v1702, %v1701
    %v1707 = vld [vmem:[#allocation13] sm:$0xff]
    %v1708 = vld [vmem:[#allocation13 + $0x8] sm:$0xff]
    %v1709 = vld [vmem:[#allocation13 + $0x10] sm:$0xff]
    %v1710 = vld [vmem:[#allocation13 + $0x18] sm:$0xff]
    %v1711 = vld [vmem:[#allocation13 + $0x20] sm:$0xff]
    %v1712 = vld [vmem:[#allocation13 + $0x28] sm:$0xff]
    %v1713 = vld [vmem:[#allocation13 + $0x30] sm:$0xff]
    %v1714 = vld [vmem:[#allocation13 + $0x38] sm:$0xff]
    %v1715 = vld [vmem:[#allocation13 + $0x40] sm:$0xff]
    %v1716 = vld [vmem:[#allocation13 + $0x48] sm:$0xff]
    %v1717 = vld [vmem:[#allocation13 + $0x50] sm:$0xff]
    %v1718 = vld [vmem:[#allocation13 + $0x58] sm:$0xff]
    %v1719 = vld [vmem:[#allocation13 + $0x60] sm:$0xff]
    %v1720 = vld [vmem:[#allocation13 + $0x68] sm:$0xff]
    %v1721 = vld [vmem:[#allocation13 + $0x70] sm:$0xff]
    %v1722 = vld [vmem:[#allocation13 + $0x78] sm:$0xff]
    %v1723 = vld [vmem:[#allocation13 + $0x80] sm:$0xff]
    %v1724 = vld [vmem:[#allocation13 + $0x88] sm:$0xff]
    %v1725 = vld [vmem:[#allocation13 + $0x90] sm:$0xff]
    %v1726 = vld [vmem:[#allocation13 + $0x98] sm:$0xff]
    %v1727 = vld [vmem:[#allocation13 + $0xa0] sm:$0xff]
    %v1728 = vld [vmem:[#allocation13 + $0xa8] sm:$0xff]
    %v1729 = vld [vmem:[#allocation13 + $0xb0] sm:$0xff]
    %v1730 = vld [vmem:[#allocation13 + $0xb8] sm:$0xff]
    %v1731 = vld [vmem:[#allocation13 + $0xc0] sm:$0xff]
    %v1732 = vld [vmem:[#allocation13 + $0xc8] sm:$0xff]
    %v1733 = vld [vmem:[#allocation13 + $0xd0] sm:$0xff]
    %v1734 = vld [vmem:[#allocation13 + $0xd8] sm:$0xff]
    %v1735 = vld [vmem:[#allocation13 + $0xe0] sm:$0xff]
    %v1736 = vld [vmem:[#allocation13 + $0xe8] sm:$0xff]
    %v1737 = vld [vmem:[#allocation13 + $0xf0] sm:$0xff]
    %v1738 = vld [vmem:[#allocation13 + $0xf8] sm:$0xff]
    %v1739 = vld [vmem:[%s8] sm:$0xf]
    %v1741 = vlaneseq
    %v1742 = vshrl.u32 %v1741, 7
    %v1743 = vsub.s32 0, %v1742
    %v1744 = vrot.slane %v1739, %v1743
    %v1745 = vlaneseq
    %v1746 = vshrl.u32 %v1745, 7
    %v1747 = vsub.s32 1, %v1746
    %v1748 = vrot.slane %v1739, %v1747
    %v1749 = vlaneseq
    %v1750 = vshrl.u32 %v1749, 7
    %v1751 = vsub.s32 2, %v1750
    %v1752 = vrot.slane %v1739, %v1751
    %v1753 = vlaneseq
    %v1754 = vshrl.u32 %v1753, 7
    %v1755 = vsub.s32 3, %v1754
    %v1756 = vrot.slane %v1739, %v1755
    %v1793 = vunpack.c.l.b16 %v1707
    %v1794 = vunpack.c.h.b16 %v1707
    %v1795 = vunpack.c.l.b16 %v1708
    %v1796 = vunpack.c.h.b16 %v1708
    %v1797 = vunpack.c.l.b16 %v1709
    %v1798 = vunpack.c.h.b16 %v1709
    %v1799 = vunpack.c.l.b16 %v1710
    %v1800 = vunpack.c.h.b16 %v1710
    %v1801 = vunpack.c.l.b16 %v1711
    %v1802 = vunpack.c.h.b16 %v1711
    %v1803 = vunpack.c.l.b16 %v1712
    %v1804 = vunpack.c.h.b16 %v1712
    %v1805 = vunpack.c.l.b16 %v1713
    %v1806 = vunpack.c.h.b16 %v1713
    %v1807 = vunpack.c.l.b16 %v1714
    %v1808 = vunpack.c.h.b16 %v1714
    %v1809 = vunpack.c.l.b16 %v1715
    %v1810 = vunpack.c.h.b16 %v1715
    %v1811 = vunpack.c.l.b16 %v1716
    %v1812 = vunpack.c.h.b16 %v1716
    %v1813 = vunpack.c.l.b16 %v1717
    %v1814 = vunpack.c.h.b16 %v1717
    %v1815 = vunpack.c.l.b16 %v1718
    %v1816 = vunpack.c.h.b16 %v1718
    %v1817 = vunpack.c.l.b16 %v1719
    %v1818 = vunpack.c.h.b16 %v1719
    %v1819 = vunpack.c.l.b16 %v1720
    %v1820 = vunpack.c.h.b16 %v1720
    %v1821 = vunpack.c.l.b16 %v1721
    %v1822 = vunpack.c.h.b16 %v1721
    %v1823 = vunpack.c.l.b16 %v1722
    %v1824 = vunpack.c.h.b16 %v1722
    %v1825 = vunpack.c.l.b16 %v1723
    %v1826 = vunpack.c.h.b16 %v1723
    %v1827 = vunpack.c.l.b16 %v1724
    %v1828 = vunpack.c.h.b16 %v1724
    %v1829 = vunpack.c.l.b16 %v1725
    %v1830 = vunpack.c.h.b16 %v1725
    %v1831 = vunpack.c.l.b16 %v1726
    %v1832 = vunpack.c.h.b16 %v1726
    %v1833 = vunpack.c.l.b16 %v1727
    %v1834 = vunpack.c.h.b16 %v1727
    %v1835 = vunpack.c.l.b16 %v1728
    %v1836 = vunpack.c.h.b16 %v1728
    %v1837 = vunpack.c.l.b16 %v1729
    %v1838 = vunpack.c.h.b16 %v1729
    %v1839 = vunpack.c.l.b16 %v1730
    %v1840 = vunpack.c.h.b16 %v1730
    %v1841 = vunpack.c.l.b16 %v1731
    %v1842 = vunpack.c.h.b16 %v1731
    %v1843 = vunpack.c.l.b16 %v1732
    %v1844 = vunpack.c.h.b16 %v1732
    %v1845 = vunpack.c.l.b16 %v1733
    %v1846 = vunpack.c.h.b16 %v1733
    %v1847 = vunpack.c.l.b16 %v1734
    %v1848 = vunpack.c.h.b16 %v1734
    %v1849 = vunpack.c.l.b16 %v1735
    %v1850 = vunpack.c.h.b16 %v1735
    %v1851 = vunpack.c.l.b16 %v1736
    %v1852 = vunpack.c.h.b16 %v1736
    %v1853 = vunpack.c.l.b16 %v1737
    %v1854 = vunpack.c.h.b16 %v1737
    %v1855 = vunpack.c.l.b16 %v1738
    %v1856 = vunpack.c.h.b16 %v1738
    %v1857 = vpack.c.b16 %v1797, %v1793
    %v1858 = vpack.c.b16 %v1798, %v1794
    %v1859 = vpack.c.b16 %v1799, %v1795
    %v1860 = vpack.c.b16 %v1800, %v1796
    %v1861 = vpack.c.b16 %v1805, %v1801
    %v1862 = vpack.c.b16 %v1806, %v1802
    %v1863 = vpack.c.b16 %v1807, %v1803
    %v1864 = vpack.c.b16 %v1808, %v1804
    %v1865 = vpack.c.b16 %v1813, %v1809
    %v1866 = vpack.c.b16 %v1814, %v1810
    %v1867 = vpack.c.b16 %v1815, %v1811
    %v1868 = vpack.c.b16 %v1816, %v1812
    %v1869 = vpack.c.b16 %v1821, %v1817
    %v1870 = vpack.c.b16 %v1822, %v1818
    %v1871 = vpack.c.b16 %v1823, %v1819
    %v1872 = vpack.c.b16 %v1824, %v1820
    %v1873 = vpack.c.b16 %v1829, %v1825
    %v1874 = vpack.c.b16 %v1830, %v1826
    %v1875 = vpack.c.b16 %v1831, %v1827
    %v1876 = vpack.c.b16 %v1832, %v1828
    %v1877 = vpack.c.b16 %v1837, %v1833
    %v1878 = vpack.c.b16 %v1838, %v1834
    %v1879 = vpack.c.b16 %v1839, %v1835
    %v1880 = vpack.c.b16 %v1840, %v1836
    %v1881 = vpack.c.b16 %v1845, %v1841
    %v1882 = vpack.c.b16 %v1846, %v1842
    %v1883 = vpack.c.b16 %v1847, %v1843
    %v1884 = vpack.c.b16 %v1848, %v1844
    %v1885 = vpack.c.b16 %v1853, %v1849
    %v1886 = vpack.c.b16 %v1854, %v1850
    %v1887 = vpack.c.b16 %v1855, %v1851
    %v1888 = vpack.c.b16 %v1856, %v1852
    %1921 = vmatprep.subr.bf16.mxu0 %v1858
    %1922 = vmatpush1.bf16.msra.mxu0 %v1857
    %1923 = vmatprep.subr.bf16.mxu0 %v1862
    %1924 = vmatpush1.bf16.msra.mxu0 %v1861
    %1925 = vmatprep.subr.bf16.mxu0 %v1866
    %1926 = vmatpush1.bf16.msra.mxu0 %v1865
    %1927 = vmatprep.subr.bf16.mxu0 %v1870
    %1928 = vmatpush1.bf16.msra.mxu0 %v1869
    %1929 = vmatprep.subr.bf16.mxu0 %v1874
    %1930 = vmatpush1.bf16.msra.mxu0 %v1873
    %1931 = vmatprep.subr.bf16.mxu0 %v1878
    %1932 = vmatpush1.bf16.msra.mxu0 %v1877
    %1933 = vmatprep.subr.bf16.mxu0 %v1882
    %1934 = vmatpush1.bf16.msra.mxu0 %v1881
    %1935 = vmatprep.subr.bf16.mxu0 %v1886
    %1936 = vmatpush1.bf16.msra.mxu0 %v1885
    %1937 = vmatprep.subr.bf16.mxu0 0
    %1938 = vmatpush1.bf16.msra.mxu0 0
    %1939 = vmatprep.subr.bf16.mxu0 0
    %1940 = vmatpush1.bf16.msra.mxu0 0
    %1941 = vmatprep.subr.bf16.mxu0 0
    %1942 = vmatpush1.bf16.msra.mxu0 0
    %1943 = vmatprep.subr.bf16.mxu0 0
    %1944 = vmatpush1.bf16.msra.mxu0 0
    %1945 = vmatprep.subr.bf16.mxu0 0
    %1946 = vmatpush1.bf16.msra.mxu0 0
    %1947 = vmatprep.subr.bf16.mxu0 0
    %1948 = vmatpush1.bf16.msra.mxu0 0
    %1949 = vmatprep.subr.bf16.mxu0 0
    %1950 = vmatpush1.bf16.msra.mxu0 0
    %1951 = vmatprep.subr.bf16.mxu0 0
    %1952 = vmatpush1.bf16.msra.mxu0 0
    %1953 = vmatprep.mubr.bf16.mxu0 0
    %1954 = vmatmul.mubr.bf16.gmra.mrb[0].mxu0 %v1703
    %v1955 = vpop.f32.mrb[0].mxu0
    %v1956 = vadd.f32 %v1744, %v1955
    %v1957 = vpop.f32.mrb[0].mxu0
    %v1958 = vadd.f32 %v1748, %v1957
    %v1959 = vpop.f32.mrb[0].mxu0
    %v1960 = vadd.f32 %v1744, %v1959
    %v1961 = vpop.f32.mrb[0].mxu0
    %v1962 = vadd.f32 %v1748, %v1961
    %1963 = vmatprep.mubr.bf16.mxu0 0
    %1964 = vmatmul.mubr.bf16.gmra.mrb[0].mxu0 %v1704
    %v1965 = vpop.f32.mrb[0].mxu0
    %v1966 = vadd.f32 %v1744, %v1965
    %v1967 = vpop.f32.mrb[0].mxu0
    %v1968 = vadd.f32 %v1748, %v1967
    %v1969 = vpop.f32.mrb[0].mxu0
    %v1970 = vadd.f32 %v1744, %v1969
    %v1971 = vpop.f32.mrb[0].mxu0
    %v1972 = vadd.f32 %v1748, %v1971
    %1973 = vmatprep.mubr.bf16.mxu0 0
    %1974 = vmatmul.mubr.bf16.gmra.mrb[0].mxu0 %v1705
    %v1975 = vpop.f32.mrb[0].mxu0
    %v1976 = vadd.f32 %v1744, %v1975
    %v1977 = vpop.f32.mrb[0].mxu0
    %v1978 = vadd.f32 %v1748, %v1977
    %v1979 = vpop.f32.mrb[0].mxu0
    %v1980 = vadd.f32 %v1744, %v1979
    %v1981 = vpop.f32.mrb[0].mxu0
    %v1982 = vadd.f32 %v1748, %v1981
    %1983 = vmatprep.mubr.bf16.mxu0 0
    %1984 = vmatmul.mubr.bf16.gmra.mrb[0].mxu0 %v1706
    %v1985 = vpop.f32.mrb[0].mxu0
    %v1986 = vadd.f32 %v1744, %v1985
    %v1987 = vpop.f32.mrb[0].mxu0
    %v1988 = vadd.f32 %v1748, %v1987
    %v1989 = vpop.f32.mrb[0].mxu0
    %v1990 = vadd.f32 %v1744, %v1989
    %v1991 = vpop.f32.mrb[0].mxu0
    %v1992 = vadd.f32 %v1748, %v1991
    %1993 = vdwg.mxu0
    %1994 = vmatprep.subr.bf16.mxu0 %v1860
    %1995 = vmatpush1.bf16.msra.mxu0 %v1859
    %1996 = vmatprep.subr.bf16.mxu0 %v1864
    %1997 = vmatpush1.bf16.msra.mxu0 %v1863
    %1998 = vmatprep.subr.bf16.mxu0 %v1868
    %1999 = vmatpush1.bf16.msra.mxu0 %v1867
    %2000 = vmatprep.subr.bf16.mxu0 %v1872
    %2001 = vmatpush1.bf16.msra.mxu0 %v1871
    %2002 = vmatprep.subr.bf16.mxu0 %v1876
    %2003 = vmatpush1.bf16.msra.mxu0 %v1875
    %2004 = vmatprep.subr.bf16.mxu0 %v1880
    %2005 = vmatpush1.bf16.msra.mxu0 %v1879
    %2006 = vmatprep.subr.bf16.mxu0 %v1884
    %2007 = vmatpush1.bf16.msra.mxu0 %v1883
    %2008 = vmatprep.subr.bf16.mxu0 %v1888
    %2009 = vmatpush1.bf16.msra.mxu0 %v1887
    %2010 = vmatprep.subr.bf16.mxu0 0
    %2011 = vmatpush1.bf16.msra.mxu0 0
    %2012 = vmatprep.subr.bf16.mxu0 0
    %2013 = vmatpush1.bf16.msra.mxu0 0
    %2014 = vmatprep.subr.bf16.mxu0 0
    %2015 = vmatpush1.bf16.msra.mxu0 0
    %2016 = vmatprep.subr.bf16.mxu0 0
    %2017 = vmatpush1.bf16.msra.mxu0 0
    %2018 = vmatprep.subr.bf16.mxu0 0
    %2019 = vmatpush1.bf16.msra.mxu0 0
    %2020 = vmatprep.subr.bf16.mxu0 0
    %2021 = vmatpush1.bf16.msra.mxu0 0
    %2022 = vmatprep.subr.bf16.mxu0 0
    %2023 = vmatpush1.bf16.msra.mxu0 0
    %2024 = vmatprep.subr.bf16.mxu0 0
    %2025 = vmatpush1.bf16.msra.mxu0 0
    %2026 = vmatprep.mubr.bf16.mxu0 0
    %2027 = vmatmul.mubr.bf16.gmra.mrb[0].mxu0 %v1703
    %v2028 = vpop.f32.mrb[0].mxu0
    %v2029 = vadd.f32 %v1752, %v2028
    %v2030 = vpop.f32.mrb[0].mxu0
    %v2031 = vadd.f32 %v1756, %v2030
    %v2032 = vpop.f32.mrb[0].mxu0
    %v2033 = vadd.f32 %v1752, %v2032
    %v2034 = vpop.f32.mrb[0].mxu0
    %v2035 = vadd.f32 %v1756, %v2034
    %2036 = vmatprep.mubr.bf16.mxu0 0
    %2037 = vmatmul.mubr.bf16.gmra.mrb[0].mxu0 %v1704
    %v2038 = vpop.f32.mrb[0].mxu0
    %v2039 = vadd.f32 %v1752, %v2038
    %v2040 = vpop.f32.mrb[0].mxu0
    %v2041 = vadd.f32 %v1756, %v2040
    %v2042 = vpop.f32.mrb[0].mxu0
    %v2043 = vadd.f32 %v1752, %v2042
    %v2044 = vpop.f32.mrb[0].mxu0
    %v2045 = vadd.f32 %v1756, %v2044
    %2046 = vmatprep.mubr.bf16.mxu0 0
    %2047 = vmatmul.mubr.bf16.gmra.mrb[0].mxu0 %v1705
    %v2048 = vpop.f32.mrb[0].mxu0
    %v2049 = vadd.f32 %v1752, %v2048
    %v2050 = vpop.f32.mrb[0].mxu0
    %v2051 = vadd.f32 %v1756, %v2050
    %v2052 = vpop.f32.mrb[0].mxu0
    %v2053 = vadd.f32 %v1752, %v2052
    %v2054 = vpop.f32.mrb[0].mxu0
    %v2055 = vadd.f32 %v1756, %v2054
    %2056 = vmatprep.mubr.bf16.mxu0 0
    %2057 = vmatmul.mubr.bf16.gmra.mrb[0].mxu0 %v1706
    %v2058 = vpop.f32.mrb[0].mxu0
    %v2059 = vadd.f32 %v1752, %v2058
    %v2060 = vpop.f32.mrb[0].mxu0
    %v2061 = vadd.f32 %v1756, %v2060
    %v2062 = vpop.f32.mrb[0].mxu0
    %v2063 = vadd.f32 %v1752, %v2062
    %v2064 = vpop.f32.mrb[0].mxu0
    %v2065 = vadd.f32 %v1756, %v2064
    %2066 = vdwg.mxu0
    %2067 = vst [vmem:[#allocation2] sm:$0xff] %v1956
    %2068 = vst [vmem:[#allocation2 + $0x8] sm:$0xff] %v1958
    %2069 = vst [vmem:[#allocation2 + $0x10] sm:$0xff] %v2029
    %2070 = vst [vmem:[#allocation2 + $0x18] sm:$0xff] %v2031
    %2071 = vst [vmem:[#allocation2 + $0x20] sm:$0xff] %v1960
    %2072 = vst [vmem:[#allocation2 + $0x28] sm:$0xff] %v1962
    %2073 = vst [vmem:[#allocation2 + $0x30] sm:$0xff] %v2033
    %2074 = vst [vmem:[#allocation2 + $0x38] sm:$0xff] %v2035
    %2075 = vst [vmem:[#allocation2 + $0x40] sm:$0xff] %v1966
    %2076 = vst [vmem:[#allocation2 + $0x48] sm:$0xff] %v1968
    %2077 = vst [vmem:[#allocation2 + $0x50] sm:$0xff] %v2039
    %2078 = vst [vmem:[#allocation2 + $0x58] sm:$0xff] %v2041
    %2079 = vst [vmem:[#allocation2 + $0x60] sm:$0xff] %v1970
    %2080 = vst [vmem:[#allocation2 + $0x68] sm:$0xff] %v1972
    %2081 = vst [vmem:[#allocation2 + $0x70] sm:$0xff] %v2043
    %2082 = vst [vmem:[#allocation2 + $0x78] sm:$0xff] %v2045
    %2083 = vst [vmem:[#allocation2 + $0x80] sm:$0xff] %v1976
    %2084 = vst [vmem:[#allocation2 + $0x88] sm:$0xff] %v1978
    %2085 = vst [vmem:[#allocation2 + $0x90] sm:$0xff] %v2049
    %2086 = vst [vmem:[#allocation2 + $0x98] sm:$0xff] %v2051
    %2087 = vst [vmem:[#allocation2 + $0xa0] sm:$0xff] %v1980
    %2088 = vst [vmem:[#allocation2 + $0xa8] sm:$0xff] %v1982
    %2089 = vst [vmem:[#allocation2 + $0xb0] sm:$0xff] %v2053
    %2090 = vst [vmem:[#allocation2 + $0xb8] sm:$0xff] %v2055
    %2091 = vst [vmem:[#allocation2 + $0xc0] sm:$0xff] %v1986
    %2092 = vst [vmem:[#allocation2 + $0xc8] sm:$0xff] %v1988
    %2093 = vst [vmem:[#allocation2 + $0xd0] sm:$0xff] %v2059
    %2094 = vst [vmem:[#allocation2 + $0xd8] sm:$0xff] %v2061
    %2095 = vst [vmem:[#allocation2 + $0xe0] sm:$0xff] %v1990
    %2096 = vst [vmem:[#allocation2 + $0xe8] sm:$0xff] %v1992
    %2097 = vst [vmem:[#allocation2 + $0xf0] sm:$0xff] %v2063
    %2098 = vst [vmem:[#allocation2 + $0xf8] sm:$0xff] %v2065
    %v2099 = vld [vmem:[#allocation15] sm:$0xff]
    %v2100 = vld [vmem:[#allocation15 + $0x8] sm:$0xff]
    %v2101 = vld [vmem:[#allocation15 + $0x10] sm:$0xff]
    %v2102 = vld [vmem:[#allocation15 + $0x18] sm:$0xff]
    %v2103 = vld [vmem:[#allocation15 + $0x20] sm:$0xff]
    %v2104 = vld [vmem:[#allocation15 + $0x28] sm:$0xff]
    %v2105 = vld [vmem:[#allocation15 + $0x30] sm:$0xff]
    %v2106 = vld [vmem:[#allocation15 + $0x38] sm:$0xff]
    %v2107 = vld [vmem:[#allocation15 + $0x40] sm:$0xff]
    %v2108 = vld [vmem:[#allocation15 + $0x48] sm:$0xff]
    %v2109 = vld [vmem:[#allocation15 + $0x50] sm:$0xff]
    %v2110 = vld [vmem:[#allocation15 + $0x58] sm:$0xff]
    %v2111 = vld [vmem:[#allocation15 + $0x60] sm:$0xff]
    %v2112 = vld [vmem:[#allocation15 + $0x68] sm:$0xff]
    %v2113 = vld [vmem:[#allocation15 + $0x70] sm:$0xff]
    %v2114 = vld [vmem:[#allocation15 + $0x78] sm:$0xff]
    %v2115 = vld [vmem:[#allocation15 + $0x80] sm:$0xff]
    %v2116 = vld [vmem:[#allocation15 + $0x88] sm:$0xff]
    %v2117 = vld [vmem:[#allocation15 + $0x90] sm:$0xff]
    %v2118 = vld [vmem:[#allocation15 + $0x98] sm:$0xff]
    %v2119 = vld [vmem:[#allocation15 + $0xa0] sm:$0xff]
    %v2120 = vld [vmem:[#allocation15 + $0xa8] sm:$0xff]
    %v2121 = vld [vmem:[#allocation15 + $0xb0] sm:$0xff]
    %v2122 = vld [vmem:[#allocation15 + $0xb8] sm:$0xff]
    %v2123 = vld [vmem:[#allocation15 + $0xc0] sm:$0xff]
    %v2124 = vld [vmem:[#allocation15 + $0xc8] sm:$0xff]
    %v2125 = vld [vmem:[#allocation15 + $0xd0] sm:$0xff]
    %v2126 = vld [vmem:[#allocation15 + $0xd8] sm:$0xff]
    %v2127 = vld [vmem:[#allocation15 + $0xe0] sm:$0xff]
    %v2128 = vld [vmem:[#allocation15 + $0xe8] sm:$0xff]
    %v2129 = vld [vmem:[#allocation15 + $0xf0] sm:$0xff]
    %v2130 = vld [vmem:[#allocation15 + $0xf8] sm:$0xff]
    %s2131 = scalar_lea.vmem [#allocation7], 8
    %v2132 = vld [vmem:[%s2131] sm:$0xff]
    %s2133 = scalar_lea.vmem [#allocation9], 8
    %v2134 = vld [vmem:[%s2133] sm:$0xff]
    %v2135 = vld [vmem:[#allocation2] sm:$0xff]
    %v2136 = vld [vmem:[#allocation2 + $0x8] sm:$0xff]
    %v2137 = vld [vmem:[#allocation2 + $0x10] sm:$0xff]
    %v2138 = vld [vmem:[#allocation2 + $0x18] sm:$0xff]
    %v2139 = vpack.c.bf16 %v2132, %v2132
    %v2172 = vunpack.c.l.b16 %v2099
    %v2173 = vunpack.c.h.b16 %v2099
    %v2174 = vunpack.c.l.b16 %v2100
    %v2175 = vunpack.c.h.b16 %v2100
    %v2176 = vunpack.c.l.b16 %v2101
    %v2177 = vunpack.c.h.b16 %v2101
    %v2178 = vunpack.c.l.b16 %v2102
    %v2179 = vunpack.c.h.b16 %v2102
    %v2180 = vunpack.c.l.b16 %v2103
    %v2181 = vunpack.c.h.b16 %v2103
    %v2182 = vunpack.c.l.b16 %v2104
    %v2183 = vunpack.c.h.b16 %v2104
    %v2184 = vunpack.c.l.b16 %v2105
    %v2185 = vunpack.c.h.b16 %v2105
    %v2186 = vunpack.c.l.b16 %v2106
    %v2187 = vunpack.c.h.b16 %v2106
    %v2188 = vunpack.c.l.b16 %v2107
    %v2189 = vunpack.c.h.b16 %v2107
    %v2190 = vunpack.c.l.b16 %v2108
    %v2191 = vunpack.c.h.b16 %v2108
    %v2192 = vunpack.c.l.b16 %v2109
    %v2193 = vunpack.c.h.b16 %v2109
    %v2194 = vunpack.c.l.b16 %v2110
    %v2195 = vunpack.c.h.b16 %v2110
    %v2196 = vunpack.c.l.b16 %v2111
    %v2197 = vunpack.c.h.b16 %v2111
    %v2198 = vunpack.c.l.b16 %v2112
    %v2199 = vunpack.c.h.b16 %v2112
    %v2200 = vunpack.c.l.b16 %v2113
    %v2201 = vunpack.c.h.b16 %v2113
    %v2202 = vunpack.c.l.b16 %v2114
    %v2203 = vunpack.c.h.b16 %v2114
    %v2204 = vunpack.c.l.b16 %v2115
    %v2205 = vunpack.c.h.b16 %v2115
    %v2206 = vunpack.c.l.b16 %v2116
    %v2207 = vunpack.c.h.b16 %v2116
    %v2208 = vunpack.c.l.b16 %v2117
    %v2209 = vunpack.c.h.b16 %v2117
    %v2210 = vunpack.c.l.b16 %v2118
    %v2211 = vunpack.c.h.b16 %v2118
    %v2212 = vunpack.c.l.b16 %v2119
    %v2213 = vunpack.c.h.b16 %v2119
    %v2214 = vunpack.c.l.b16 %v2120
    %v2215 = vunpack.c.h.b16 %v2120
    %v2216 = vunpack.c.l.b16 %v2121
    %v2217 = vunpack.c.h.b16 %v2121
    %v2218 = vunpack.c.l.b16 %v2122
    %v2219 = vunpack.c.h.b16 %v2122
    %v2220 = vunpack.c.l.b16 %v2123
    %v2221 = vunpack.c.h.b16 %v2123
    %v2222 = vunpack.c.l.b16 %v2124
    %v2223 = vunpack.c.h.b16 %v2124
    %v2224 = vunpack.c.l.b16 %v2125
    %v2225 = vunpack.c.h.b16 %v2125
    %v2226 = vunpack.c.l.b16 %v2126
    %v2227 = vunpack.c.h.b16 %v2126
    %v2228 = vunpack.c.l.b16 %v2127
    %v2229 = vunpack.c.h.b16 %v2127
    %v2230 = vunpack.c.l.b16 %v2128
    %v2231 = vunpack.c.h.b16 %v2128
    %v2232 = vunpack.c.l.b16 %v2129
    %v2233 = vunpack.c.h.b16 %v2129
    %v2234 = vunpack.c.l.b16 %v2130
    %v2235 = vunpack.c.h.b16 %v2130
    %v2236 = vpack.c.b16 %v2176, %v2172
    %v2237 = vpack.c.b16 %v2177, %v2173
    %v2238 = vpack.c.b16 %v2178, %v2174
    %v2239 = vpack.c.b16 %v2179, %v2175
    %v2240 = vpack.c.b16 %v2184, %v2180
    %v2241 = vpack.c.b16 %v2185, %v2181
    %v2242 = vpack.c.b16 %v2186, %v2182
    %v2243 = vpack.c.b16 %v2187, %v2183
    %v2244 = vpack.c.b16 %v2192, %v2188
    %v2245 = vpack.c.b16 %v2193, %v2189
    %v2246 = vpack.c.b16 %v2194, %v2190
    %v2247 = vpack.c.b16 %v2195, %v2191
    %v2248 = vpack.c.b16 %v2200, %v2196
    %v2249 = vpack.c.b16 %v2201, %v2197
    %v2250 = vpack.c.b16 %v2202, %v2198
    %v2251 = vpack.c.b16 %v2203, %v2199
    %v2252 = vpack.c.b16 %v2208, %v2204
    %v2253 = vpack.c.b16 %v2209, %v2205
    %v2254 = vpack.c.b16 %v2210, %v2206
    %v2255 = vpack.c.b16 %v2211, %v2207
    %v2256 = vpack.c.b16 %v2216, %v2212
    %v2257 = vpack.c.b16 %v2217, %v2213
    %v2258 = vpack.c.b16 %v2218, %v2214
    %v2259 = vpack.c.b16 %v2219, %v2215
    %v2260 = vpack.c.b16 %v2224, %v2220
    %v2261 = vpack.c.b16 %v2225, %v2221
    %v2262 = vpack.c.b16 %v2226, %v2222
    %v2263 = vpack.c.b16 %v2227, %v2223
    %v2264 = vpack.c.b16 %v2232, %v2228
    %v2265 = vpack.c.b16 %v2233, %v2229
    %v2266 = vpack.c.b16 %v2234, %v2230
    %v2267 = vpack.c.b16 %v2235, %v2231
    %2300 = vmatprep.subr.bf16.mxu0 %v2237
    %2301 = vmatpush1.bf16.msra.mxu0 %v2236
    %2302 = vmatprep.subr.bf16.mxu0 %v2241
    %2303 = vmatpush1.bf16.msra.mxu0 %v2240
    %2304 = vmatprep.subr.bf16.mxu0 %v2245
    %2305 = vmatpush1.bf16.msra.mxu0 %v2244
    %2306 = vmatprep.subr.bf16.mxu0 %v2249
    %2307 = vmatpush1.bf16.msra.mxu0 %v2248
    %2308 = vmatprep.subr.bf16.mxu0 %v2253
    %2309 = vmatpush1.bf16.msra.mxu0 %v2252
    %2310 = vmatprep.subr.bf16.mxu0 %v2257
    %2311 = vmatpush1.bf16.msra.mxu0 %v2256
    %2312 = vmatprep.subr.bf16.mxu0 %v2261
    %2313 = vmatpush1.bf16.msra.mxu0 %v2260
    %2314 = vmatprep.subr.bf16.mxu0 %v2265
    %2315 = vmatpush1.bf16.msra.mxu0 %v2264
    %2316 = vmatprep.subr.bf16.mxu0 0
    %2317 = vmatpush1.bf16.msra.mxu0 0
    %2318 = vmatprep.subr.bf16.mxu0 0
    %2319 = vmatpush1.bf16.msra.mxu0 0
    %2320 = vmatprep.subr.bf16.mxu0 0
    %2321 = vmatpush1.bf16.msra.mxu0 0
    %2322 = vmatprep.subr.bf16.mxu0 0
    %2323 = vmatpush1.bf16.msra.mxu0 0
    %2324 = vmatprep.subr.bf16.mxu0 0
    %2325 = vmatpush1.bf16.msra.mxu0 0
    %2326 = vmatprep.subr.bf16.mxu0 0
    %2327 = vmatpush1.bf16.msra.mxu0 0
    %2328 = vmatprep.subr.bf16.mxu0 0
    %2329 = vmatpush1.bf16.msra.mxu0 0
    %2330 = vmatprep.subr.bf16.mxu0 0
    %2331 = vmatpush1.bf16.msra.mxu0 0
    %2332 = vmatprep.mubr.bf16.mxu0 0
    %2333 = vmatmul.mubr.bf16.gmra.mrb[0].mxu0 %v2139
    %v2334 = vpop.f32.mrb[0].mxu0
    %v2335 = vadd.f32 0.0, %v2334
    %v2336 = vpop.f32.mrb[0].mxu0
    %v2337 = vadd.f32 0.0, %v2336
    %v2338 = vpop.f32.mrb[0].mxu0
    %v2339 = vpop.f32.mrb[0].mxu0
    %2340 = vdwg.mxu0
    %2341 = vmatprep.subr.bf16.mxu0 %v2239
    %2342 = vmatpush1.bf16.msra.mxu0 %v2238
    %2343 = vmatprep.subr.bf16.mxu0 %v2243
    %2344 = vmatpush1.bf16.msra.mxu0 %v2242
    %2345 = vmatprep.subr.bf16.mxu0 %v2247
    %2346 = vmatpush1.bf16.msra.mxu0 %v2246
    %2347 = vmatprep.subr.bf16.mxu0 %v2251
    %2348 = vmatpush1.bf16.msra.mxu0 %v2250
    %2349 = vmatprep.subr.bf16.mxu0 %v2255
    %2350 = vmatpush1.bf16.msra.mxu0 %v2254
    %2351 = vmatprep.subr.bf16.mxu0 %v2259
    %2352 = vmatpush1.bf16.msra.mxu0 %v2258
    %2353 = vmatprep.subr.bf16.mxu0 %v2263
    %2354 = vmatpush1.bf16.msra.mxu0 %v2262
    %2355 = vmatprep.subr.bf16.mxu0 %v2267
    %2356 = vmatpush1.bf16.msra.mxu0 %v2266
    %2357 = vmatprep.subr.bf16.mxu0 0
    %2358 = vmatpush1.bf16.msra.mxu0 0
    %2359 = vmatprep.subr.bf16.mxu0 0
    %2360 = vmatpush1.bf16.msra.mxu0 0
    %2361 = vmatprep.subr.bf16.mxu0 0
    %2362 = vmatpush1.bf16.msra.mxu0 0
    %2363 = vmatprep.subr.bf16.mxu0 0
    %2364 = vmatpush1.bf16.msra.mxu0 0
    %2365 = vmatprep.subr.bf16.mxu0 0
    %2366 = vmatpush1.bf16.msra.mxu0 0
    %2367 = vmatprep.subr.bf16.mxu0 0
    %2368 = vmatpush1.bf16.msra.mxu0 0
    %2369 = vmatprep.subr.bf16.mxu0 0
    %2370 = vmatpush1.bf16.msra.mxu0 0
    %2371 = vmatprep.subr.bf16.mxu0 0
    %2372 = vmatpush1.bf16.msra.mxu0 0
    %2373 = vmatprep.mubr.bf16.mxu0 0
    %2374 = vmatmul.mubr.bf16.gmra.mrb[0].mxu0 %v2139
    %v2375 = vpop.f32.mrb[0].mxu0
    %v2376 = vadd.f32 0.0, %v2375
    %v2377 = vpop.f32.mrb[0].mxu0
    %v2378 = vadd.f32 0.0, %v2377
    %v2379 = vpop.f32.mrb[0].mxu0
    %v2380 = vpop.f32.mrb[0].mxu0
    %2381 = vdwg.mxu0
    %v2382 = vadd.f32 %v2135, %v2335
    %v2383 = vadd.f32 %v2136, %v2337
    %v2384 = vadd.f32 %v2137, %v2376
    %v2385 = vadd.f32 %v2138, %v2378
    %v2386 = vxor.u32 %v2382, 2147483648
    %v2387 = vmul.f32 %v2386, 1.442695
    %v2388 = vpow.pop %v2387
    %v2389 = vadd.f32 %v2388, 1.0
    %v2390 = vrcp.pop %v2389
    %v2391 = vmul.f32 1.0, %v2390
    %v2392 = vxor.u32 %v2383, 2147483648
    %v2393 = vmul.f32 %v2392, 1.442695
    %v2394 = vpow.pop %v2393
    %v2395 = vadd.f32 %v2394, 1.0
    %v2396 = vrcp.pop %v2395
    %v2397 = vmul.f32 1.0, %v2396
    %v2398 = vtanh.pop %v2384
    %v2399 = vxor.u32 %v2385, 2147483648
    %v2400 = vmul.f32 %v2399, 1.442695
    %v2401 = vpow.pop %v2400
    %v2402 = vadd.f32 %v2401, 1.0
    %v2403 = vrcp.pop %v2402
    %v2404 = vmul.f32 1.0, %v2403
    %v2405 = vmul.f32 %v2397, %v2134
    %v2406 = vmul.f32 %v2391, %v2398
    %v2407 = vadd.f32 %v2405, %v2406
    %v2408 = vtanh.pop %v2407
    %v2409 = vmul.f32 %v2404, %v2408
    %2410 = vst [vmem:[#allocation3] sm:$0xff] %v2409
    %v2411 = vld [vmem:[%s867] sm:$0xff]
    %v2412 = vld [vmem:[%s867 + $0x8] sm:$0xff]
    %v2413 = vld [vmem:[%s867 + $0x10] sm:$0xff]
    %v2414 = vld [vmem:[%s867 + $0x18] sm:$0xff]
    %v2415 = vpack.c.bf16 %v2409, %v2409
    %2416 = vmatprep.subr.bf16.mxu0 %v2237
    %2417 = vmatpush1.bf16.msra.mxu0 %v2236
    %2418 = vmatprep.subr.bf16.mxu0 %v2241
    %2419 = vmatpush1.bf16.msra.mxu0 %v2240
    %2420 = vmatprep.subr.bf16.mxu0 %v2245
    %2421 = vmatpush1.bf16.msra.mxu0 %v2244
    %2422 = vmatprep.subr.bf16.mxu0 %v2249
    %2423 = vmatpush1.bf16.msra.mxu0 %v2248
    %2424 = vmatprep.subr.bf16.mxu0 %v2253
    %2425 = vmatpush1.bf16.msra.mxu0 %v2252
    %2426 = vmatprep.subr.bf16.mxu0 %v2257
    %2427 = vmatpush1.bf16.msra.mxu0 %v2256
    %2428 = vmatprep.subr.bf16.mxu0 %v2261
    %2429 = vmatpush1.bf16.msra.mxu0 %v2260
    %2430 = vmatprep.subr.bf16.mxu0 %v2265
    %2431 = vmatpush1.bf16.msra.mxu0 %v2264
    %2432 = vmatprep.subr.bf16.mxu0 0
    %2433 = vmatpush1.bf16.msra.mxu0 0
    %2434 = vmatprep.subr.bf16.mxu0 0
    %2435 = vmatpush1.bf16.msra.mxu0 0
    %2436 = vmatprep.subr.bf16.mxu0 0
    %2437 = vmatpush1.bf16.msra.mxu0 0
    %2438 = vmatprep.subr.bf16.mxu0 0
    %2439 = vmatpush1.bf16.msra.mxu0 0
    %2440 = vmatprep.subr.bf16.mxu0 0
    %2441 = vmatpush1.bf16.msra.mxu0 0
    %2442 = vmatprep.subr.bf16.mxu0 0
    %2443 = vmatpush1.bf16.msra.mxu0 0
    %2444 = vmatprep.subr.bf16.mxu0 0
    %2445 = vmatpush1.bf16.msra.mxu0 0
    %2446 = vmatprep.subr.bf16.mxu0 0
    %2447 = vmatpush1.bf16.msra.mxu0 0
    %2448 = vmatprep.mubr.bf16.mxu0 0
    %2449 = vmatmul.mubr.bf16.gmra.mrb[0].mxu0 %v2415
    %v2450 = vpop.f32.mrb[0].mxu0
    %v2451 = vadd.f32 0.0, %v2450
    %v2452 = vpop.f32.mrb[0].mxu0
    %v2453 = vadd.f32 0.0, %v2452
    %v2454 = vpop.f32.mrb[0].mxu0
    %v2455 = vpop.f32.mrb[0].mxu0
    %2456 = vdwg.mxu0
    %2457 = vmatprep.subr.bf16.mxu0 %v2239
    %2458 = vmatpush1.bf16.msra.mxu0 %v2238
    %2459 = vmatprep.subr.bf16.mxu0 %v2243
    %2460 = vmatpush1.bf16.msra.mxu0 %v2242
    %2461 = vmatprep.subr.bf16.mxu0 %v2247
    %2462 = vmatpush1.bf16.msra.mxu0 %v2246
    %2463 = vmatprep.subr.bf16.mxu0 %v2251
    %2464 = vmatpush1.bf16.msra.mxu0 %v2250
    %2465 = vmatprep.subr.bf16.mxu0 %v2255
    %2466 = vmatpush1.bf16.msra.mxu0 %v2254
    %2467 = vmatprep.subr.bf16.mxu0 %v2259
    %2468 = vmatpush1.bf16.msra.mxu0 %v2258
    %2469 = vmatprep.subr.bf16.mxu0 %v2263
    %2470 = vmatpush1.bf16.msra.mxu0 %v2262
    %2471 = vmatprep.subr.bf16.mxu0 %v2267
    %2472 = vmatpush1.bf16.msra.mxu0 %v2266
    %2473 = vmatprep.subr.bf16.mxu0 0
    %2474 = vmatpush1.bf16.msra.mxu0 0
    %2475 = vmatprep.subr.bf16.mxu0 0
    %2476 = vmatpush1.bf16.msra.mxu0 0
    %2477 = vmatprep.subr.bf16.mxu0 0
    %2478 = vmatpush1.bf16.msra.mxu0 0
    %2479 = vmatprep.subr.bf16.mxu0 0
    %2480 = vmatpush1.bf16.msra.mxu0 0
    %2481 = vmatprep.subr.bf16.mxu0 0
    %2482 = vmatpush1.bf16.msra.mxu0 0
    %2483 = vmatprep.subr.bf16.mxu0 0
    %2484 = vmatpush1.bf16.msra.mxu0 0
    %2485 = vmatprep.subr.bf16.mxu0 0
    %2486 = vmatpush1.bf16.msra.mxu0 0
    %2487 = vmatprep.subr.bf16.mxu0 0
    %2488 = vmatpush1.bf16.msra.mxu0 0
    %2489 = vmatprep.mubr.bf16.mxu0 0
    %2490 = vmatmul.mubr.bf16.gmra.mrb[0].mxu0 %v2415
    %v2491 = vpop.f32.mrb[0].mxu0
    %v2492 = vadd.f32 0.0, %v2491
    %v2493 = vpop.f32.mrb[0].mxu0
    %v2494 = vadd.f32 0.0, %v2493
    %v2495 = vpop.f32.mrb[0].mxu0
    %v2496 = vpop.f32.mrb[0].mxu0
    %2497 = vdwg.mxu0
    %v2498 = vadd.f32 %v2411, %v2451
    %v2499 = vadd.f32 %v2412, %v2453
    %v2500 = vadd.f32 %v2413, %v2492
    %v2501 = vadd.f32 %v2414, %v2494
    %v2502 = vxor.u32 %v2498, 2147483648
    %v2503 = vmul.f32 %v2502, 1.442695
    %v2504 = vpow.pop %v2503
    %v2505 = vadd.f32 %v2504, 1.0
    %v2506 = vrcp.pop %v2505
    %v2507 = vmul.f32 1.0, %v2506
    %v2508 = vxor.u32 %v2499, 2147483648
    %v2509 = vmul.f32 %v2508, 1.442695
    %v2510 = vpow.pop %v2509
    %v2511 = vadd.f32 %v2510, 1.0
    %v2512 = vrcp.pop %v2511
    %v2513 = vmul.f32 1.0, %v2512
    %v2514 = vtanh.pop %v2500
    %v2515 = vxor.u32 %v2501, 2147483648
    %v2516 = vmul.f32 %v2515, 1.442695
    %v2517 = vpow.pop %v2516
    %v2518 = vadd.f32 %v2517, 1.0
    %v2519 = vrcp.pop %v2518
    %v2520 = vmul.f32 1.0, %v2519
    %v2521 = vmul.f32 %v2513, %v2407
    %v2522 = vmul.f32 %v2507, %v2514
    %v2523 = vadd.f32 %v2521, %v2522
    %v2524 = vtanh.pop %v2523
    %v2525 = vmul.f32 %v2520, %v2524
    %2526 = vst [vmem:[%s983] sm:$0xff] %v2525
    %v2527 = vld [vmem:[%s985] sm:$0xff]
    %v2528 = vld [vmem:[%s985 + $0x8] sm:$0xff]
    %v2529 = vld [vmem:[%s985 + $0x10] sm:$0xff]
    %v2530 = vld [vmem:[%s985 + $0x18] sm:$0xff]
    %v2531 = vpack.c.bf16 %v2525, %v2525
    %2532 = vmatprep.subr.bf16.mxu0 %v2237
    %2533 = vmatpush1.bf16.msra.mxu0 %v2236
    %2534 = vmatprep.subr.bf16.mxu0 %v2241
    %2535 = vmatpush1.bf16.msra.mxu0 %v2240
    %2536 = vmatprep.subr.bf16.mxu0 %v2245
    %2537 = vmatpush1.bf16.msra.mxu0 %v2244
    %2538 = vmatprep.subr.bf16.mxu0 %v2249
    %2539 = vmatpush1.bf16.msra.mxu0 %v2248
    %2540 = vmatprep.subr.bf16.mxu0 %v2253
    %2541 = vmatpush1.bf16.msra.mxu0 %v2252
    %2542 = vmatprep.subr.bf16.mxu0 %v2257
    %2543 = vmatpush1.bf16.msra.mxu0 %v2256
    %2544 = vmatprep.subr.bf16.mxu0 %v2261
    %2545 = vmatpush1.bf16.msra.mxu0 %v2260
    %2546 = vmatprep.subr.bf16.mxu0 %v2265
    %2547 = vmatpush1.bf16.msra.mxu0 %v2264
    %2548 = vmatprep.subr.bf16.mxu0 0
    %2549 = vmatpush1.bf16.msra.mxu0 0
    %2550 = vmatprep.subr.bf16.mxu0 0
    %2551 = vmatpush1.bf16.msra.mxu0 0
    %2552 = vmatprep.subr.bf16.mxu0 0
    %2553 = vmatpush1.bf16.msra.mxu0 0
    %2554 = vmatprep.subr.bf16.mxu0 0
    %2555 = vmatpush1.bf16.msra.mxu0 0
    %2556 = vmatprep.subr.bf16.mxu0 0
    %2557 = vmatpush1.bf16.msra.mxu0 0
    %2558 = vmatprep.subr.bf16.mxu0 0
    %2559 = vmatpush1.bf16.msra.mxu0 0
    %2560 = vmatprep.subr.bf16.mxu0 0
    %2561 = vmatpush1.bf16.msra.mxu0 0
    %2562 = vmatprep.subr.bf16.mxu0 0
    %2563 = vmatpush1.bf16.msra.mxu0 0
    %2564 = vmatprep.mubr.bf16.mxu0 0
    %2565 = vmatmul.mubr.bf16.gmra.mrb[0].mxu0 %v2531
    %v2566 = vpop.f32.mrb[0].mxu0
    %v2567 = vadd.f32 0.0, %v2566
    %v2568 = vpop.f32.mrb[0].mxu0
    %v2569 = vadd.f32 0.0, %v2568
    %v2570 = vpop.f32.mrb[0].mxu0
    %v2571 = vpop.f32.mrb[0].mxu0
    %2572 = vdwg.mxu0
    %2573 = vmatprep.subr.bf16.mxu0 %v2239
    %2574 = vmatpush1.bf16.msra.mxu0 %v2238
    %2575 = vmatprep.subr.bf16.mxu0 %v2243
    %2576 = vmatpush1.bf16.msra.mxu0 %v2242
    %2577 = vmatprep.subr.bf16.mxu0 %v2247
    %2578 = vmatpush1.bf16.msra.mxu0 %v2246
    %2579 = vmatprep.subr.bf16.mxu0 %v2251
    %2580 = vmatpush1.bf16.msra.mxu0 %v2250
    %2581 = vmatprep.subr.bf16.mxu0 %v2255
    %2582 = vmatpush1.bf16.msra.mxu0 %v2254
    %2583 = vmatprep.subr.bf16.mxu0 %v2259
    %2584 = vmatpush1.bf16.msra.mxu0 %v2258
    %2585 = vmatprep.subr.bf16.mxu0 %v2263
    %2586 = vmatpush1.bf16.msra.mxu0 %v2262
    %2587 = vmatprep.subr.bf16.mxu0 %v2267
    %2588 = vmatpush1.bf16.msra.mxu0 %v2266
    %2589 = vmatprep.subr.bf16.mxu0 0
    %2590 = vmatpush1.bf16.msra.mxu0 0
    %2591 = vmatprep.subr.bf16.mxu0 0
    %2592 = vmatpush1.bf16.msra.mxu0 0
    %2593 = vmatprep.subr.bf16.mxu0 0
    %2594 = vmatpush1.bf16.msra.mxu0 0
    %2595 = vmatprep.subr.bf16.mxu0 0
    %2596 = vmatpush1.bf16.msra.mxu0 0
    %2597 = vmatprep.subr.bf16.mxu0 0
    %2598 = vmatpush1.bf16.msra.mxu0 0
    %2599 = vmatprep.subr.bf16.mxu0 0
    %2600 = vmatpush1.bf16.msra.mxu0 0
    %2601 = vmatprep.subr.bf16.mxu0 0
    %2602 = vmatpush1.bf16.msra.mxu0 0
    %2603 = vmatprep.subr.bf16.mxu0 0
    %2604 = vmatpush1.bf16.msra.mxu0 0
    %2605 = vmatprep.mubr.bf16.mxu0 0
    %2606 = vmatmul.mubr.bf16.gmra.mrb[0].mxu0 %v2531
    %v2607 = vpop.f32.mrb[0].mxu0
    %v2608 = vadd.f32 0.0, %v2607
    %v2609 = vpop.f32.mrb[0].mxu0
    %v2610 = vadd.f32 0.0, %v2609
    %v2611 = vpop.f32.mrb[0].mxu0
    %v2612 = vpop.f32.mrb[0].mxu0
    %2613 = vdwg.mxu0
    %v2614 = vadd.f32 %v2527, %v2567
    %v2615 = vadd.f32 %v2528, %v2569
    %v2616 = vadd.f32 %v2529, %v2608
    %v2617 = vadd.f32 %v2530, %v2610
    %v2618 = vxor.u32 %v2614, 2147483648
    %v2619 = vmul.f32 %v2618, 1.442695
    %v2620 = vpow.pop %v2619
    %v2621 = vadd.f32 %v2620, 1.0
    %v2622 = vrcp.pop %v2621
    %v2623 = vmul.f32 1.0, %v2622
    %v2624 = vxor.u32 %v2615, 2147483648
    %v2625 = vmul.f32 %v2624, 1.442695
    %v2626 = vpow.pop %v2625
    %v2627 = vadd.f32 %v2626, 1.0
    %v2628 = vrcp.pop %v2627
    %v2629 = vmul.f32 1.0, %v2628
    %v2630 = vtanh.pop %v2616
    %v2631 = vxor.u32 %v2617, 2147483648
    %v2632 = vmul.f32 %v2631, 1.442695
    %v2633 = vpow.pop %v2632
    %v2634 = vadd.f32 %v2633, 1.0
    %v2635 = vrcp.pop %v2634
    %v2636 = vmul.f32 1.0, %v2635
    %v2637 = vmul.f32 %v2629, %v2523
    %v2638 = vmul.f32 %v2623, %v2630
    %v2639 = vadd.f32 %v2637, %v2638
    %v2640 = vtanh.pop %v2639
    %v2641 = vmul.f32 %v2636, %v2640
    %2642 = vst [vmem:[%s1101] sm:$0xff] %v2641
    %v2643 = vld [vmem:[%s1103] sm:$0xff]
    %v2644 = vld [vmem:[%s1103 + $0x8] sm:$0xff]
    %v2645 = vld [vmem:[%s1103 + $0x10] sm:$0xff]
    %v2646 = vld [vmem:[%s1103 + $0x18] sm:$0xff]
    %v2647 = vpack.c.bf16 %v2641, %v2641
    %2648 = vmatprep.subr.bf16.mxu0 %v2237
    %2649 = vmatpush1.bf16.msra.mxu0 %v2236
    %2650 = vmatprep.subr.bf16.mxu0 %v2241
    %2651 = vmatpush1.bf16.msra.mxu0 %v2240
    %2652 = vmatprep.subr.bf16.mxu0 %v2245
    %2653 = vmatpush1.bf16.msra.mxu0 %v2244
    %2654 = vmatprep.subr.bf16.mxu0 %v2249
    %2655 = vmatpush1.bf16.msra.mxu0 %v2248
    %2656 = vmatprep.subr.bf16.mxu0 %v2253
    %2657 = vmatpush1.bf16.msra.mxu0 %v2252
    %2658 = vmatprep.subr.bf16.mxu0 %v2257
    %2659 = vmatpush1.bf16.msra.mxu0 %v2256
    %2660 = vmatprep.subr.bf16.mxu0 %v2261
    %2661 = vmatpush1.bf16.msra.mxu0 %v2260
    %2662 = vmatprep.subr.bf16.mxu0 %v2265
    %2663 = vmatpush1.bf16.msra.mxu0 %v2264
    %2664 = vmatprep.subr.bf16.mxu0 0
    %2665 = vmatpush1.bf16.msra.mxu0 0
    %2666 = vmatprep.subr.bf16.mxu0 0
    %2667 = vmatpush1.bf16.msra.mxu0 0
    %2668 = vmatprep.subr.bf16.mxu0 0
    %2669 = vmatpush1.bf16.msra.mxu0 0
    %2670 = vmatprep.subr.bf16.mxu0 0
    %2671 = vmatpush1.bf16.msra.mxu0 0
    %2672 = vmatprep.subr.bf16.mxu0 0
    %2673 = vmatpush1.bf16.msra.mxu0 0
    %2674 = vmatprep.subr.bf16.mxu0 0
    %2675 = vmatpush1.bf16.msra.mxu0 0
    %2676 = vmatprep.subr.bf16.mxu0 0
    %2677 = vmatpush1.bf16.msra.mxu0 0
    %2678 = vmatprep.subr.bf16.mxu0 0
    %2679 = vmatpush1.bf16.msra.mxu0 0
    %2680 = vmatprep.mubr.bf16.mxu0 0
    %2681 = vmatmul.mubr.bf16.gmra.mrb[0].mxu0 %v2647
    %v2682 = vpop.f32.mrb[0].mxu0
    %v2683 = vadd.f32 0.0, %v2682
    %v2684 = vpop.f32.mrb[0].mxu0
    %v2685 = vadd.f32 0.0, %v2684
    %v2686 = vpop.f32.mrb[0].mxu0
    %v2687 = vpop.f32.mrb[0].mxu0
    %2688 = vdwg.mxu0
    %2689 = vmatprep.subr.bf16.mxu0 %v2239
    %2690 = vmatpush1.bf16.msra.mxu0 %v2238
    %2691 = vmatprep.subr.bf16.mxu0 %v2243
    %2692 = vmatpush1.bf16.msra.mxu0 %v2242
    %2693 = vmatprep.subr.bf16.mxu0 %v2247
    %2694 = vmatpush1.bf16.msra.mxu0 %v2246
    %2695 = vmatprep.subr.bf16.mxu0 %v2251
    %2696 = vmatpush1.bf16.msra.mxu0 %v2250
    %2697 = vmatprep.subr.bf16.mxu0 %v2255
    %2698 = vmatpush1.bf16.msra.mxu0 %v2254
    %2699 = vmatprep.subr.bf16.mxu0 %v2259
    %2700 = vmatpush1.bf16.msra.mxu0 %v2258
    %2701 = vmatprep.subr.bf16.mxu0 %v2263
    %2702 = vmatpush1.bf16.msra.mxu0 %v2262
    %2703 = vmatprep.subr.bf16.mxu0 %v2267
    %2704 = vmatpush1.bf16.msra.mxu0 %v2266
    %2705 = vmatprep.subr.bf16.mxu0 0
    %2706 = vmatpush1.bf16.msra.mxu0 0
    %2707 = vmatprep.subr.bf16.mxu0 0
    %2708 = vmatpush1.bf16.msra.mxu0 0
    %2709 = vmatprep.subr.bf16.mxu0 0
    %2710 = vmatpush1.bf16.msra.mxu0 0
    %2711 = vmatprep.subr.bf16.mxu0 0
    %2712 = vmatpush1.bf16.msra.mxu0 0
    %2713 = vmatprep.subr.bf16.mxu0 0
    %2714 = vmatpush1.bf16.msra.mxu0 0
    %2715 = vmatprep.subr.bf16.mxu0 0
    %2716 = vmatpush1.bf16.msra.mxu0 0
    %2717 = vmatprep.subr.bf16.mxu0 0
    %2718 = vmatpush1.bf16.msra.mxu0 0
    %2719 = vmatprep.subr.bf16.mxu0 0
    %2720 = vmatpush1.bf16.msra.mxu0 0
    %2721 = vmatprep.mubr.bf16.mxu0 0
    %2722 = vmatmul.mubr.bf16.gmra.mrb[0].mxu0 %v2647
    %v2723 = vpop.f32.mrb[0].mxu0
    %v2724 = vadd.f32 0.0, %v2723
    %v2725 = vpop.f32.mrb[0].mxu0
    %v2726 = vadd.f32 0.0, %v2725
    %v2727 = vpop.f32.mrb[0].mxu0
    %v2728 = vpop.f32.mrb[0].mxu0
    %2729 = vdwg.mxu0
    %v2730 = vadd.f32 %v2643, %v2683
    %v2731 = vadd.f32 %v2644, %v2685
    %v2732 = vadd.f32 %v2645, %v2724
    %v2733 = vadd.f32 %v2646, %v2726
    %v2734 = vxor.u32 %v2730, 2147483648
    %v2735 = vmul.f32 %v2734, 1.442695
    %v2736 = vpow.pop %v2735
    %v2737 = vadd.f32 %v2736, 1.0
    %v2738 = vrcp.pop %v2737
    %v2739 = vmul.f32 1.0, %v2738
    %v2740 = vxor.u32 %v2731, 2147483648
    %v2741 = vmul.f32 %v2740, 1.442695
    %v2742 = vpow.pop %v2741
    %v2743 = vadd.f32 %v2742, 1.0
    %v2744 = vrcp.pop %v2743
    %v2745 = vmul.f32 1.0, %v2744
    %v2746 = vtanh.pop %v2732
    %v2747 = vxor.u32 %v2733, 2147483648
    %v2748 = vmul.f32 %v2747, 1.442695
    %v2749 = vpow.pop %v2748
    %v2750 = vadd.f32 %v2749, 1.0
    %v2751 = vrcp.pop %v2750
    %v2752 = vmul.f32 1.0, %v2751
    %v2753 = vmul.f32 %v2745, %v2639
    %v2754 = vmul.f32 %v2739, %v2746
    %v2755 = vadd.f32 %v2753, %v2754
    %v2756 = vtanh.pop %v2755
    %v2757 = vmul.f32 %v2752, %v2756
    %2758 = vst [vmem:[%s1219] sm:$0xff] %v2757
    %v2759 = vld [vmem:[%s1221] sm:$0xff]
    %v2760 = vld [vmem:[%s1221 + $0x8] sm:$0xff]
    %v2761 = vld [vmem:[%s1221 + $0x10] sm:$0xff]
    %v2762 = vld [vmem:[%s1221 + $0x18] sm:$0xff]
    %v2763 = vpack.c.bf16 %v2757, %v2757
    %2764 = vmatprep.subr.bf16.mxu0 %v2237
    %2765 = vmatpush1.bf16.msra.mxu0 %v2236
    %2766 = vmatprep.subr.bf16.mxu0 %v2241
    %2767 = vmatpush1.bf16.msra.mxu0 %v2240
    %2768 = vmatprep.subr.bf16.mxu0 %v2245
    %2769 = vmatpush1.bf16.msra.mxu0 %v2244
    %2770 = vmatprep.subr.bf16.mxu0 %v2249
    %2771 = vmatpush1.bf16.msra.mxu0 %v2248
    %2772 = vmatprep.subr.bf16.mxu0 %v2253
    %2773 = vmatpush1.bf16.msra.mxu0 %v2252
    %2774 = vmatprep.subr.bf16.mxu0 %v2257
    %2775 = vmatpush1.bf16.msra.mxu0 %v2256
    %2776 = vmatprep.subr.bf16.mxu0 %v2261
    %2777 = vmatpush1.bf16.msra.mxu0 %v2260
    %2778 = vmatprep.subr.bf16.mxu0 %v2265
    %2779 = vmatpush1.bf16.msra.mxu0 %v2264
    %2780 = vmatprep.subr.bf16.mxu0 0
    %2781 = vmatpush1.bf16.msra.mxu0 0
    %2782 = vmatprep.subr.bf16.mxu0 0
    %2783 = vmatpush1.bf16.msra.mxu0 0
    %2784 = vmatprep.subr.bf16.mxu0 0
    %2785 = vmatpush1.bf16.msra.mxu0 0
    %2786 = vmatprep.subr.bf16.mxu0 0
    %2787 = vmatpush1.bf16.msra.mxu0 0
    %2788 = vmatprep.subr.bf16.mxu0 0
    %2789 = vmatpush1.bf16.msra.mxu0 0
    %2790 = vmatprep.subr.bf16.mxu0 0
    %2791 = vmatpush1.bf16.msra.mxu0 0
    %2792 = vmatprep.subr.bf16.mxu0 0
    %2793 = vmatpush1.bf16.msra.mxu0 0
    %2794 = vmatprep.subr.bf16.mxu0 0
    %2795 = vmatpush1.bf16.msra.mxu0 0
    %2796 = vmatprep.mubr.bf16.mxu0 0
    %2797 = vmatmul.mubr.bf16.gmra.mrb[0].mxu0 %v2763
    %v2798 = vpop.f32.mrb[0].mxu0
    %v2799 = vadd.f32 0.0, %v2798
    %v2800 = vpop.f32.mrb[0].mxu0
    %v2801 = vadd.f32 0.0, %v2800
    %v2802 = vpop.f32.mrb[0].mxu0
    %v2803 = vpop.f32.mrb[0].mxu0
    %2804 = vdwg.mxu0
    %2805 = vmatprep.subr.bf16.mxu0 %v2239
    %2806 = vmatpush1.bf16.msra.mxu0 %v2238
    %2807 = vmatprep.subr.bf16.mxu0 %v2243
    %2808 = vmatpush1.bf16.msra.mxu0 %v2242
    %2809 = vmatprep.subr.bf16.mxu0 %v2247
    %2810 = vmatpush1.bf16.msra.mxu0 %v2246
    %2811 = vmatprep.subr.bf16.mxu0 %v2251
    %2812 = vmatpush1.bf16.msra.mxu0 %v2250
    %2813 = vmatprep.subr.bf16.mxu0 %v2255
    %2814 = vmatpush1.bf16.msra.mxu0 %v2254
    %2815 = vmatprep.subr.bf16.mxu0 %v2259
    %2816 = vmatpush1.bf16.msra.mxu0 %v2258
    %2817 = vmatprep.subr.bf16.mxu0 %v2263
    %2818 = vmatpush1.bf16.msra.mxu0 %v2262
    %2819 = vmatprep.subr.bf16.mxu0 %v2267
    %2820 = vmatpush1.bf16.msra.mxu0 %v2266
    %2821 = vmatprep.subr.bf16.mxu0 0
    %2822 = vmatpush1.bf16.msra.mxu0 0
    %2823 = vmatprep.subr.bf16.mxu0 0
    %2824 = vmatpush1.bf16.msra.mxu0 0
    %2825 = vmatprep.subr.bf16.mxu0 0
    %2826 = vmatpush1.bf16.msra.mxu0 0
    %2827 = vmatprep.subr.bf16.mxu0 0
    %2828 = vmatpush1.bf16.msra.mxu0 0
    %2829 = vmatprep.subr.bf16.mxu0 0
    %2830 = vmatpush1.bf16.msra.mxu0 0
    %2831 = vmatprep.subr.bf16.mxu0 0
    %2832 = vmatpush1.bf16.msra.mxu0 0
    %2833 = vmatprep.subr.bf16.mxu0 0
    %2834 = vmatpush1.bf16.msra.mxu0 0
    %2835 = vmatprep.subr.bf16.mxu0 0
    %2836 = vmatpush1.bf16.msra.mxu0 0
    %2837 = vmatprep.mubr.bf16.mxu0 0
    %2838 = vmatmul.mubr.bf16.gmra.mrb[0].mxu0 %v2763
    %v2839 = vpop.f32.mrb[0].mxu0
    %v2840 = vadd.f32 0.0, %v2839
    %v2841 = vpop.f32.mrb[0].mxu0
    %v2842 = vadd.f32 0.0, %v2841
    %v2843 = vpop.f32.mrb[0].mxu0
    %v2844 = vpop.f32.mrb[0].mxu0
    %2845 = vdwg.mxu0
    %v2846 = vadd.f32 %v2759, %v2799
    %v2847 = vadd.f32 %v2760, %v2801
    %v2848 = vadd.f32 %v2761, %v2840
    %v2849 = vadd.f32 %v2762, %v2842
    %v2850 = vxor.u32 %v2846, 2147483648
    %v2851 = vmul.f32 %v2850, 1.442695
    %v2852 = vpow.pop %v2851
    %v2853 = vadd.f32 %v2852, 1.0
    %v2854 = vrcp.pop %v2853
    %v2855 = vmul.f32 1.0, %v2854
    %v2856 = vxor.u32 %v2847, 2147483648
    %v2857 = vmul.f32 %v2856, 1.442695
    %v2858 = vpow.pop %v2857
    %v2859 = vadd.f32 %v2858, 1.0
    %v2860 = vrcp.pop %v2859
    %v2861 = vmul.f32 1.0, %v2860
    %v2862 = vtanh.pop %v2848
    %v2863 = vxor.u32 %v2849, 2147483648
    %v2864 = vmul.f32 %v2863, 1.442695
    %v2865 = vpow.pop %v2864
    %v2866 = vadd.f32 %v2865, 1.0
    %v2867 = vrcp.pop %v2866
    %v2868 = vmul.f32 1.0, %v2867
    %v2869 = vmul.f32 %v2861, %v2755
    %v2870 = vmul.f32 %v2855, %v2862
    %v2871 = vadd.f32 %v2869, %v2870
    %v2872 = vtanh.pop %v2871
    %v2873 = vmul.f32 %v2868, %v2872
    %2874 = vst [vmem:[%s1337] sm:$0xff] %v2873
    %v2875 = vld [vmem:[%s1339] sm:$0xff]
    %v2876 = vld [vmem:[%s1339 + $0x8] sm:$0xff]
    %v2877 = vld [vmem:[%s1339 + $0x10] sm:$0xff]
    %v2878 = vld [vmem:[%s1339 + $0x18] sm:$0xff]
    %v2879 = vpack.c.bf16 %v2873, %v2873
    %2880 = vmatprep.subr.bf16.mxu0 %v2237
    %2881 = vmatpush1.bf16.msra.mxu0 %v2236
    %2882 = vmatprep.subr.bf16.mxu0 %v2241
    %2883 = vmatpush1.bf16.msra.mxu0 %v2240
    %2884 = vmatprep.subr.bf16.mxu0 %v2245
    %2885 = vmatpush1.bf16.msra.mxu0 %v2244
    %2886 = vmatprep.subr.bf16.mxu0 %v2249
    %2887 = vmatpush1.bf16.msra.mxu0 %v2248
    %2888 = vmatprep.subr.bf16.mxu0 %v2253
    %2889 = vmatpush1.bf16.msra.mxu0 %v2252
    %2890 = vmatprep.subr.bf16.mxu0 %v2257
    %2891 = vmatpush1.bf16.msra.mxu0 %v2256
    %2892 = vmatprep.subr.bf16.mxu0 %v2261
    %2893 = vmatpush1.bf16.msra.mxu0 %v2260
    %2894 = vmatprep.subr.bf16.mxu0 %v2265
    %2895 = vmatpush1.bf16.msra.mxu0 %v2264
    %2896 = vmatprep.subr.bf16.mxu0 0
    %2897 = vmatpush1.bf16.msra.mxu0 0
    %2898 = vmatprep.subr.bf16.mxu0 0
    %2899 = vmatpush1.bf16.msra.mxu0 0
    %2900 = vmatprep.subr.bf16.mxu0 0
    %2901 = vmatpush1.bf16.msra.mxu0 0
    %2902 = vmatprep.subr.bf16.mxu0 0
    %2903 = vmatpush1.bf16.msra.mxu0 0
    %2904 = vmatprep.subr.bf16.mxu0 0
    %2905 = vmatpush1.bf16.msra.mxu0 0
    %2906 = vmatprep.subr.bf16.mxu0 0
    %2907 = vmatpush1.bf16.msra.mxu0 0
    %2908 = vmatprep.subr.bf16.mxu0 0
    %2909 = vmatpush1.bf16.msra.mxu0 0
    %2910 = vmatprep.subr.bf16.mxu0 0
    %2911 = vmatpush1.bf16.msra.mxu0 0
    %2912 = vmatprep.mubr.bf16.mxu0 0
    %2913 = vmatmul.mubr.bf16.gmra.mrb[0].mxu0 %v2879
    %v2914 = vpop.f32.mrb[0].mxu0
    %v2915 = vadd.f32 0.0, %v2914
    %v2916 = vpop.f32.mrb[0].mxu0
    %v2917 = vadd.f32 0.0, %v2916
    %v2918 = vpop.f32.mrb[0].mxu0
    %v2919 = vpop.f32.mrb[0].mxu0
    %2920 = vdwg.mxu0
    %2921 = vmatprep.subr.bf16.mxu0 %v2239
    %2922 = vmatpush1.bf16.msra.mxu0 %v2238
    %2923 = vmatprep.subr.bf16.mxu0 %v2243
    %2924 = vmatpush1.bf16.msra.mxu0 %v2242
    %2925 = vmatprep.subr.bf16.mxu0 %v2247
    %2926 = vmatpush1.bf16.msra.mxu0 %v2246
    %2927 = vmatprep.subr.bf16.mxu0 %v2251
    %2928 = vmatpush1.bf16.msra.mxu0 %v2250
    %2929 = vmatprep.subr.bf16.mxu0 %v2255
    %2930 = vmatpush1.bf16.msra.mxu0 %v2254
    %2931 = vmatprep.subr.bf16.mxu0 %v2259
    %2932 = vmatpush1.bf16.msra.mxu0 %v2258
    %2933 = vmatprep.subr.bf16.mxu0 %v2263
    %2934 = vmatpush1.bf16.msra.mxu0 %v2262
    %2935 = vmatprep.subr.bf16.mxu0 %v2267
    %2936 = vmatpush1.bf16.msra.mxu0 %v2266
    %2937 = vmatprep.subr.bf16.mxu0 0
    %2938 = vmatpush1.bf16.msra.mxu0 0
    %2939 = vmatprep.subr.bf16.mxu0 0
    %2940 = vmatpush1.bf16.msra.mxu0 0
    %2941 = vmatprep.subr.bf16.mxu0 0
    %2942 = vmatpush1.bf16.msra.mxu0 0
    %2943 = vmatprep.subr.bf16.mxu0 0
    %2944 = vmatpush1.bf16.msra.mxu0 0
    %2945 = vmatprep.subr.bf16.mxu0 0
    %2946 = vmatpush1.bf16.msra.mxu0 0
    %2947 = vmatprep.subr.bf16.mxu0 0
    %2948 = vmatpush1.bf16.msra.mxu0 0
    %2949 = vmatprep.subr.bf16.mxu0 0
    %2950 = vmatpush1.bf16.msra.mxu0 0
    %2951 = vmatprep.subr.bf16.mxu0 0
    %2952 = vmatpush1.bf16.msra.mxu0 0
    %2953 = vmatprep.mubr.bf16.mxu0 0
    %2954 = vmatmul.mubr.bf16.gmra.mrb[0].mxu0 %v2879
    %v2955 = vpop.f32.mrb[0].mxu0
    %v2956 = vadd.f32 0.0, %v2955
    %v2957 = vpop.f32.mrb[0].mxu0
    %v2958 = vadd.f32 0.0, %v2957
    %v2959 = vpop.f32.mrb[0].mxu0
    %v2960 = vpop.f32.mrb[0].mxu0
    %2961 = vdwg.mxu0
    %v2962 = vadd.f32 %v2875, %v2915
    %v2963 = vadd.f32 %v2876, %v2917
    %v2964 = vadd.f32 %v2877, %v2956
    %v2965 = vadd.f32 %v2878, %v2958
    %v2966 = vxor.u32 %v2962, 2147483648
    %v2967 = vmul.f32 %v2966, 1.442695
    %v2968 = vpow.pop %v2967
    %v2969 = vadd.f32 %v2968, 1.0
    %v2970 = vrcp.pop %v2969
    %v2971 = vmul.f32 1.0, %v2970
    %v2972 = vxor.u32 %v2963, 2147483648
    %v2973 = vmul.f32 %v2972, 1.442695
    %v2974 = vpow.pop %v2973
    %v2975 = vadd.f32 %v2974, 1.0
    %v2976 = vrcp.pop %v2975
    %v2977 = vmul.f32 1.0, %v2976
    %v2978 = vtanh.pop %v2964
    %v2979 = vxor.u32 %v2965, 2147483648
    %v2980 = vmul.f32 %v2979, 1.442695
    %v2981 = vpow.pop %v2980
    %v2982 = vadd.f32 %v2981, 1.0
    %v2983 = vrcp.pop %v2982
    %v2984 = vmul.f32 1.0, %v2983
    %v2985 = vmul.f32 %v2977, %v2871
    %v2986 = vmul.f32 %v2971, %v2978
    %v2987 = vadd.f32 %v2985, %v2986
    %v2988 = vtanh.pop %v2987
    %v2989 = vmul.f32 %v2984, %v2988
    %2990 = vst [vmem:[%s1455] sm:$0xff] %v2989
    %v2991 = vld [vmem:[%s1457] sm:$0xff]
    %v2992 = vld [vmem:[%s1457 + $0x8] sm:$0xff]
    %v2993 = vld [vmem:[%s1457 + $0x10] sm:$0xff]
    %v2994 = vld [vmem:[%s1457 + $0x18] sm:$0xff]
    %v2995 = vpack.c.bf16 %v2989, %v2989
    %2996 = vmatprep.subr.bf16.mxu0 %v2237
    %2997 = vmatpush1.bf16.msra.mxu0 %v2236
    %2998 = vmatprep.subr.bf16.mxu0 %v2241
    %2999 = vmatpush1.bf16.msra.mxu0 %v2240
    %3000 = vmatprep.subr.bf16.mxu0 %v2245
    %3001 = vmatpush1.bf16.msra.mxu0 %v2244
    %3002 = vmatprep.subr.bf16.mxu0 %v2249
    %3003 = vmatpush1.bf16.msra.mxu0 %v2248
    %3004 = vmatprep.subr.bf16.mxu0 %v2253
    %3005 = vmatpush1.bf16.msra.mxu0 %v2252
    %3006 = vmatprep.subr.bf16.mxu0 %v2257
    %3007 = vmatpush1.bf16.msra.mxu0 %v2256
    %3008 = vmatprep.subr.bf16.mxu0 %v2261
    %3009 = vmatpush1.bf16.msra.mxu0 %v2260
    %3010 = vmatprep.subr.bf16.mxu0 %v2265
    %3011 = vmatpush1.bf16.msra.mxu0 %v2264
    %3012 = vmatprep.subr.bf16.mxu0 0
    %3013 = vmatpush1.bf16.msra.mxu0 0
    %3014 = vmatprep.subr.bf16.mxu0 0
    %3015 = vmatpush1.bf16.msra.mxu0 0
    %3016 = vmatprep.subr.bf16.mxu0 0
    %3017 = vmatpush1.bf16.msra.mxu0 0
    %3018 = vmatprep.subr.bf16.mxu0 0
    %3019 = vmatpush1.bf16.msra.mxu0 0
    %3020 = vmatprep.subr.bf16.mxu0 0
    %3021 = vmatpush1.bf16.msra.mxu0 0
    %3022 = vmatprep.subr.bf16.mxu0 0
    %3023 = vmatpush1.bf16.msra.mxu0 0
    %3024 = vmatprep.subr.bf16.mxu0 0
    %3025 = vmatpush1.bf16.msra.mxu0 0
    %3026 = vmatprep.subr.bf16.mxu0 0
    %3027 = vmatpush1.bf16.msra.mxu0 0
    %3028 = vmatprep.mubr.bf16.mxu0 0
    %3029 = vmatmul.mubr.bf16.gmra.mrb[0].mxu0 %v2995
    %v3030 = vpop.f32.mrb[0].mxu0
    %v3031 = vadd.f32 0.0, %v3030
    %v3032 = vpop.f32.mrb[0].mxu0
    %v3033 = vadd.f32 0.0, %v3032
    %v3034 = vpop.f32.mrb[0].mxu0
    %v3035 = vpop.f32.mrb[0].mxu0
    %3036 = vdwg.mxu0
    %3037 = vmatprep.subr.bf16.mxu0 %v2239
    %3038 = vmatpush1.bf16.msra.mxu0 %v2238
    %3039 = vmatprep.subr.bf16.mxu0 %v2243
    %3040 = vmatpush1.bf16.msra.mxu0 %v2242
    %3041 = vmatprep.subr.bf16.mxu0 %v2247
    %3042 = vmatpush1.bf16.msra.mxu0 %v2246
    %3043 = vmatprep.subr.bf16.mxu0 %v2251
    %3044 = vmatpush1.bf16.msra.mxu0 %v2250
    %3045 = vmatprep.subr.bf16.mxu0 %v2255
    %3046 = vmatpush1.bf16.msra.mxu0 %v2254
    %3047 = vmatprep.subr.bf16.mxu0 %v2259
    %3048 = vmatpush1.bf16.msra.mxu0 %v2258
    %3049 = vmatprep.subr.bf16.mxu0 %v2263
    %3050 = vmatpush1.bf16.msra.mxu0 %v2262
    %3051 = vmatprep.subr.bf16.mxu0 %v2267
    %3052 = vmatpush1.bf16.msra.mxu0 %v2266
    %3053 = vmatprep.subr.bf16.mxu0 0
    %3054 = vmatpush1.bf16.msra.mxu0 0
    %3055 = vmatprep.subr.bf16.mxu0 0
    %3056 = vmatpush1.bf16.msra.mxu0 0
    %3057 = vmatprep.subr.bf16.mxu0 0
    %3058 = vmatpush1.bf16.msra.mxu0 0
    %3059 = vmatprep.subr.bf16.mxu0 0
    %3060 = vmatpush1.bf16.msra.mxu0 0
    %3061 = vmatprep.subr.bf16.mxu0 0
    %3062 = vmatpush1.bf16.msra.mxu0 0
    %3063 = vmatprep.subr.bf16.mxu0 0
    %3064 = vmatpush1.bf16.msra.mxu0 0
    %3065 = vmatprep.subr.bf16.mxu0 0
    %3066 = vmatpush1.bf16.msra.mxu0 0
    %3067 = vmatprep.subr.bf16.mxu0 0
    %3068 = vmatpush1.bf16.msra.mxu0 0
    %3069 = vmatprep.mubr.bf16.mxu0 0
    %3070 = vmatmul.mubr.bf16.gmra.mrb[0].mxu0 %v2995
    %v3071 = vpop.f32.mrb[0].mxu0
    %v3072 = vadd.f32 0.0, %v3071
    %v3073 = vpop.f32.mrb[0].mxu0
    %v3074 = vadd.f32 0.0, %v3073
    %v3075 = vpop.f32.mrb[0].mxu0
    %v3076 = vpop.f32.mrb[0].mxu0
    %3077 = vdwg.mxu0
    %v3078 = vadd.f32 %v2991, %v3031
    %v3079 = vadd.f32 %v2992, %v3033
    %v3080 = vadd.f32 %v2993, %v3072
    %v3081 = vadd.f32 %v2994, %v3074
    %v3082 = vxor.u32 %v3078, 2147483648
    %v3083 = vmul.f32 %v3082, 1.442695
    %v3084 = vpow.pop %v3083
    %v3085 = vadd.f32 %v3084, 1.0
    %v3086 = vrcp.pop %v3085
    %v3087 = vmul.f32 1.0, %v3086
    %v3088 = vxor.u32 %v3079, 2147483648
    %v3089 = vmul.f32 %v3088, 1.442695
    %v3090 = vpow.pop %v3089
    %v3091 = vadd.f32 %v3090, 1.0
    %v3092 = vrcp.pop %v3091
    %v3093 = vmul.f32 1.0, %v3092
    %v3094 = vtanh.pop %v3080
    %v3095 = vxor.u32 %v3081, 2147483648
    %v3096 = vmul.f32 %v3095, 1.442695
    %v3097 = vpow.pop %v3096
    %v3098 = vadd.f32 %v3097, 1.0
    %v3099 = vrcp.pop %v3098
    %v3100 = vmul.f32 1.0, %v3099
    %v3101 = vmul.f32 %v3093, %v2987
    %v3102 = vmul.f32 %v3087, %v3094
    %v3103 = vadd.f32 %v3101, %v3102
    %v3104 = vtanh.pop %v3103
    %v3105 = vmul.f32 %v3100, %v3104
    %3106 = vst [vmem:[%s1573] sm:$0xff] %v3105
    %v3107 = vld [vmem:[%s1575] sm:$0xff]
    %v3108 = vld [vmem:[%s1575 + $0x8] sm:$0xff]
    %v3109 = vld [vmem:[%s1575 + $0x10] sm:$0xff]
    %v3110 = vld [vmem:[%s1575 + $0x18] sm:$0xff]
    %v3111 = vpack.c.bf16 %v3105, %v3105
    %3112 = vmatprep.subr.bf16.mxu0 %v2237
    %3113 = vmatpush1.bf16.msra.mxu0 %v2236
    %3114 = vmatprep.subr.bf16.mxu0 %v2241
    %3115 = vmatpush1.bf16.msra.mxu0 %v2240
    %3116 = vmatprep.subr.bf16.mxu0 %v2245
    %3117 = vmatpush1.bf16.msra.mxu0 %v2244
    %3118 = vmatprep.subr.bf16.mxu0 %v2249
    %3119 = vmatpush1.bf16.msra.mxu0 %v2248
    %3120 = vmatprep.subr.bf16.mxu0 %v2253
    %3121 = vmatpush1.bf16.msra.mxu0 %v2252
    %3122 = vmatprep.subr.bf16.mxu0 %v2257
    %3123 = vmatpush1.bf16.msra.mxu0 %v2256
    %3124 = vmatprep.subr.bf16.mxu0 %v2261
    %3125 = vmatpush1.bf16.msra.mxu0 %v2260
    %3126 = vmatprep.subr.bf16.mxu0 %v2265
    %3127 = vmatpush1.bf16.msra.mxu0 %v2264
    %3128 = vmatprep.subr.bf16.mxu0 0
    %3129 = vmatpush1.bf16.msra.mxu0 0
    %3130 = vmatprep.subr.bf16.mxu0 0
    %3131 = vmatpush1.bf16.msra.mxu0 0
    %3132 = vmatprep.subr.bf16.mxu0 0
    %3133 = vmatpush1.bf16.msra.mxu0 0
    %3134 = vmatprep.subr.bf16.mxu0 0
    %3135 = vmatpush1.bf16.msra.mxu0 0
    %3136 = vmatprep.subr.bf16.mxu0 0
    %3137 = vmatpush1.bf16.msra.mxu0 0
    %3138 = vmatprep.subr.bf16.mxu0 0
    %3139 = vmatpush1.bf16.msra.mxu0 0
    %3140 = vmatprep.subr.bf16.mxu0 0
    %3141 = vmatpush1.bf16.msra.mxu0 0
    %3142 = vmatprep.subr.bf16.mxu0 0
    %3143 = vmatpush1.bf16.msra.mxu0 0
    %3144 = vmatprep.mubr.bf16.mxu0 0
    %3145 = vmatmul.mubr.bf16.gmra.mrb[0].mxu0 %v3111
    %v3146 = vpop.f32.mrb[0].mxu0
    %v3147 = vadd.f32 0.0, %v3146
    %v3148 = vpop.f32.mrb[0].mxu0
    %v3149 = vadd.f32 0.0, %v3148
    %v3150 = vpop.f32.mrb[0].mxu0
    %v3151 = vpop.f32.mrb[0].mxu0
    %3152 = vdwg.mxu0
    %3153 = vmatprep.subr.bf16.mxu0 %v2239
    %3154 = vmatpush1.bf16.msra.mxu0 %v2238
    %3155 = vmatprep.subr.bf16.mxu0 %v2243
    %3156 = vmatpush1.bf16.msra.mxu0 %v2242
    %3157 = vmatprep.subr.bf16.mxu0 %v2247
    %3158 = vmatpush1.bf16.msra.mxu0 %v2246
    %3159 = vmatprep.subr.bf16.mxu0 %v2251
    %3160 = vmatpush1.bf16.msra.mxu0 %v2250
    %3161 = vmatprep.subr.bf16.mxu0 %v2255
    %3162 = vmatpush1.bf16.msra.mxu0 %v2254
    %3163 = vmatprep.subr.bf16.mxu0 %v2259
    %3164 = vmatpush1.bf16.msra.mxu0 %v2258
    %3165 = vmatprep.subr.bf16.mxu0 %v2263
    %3166 = vmatpush1.bf16.msra.mxu0 %v2262
    %3167 = vmatprep.subr.bf16.mxu0 %v2267
    %3168 = vmatpush1.bf16.msra.mxu0 %v2266
    %3169 = vmatprep.subr.bf16.mxu0 0
    %3170 = vmatpush1.bf16.msra.mxu0 0
    %3171 = vmatprep.subr.bf16.mxu0 0
    %3172 = vmatpush1.bf16.msra.mxu0 0
    %3173 = vmatprep.subr.bf16.mxu0 0
    %3174 = vmatpush1.bf16.msra.mxu0 0
    %3175 = vmatprep.subr.bf16.mxu0 0
    %3176 = vmatpush1.bf16.msra.mxu0 0
    %3177 = vmatprep.subr.bf16.mxu0 0
    %3178 = vmatpush1.bf16.msra.mxu0 0
    %3179 = vmatprep.subr.bf16.mxu0 0
    %3180 = vmatpush1.bf16.msra.mxu0 0
    %3181 = vmatprep.subr.bf16.mxu0 0
    %3182 = vmatpush1.bf16.msra.mxu0 0
    %3183 = vmatprep.subr.bf16.mxu0 0
    %3184 = vmatpush1.bf16.msra.mxu0 0
    %3185 = vmatprep.mubr.bf16.mxu0 0
    %3186 = vmatmul.mubr.bf16.gmra.mrb[0].mxu0 %v3111
    %v3187 = vpop.f32.mrb[0].mxu0
    %v3188 = vadd.f32 0.0, %v3187
    %v3189 = vpop.f32.mrb[0].mxu0
    %v3190 = vadd.f32 0.0, %v3189
    %v3191 = vpop.f32.mrb[0].mxu0
    %v3192 = vpop.f32.mrb[0].mxu0
    %3193 = vdwg.mxu0
    %v3194 = vadd.f32 %v3107, %v3147
    %v3195 = vadd.f32 %v3108, %v3149
    %v3196 = vadd.f32 %v3109, %v3188
    %v3197 = vadd.f32 %v3110, %v3190
    %v3198 = vxor.u32 %v3194, 2147483648
    %v3199 = vmul.f32 %v3198, 1.442695
    %v3200 = vpow.pop %v3199
    %v3201 = vadd.f32 %v3200, 1.0
    %v3202 = vrcp.pop %v3201
    %v3203 = vmul.f32 1.0, %v3202
    %v3204 = vxor.u32 %v3195, 2147483648
    %v3205 = vmul.f32 %v3204, 1.442695
    %v3206 = vpow.pop %v3205
    %v3207 = vadd.f32 %v3206, 1.0
    %v3208 = vrcp.pop %v3207
    %v3209 = vmul.f32 1.0, %v3208
    %v3210 = vtanh.pop %v3196
    %v3211 = vxor.u32 %v3197, 2147483648
    %v3212 = vmul.f32 %v3211, 1.442695
    %v3213 = vpow.pop %v3212
    %v3214 = vadd.f32 %v3213, 1.0
    %v3215 = vrcp.pop %v3214
    %v3216 = vmul.f32 1.0, %v3215
    %v3217 = vmul.f32 %v3209, %v3103
    %v3218 = vmul.f32 %v3203, %v3210
    %v3219 = vadd.f32 %v3217, %v3218
    %v3220 = vtanh.pop %v3219
    %v3221 = vmul.f32 %v3216, %v3220
    %3222 = vst [vmem:[%s1691] sm:$0xff] %v3221
    %s3223 = scalar_lea.vmem [#allocation19], 8
    %3224 = vst [vmem:[%s3223] sm:$0xff] %v3221
    %s3225 = scalar_lea.vmem [#allocation21], 8
    %3226 = vst [vmem:[%s3225] sm:$0xff] %v3219
    %v3227 = vld [vmem:[#allocation3] sm:$0xff]
    %v3228 = vld [vmem:[#allocation3 + $0x8] sm:$0xff]
    %v3229 = vld [vmem:[#allocation3 + $0x10] sm:$0xff]
    %v3230 = vld [vmem:[#allocation3 + $0x18] sm:$0xff]
    %v3231 = vld [vmem:[#allocation3 + $0x20] sm:$0xff]
    %v3232 = vld [vmem:[#allocation3 + $0x28] sm:$0xff]
    %v3233 = vld [vmem:[#allocation3 + $0x30] sm:$0xff]
    %v3234 = vld [vmem:[#allocation3 + $0x38] sm:$0xff]
    %v3235 = vpack.c.bf16 %v3228, %v3227
    %v3236 = vpack.c.bf16 %v3230, %v3229
    %v3237 = vpack.c.bf16 %v3232, %v3231
    %v3238 = vpack.c.bf16 %v3234, %v3233
    %v3239 = vld [vmem:[#allocation16] sm:$0xf]
    %v3240 = vld [vmem:[#allocation16 + $0x4] sm:$0xf]
    %v3241 = vld [vmem:[#allocation16 + $0x8] sm:$0xf]
    %v3242 = vld [vmem:[#allocation16 + $0xc] sm:$0xf]
    %v3243 = vld [vmem:[#allocation16 + $0x10] sm:$0xf]
    %v3244 = vld [vmem:[#allocation16 + $0x14] sm:$0xf]
    %v3245 = vld [vmem:[#allocation16 + $0x18] sm:$0xf]
    %v3246 = vld [vmem:[#allocation16 + $0x1c] sm:$0xf]
    %v3247 = vld [vmem:[#allocation16 + $0x20] sm:$0xf]
    %v3248 = vld [vmem:[#allocation16 + $0x24] sm:$0xf]
    %v3249 = vld [vmem:[#allocation16 + $0x28] sm:$0xf]
    %v3250 = vld [vmem:[#allocation16 + $0x2c] sm:$0xf]
    %v3251 = vld [vmem:[#allocation16 + $0x30] sm:$0xf]
    %v3252 = vld [vmem:[#allocation16 + $0x34] sm:$0xf]
    %v3253 = vld [vmem:[#allocation16 + $0x38] sm:$0xf]
    %v3254 = vld [vmem:[#allocation16 + $0x3c] sm:$0xf]
    %v3255 = vld [vmem:[%s10] sm:$0x1]
    %v3257 = vlaneseq
    %v3258 = vshrl.u32 %v3257, 7
    %v3259 = vsub.s32 0, %v3258
    %v3260 = vrot.slane %v3255, %v3259
    %v3278 = vunpack.c.l.b16 %v3239
    %v3279 = vunpack.c.l.b16 %v3240
    %v3280 = vunpack.c.l.b16 %v3241
    %v3281 = vunpack.c.l.b16 %v3242
    %v3282 = vunpack.c.l.b16 %v3243
    %v3283 = vunpack.c.l.b16 %v3244
    %v3284 = vunpack.c.l.b16 %v3245
    %v3285 = vunpack.c.l.b16 %v3246
    %v3286 = vunpack.c.l.b16 %v3247
    %v3287 = vunpack.c.l.b16 %v3248
    %v3288 = vunpack.c.l.b16 %v3249
    %v3289 = vunpack.c.l.b16 %v3250
    %v3290 = vunpack.c.l.b16 %v3251
    %v3291 = vunpack.c.l.b16 %v3252
    %v3292 = vunpack.c.l.b16 %v3253
    %v3293 = vunpack.c.l.b16 %v3254
    %v3294 = vpack.c.b16 %v3279, %v3278
    %v3295 = vpack.c.b16 %v3281, %v3280
    %v3296 = vpack.c.b16 %v3283, %v3282
    %v3297 = vpack.c.b16 %v3285, %v3284
    %v3298 = vpack.c.b16 %v3287, %v3286
    %v3299 = vpack.c.b16 %v3289, %v3288
    %v3300 = vpack.c.b16 %v3291, %v3290
    %v3301 = vpack.c.b16 %v3293, %v3292
    %3310 = vmatprep.subr.bf16.mxu0 0
    %3311 = vmatpush1.bf16.msra.mxu0 %v3294
    %3312 = vmatprep.subr.bf16.mxu0 0
    %3313 = vmatpush1.bf16.msra.mxu0 %v3295
    %3314 = vmatprep.subr.bf16.mxu0 0
    %3315 = vmatpush1.bf16.msra.mxu0 %v3296
    %3316 = vmatprep.subr.bf16.mxu0 0
    %3317 = vmatpush1.bf16.msra.mxu0 %v3297
    %3318 = vmatprep.subr.bf16.mxu0 0
    %3319 = vmatpush1.bf16.msra.mxu0 %v3298
    %3320 = vmatprep.subr.bf16.mxu0 0
    %3321 = vmatpush1.bf16.msra.mxu0 %v3299
    %3322 = vmatprep.subr.bf16.mxu0 0
    %3323 = vmatpush1.bf16.msra.mxu0 %v3300
    %3324 = vmatprep.subr.bf16.mxu0 0
    %3325 = vmatpush1.bf16.msra.mxu0 %v3301
    %3326 = vmatprep.subr.bf16.mxu0 0
    %3327 = vmatpush1.bf16.msra.mxu0 0
    %3328 = vmatprep.subr.bf16.mxu0 0
    %3329 = vmatpush1.bf16.msra.mxu0 0
    %3330 = vmatprep.subr.bf16.mxu0 0
    %3331 = vmatpush1.bf16.msra.mxu0 0
    %3332 = vmatprep.subr.bf16.mxu0 0
    %3333 = vmatpush1.bf16.msra.mxu0 0
    %3334 = vmatprep.subr.bf16.mxu0 0
    %3335 = vmatpush1.bf16.msra.mxu0 0
    %3336 = vmatprep.subr.bf16.mxu0 0
    %3337 = vmatpush1.bf16.msra.mxu0 0
    %3338 = vmatprep.subr.bf16.mxu0 0
    %3339 = vmatpush1.bf16.msra.mxu0 0
    %3340 = vmatprep.subr.bf16.mxu0 0
    %3341 = vmatpush1.bf16.msra.mxu0 0
    %3342 = vmatprep.mubr.bf16.mxu0 0
    %3343 = vmatmul.mubr.bf16.gmra.mrb[0].mxu0 %v3235
    %v3344 = vpop.f32.mrb[0].mxu0
    %v3345 = vadd.f32 %v3260, %v3344
    %v3346 = vpop.f32.mrb[0].mxu0
    %v3347 = vpop.f32.mrb[0].mxu0
    %v3348 = vadd.f32 %v3260, %v3347
    %v3349 = vpop.f32.mrb[0].mxu0
    %3350 = vmatprep.mubr.bf16.mxu0 0
    %3351 = vmatmul.mubr.bf16.gmra.mrb[0].mxu0 %v3236
    %v3352 = vpop.f32.mrb[0].mxu0
    %v3353 = vadd.f32 %v3260, %v3352
    %v3354 = vpop.f32.mrb[0].mxu0
    %v3355 = vpop.f32.mrb[0].mxu0
    %v3356 = vadd.f32 %v3260, %v3355
    %v3357 = vpop.f32.mrb[0].mxu0
    %3358 = vmatprep.mubr.bf16.mxu0 0
    %3359 = vmatmul.mubr.bf16.gmra.mrb[0].mxu0 %v3237
    %v3360 = vpop.f32.mrb[0].mxu0
    %v3361 = vadd.f32 %v3260, %v3360
    %v3362 = vpop.f32.mrb[0].mxu0
    %v3363 = vpop.f32.mrb[0].mxu0
    %v3364 = vadd.f32 %v3260, %v3363
    %v3365 = vpop.f32.mrb[0].mxu0
    %3366 = vmatprep.mubr.bf16.mxu0 0
    %3367 = vmatmul.mubr.bf16.gmra.mrb[0].mxu0 %v3238
    %v3368 = vpop.f32.mrb[0].mxu0
    %v3369 = vadd.f32 %v3260, %v3368
    %v3370 = vpop.f32.mrb[0].mxu0
    %v3371 = vpop.f32.mrb[0].mxu0
    %v3372 = vadd.f32 %v3260, %v3371
    %v3373 = vpop.f32.mrb[0].mxu0
    %3374 = vdwg.mxu0
    %3375 = vst [vmem:[#allocation18] sm:$0xff] %v3345
    %3376 = vst [vmem:[#allocation18 + $0x8] sm:$0xff] %v3348
    %3377 = vst [vmem:[#allocation18 + $0x10] sm:$0xff] %v3353
    %3378 = vst [vmem:[#allocation18 + $0x18] sm:$0xff] %v3356
    %3379 = vst [vmem:[#allocation18 + $0x20] sm:$0xff] %v3361
    %3380 = vst [vmem:[#allocation18 + $0x28] sm:$0xff] %v3364
    %3381 = vst [vmem:[#allocation18 + $0x30] sm:$0xff] %v3369
    %3382 = vst [vmem:[#allocation18 + $0x38] sm:$0xff] %v3372
    // Predicated region
    $region78: #{tpu_custom_call.1} parent=1 // pred_check
      _
    $region79: #{tpu_custom_call.1} parent=1 // pred_check_branch
      %3384 = sbr.rel (0) target = $region81
    $region80: #{tpu_custom_call.1} parent=1 // pred_region
      %s3386 = ssub.s32 1024, 1024
      %3387 = vsyncadd [#allocation6], %s3386
      %s3388 = sshll.u32 [#allocation18], 4
      %s3389 = int_to_ptr.vmem [resolvable:$true] %s3388
      %3394 = dma.vmem_to_hbm [thread:$0]  %s3389, 1024, %s11, [#allocation6], 128, 128, 8
    $region81: #{tpu_custom_call.1} parent=1 // pred_fallthru
      _
    // Predicated region
    $region82: #{tpu_custom_call.1} parent=1 // pred_check
      _
    $region83: #{tpu_custom_call.1} parent=1 // pred_check_branch
      %3396 = sbr.rel (0) target = $region85
    $region84: #{tpu_custom_call.1} parent=1 // pred_region
      %s3398 = ssub.s32 256, 256
      %3399 = vsyncadd [#allocation20], %s3398
      %s3400 = sshll.u32 [#allocation19], 4
      %s3401 = int_to_ptr.vmem [resolvable:$true] %s3400
      %3406 = dma.vmem_to_hbm [thread:$0]  %s3401, 256, %s12, [#allocation20], 128, 128, 8
    $region85: #{tpu_custom_call.1} parent=1 // pred_fallthru
      _
    // Predicated region
    $region86: #{tpu_custom_call.1} parent=1 // pred_check
      _
    $region87: #{tpu_custom_call.1} parent=1 // pred_check_branch
      %3408 = sbr.rel (0) target = $region89
    $region88: #{tpu_custom_call.1} parent=1 // pred_region
      %s3410 = ssub.s32 256, 256
      %3411 = vsyncadd [#allocation20], %s3410
      %s3412 = sshll.u32 [#allocation21], 4
      %s3413 = int_to_ptr.vmem [resolvable:$true] %s3412
      %3418 = dma.vmem_to_hbm [thread:$0]  %s3413, 256, %s13, [#allocation20], 128, 128, 8
    $region89: #{tpu_custom_call.1} parent=1 // pred_fallthru
      _
    // Predicated region
    $region90: #{tpu_custom_call.1} parent=1 // pred_check
      _
    $region91: #{tpu_custom_call.1} parent=1 // pred_check_branch
      %3420 = sbr.rel (0) target = $region93
    $region92: #{tpu_custom_call.1} parent=1 // pred_region
      %3421 = dma.done [#allocation6], 1024
    $region93: #{tpu_custom_call.1} parent=1 // pred_fallthru
      _
    // Predicated region
    $region94: #{tpu_custom_call.1} parent=1 // pred_check
      _
    $region95: #{tpu_custom_call.1} parent=1 // pred_check_branch
      %3423 = sbr.rel (0) target = $region97
    $region96: #{tpu_custom_call.1} parent=1 // pred_region
      %3424 = dma.done [#allocation20], 256
    $region97: #{tpu_custom_call.1} parent=1 // pred_fallthru
      _
    // Predicated region
    $region98: #{tpu_custom_call.1} parent=1 // pred_check
      _
    $region99: #{tpu_custom_call.1} parent=1 // pred_check_branch
      %3426 = sbr.rel (0) target = $region101
    $region100: #{tpu_custom_call.1} parent=1 // pred_region
      %3427 = dma.done [#allocation20], 256
    $region101: #{tpu_custom_call.1} parent=1 // pred_fallthru
      _
    %3428 = vsyncpa [#allocation5], 1
    %3429 = vsyncpa [#allocation8], 1
    %3430 = vsyncpa [#allocation11], 1
    %3431 = vsyncpa [#allocation14], 1
    %3432 = vsyncpa [#allocation17], 1
    %3433 = vsyncpa [#allocation6], 1
    %3434 = vsyncpa [#allocation20], 1

</llo_original>
